<compile_context>
chip_gen: v5e
topology: v5e:2x2
jax: 0.10.0
libtpu: 0.0.40
codegen_flags: <defaults>
</compile_context>

<pallas_src>
import math
import functools

import jax
import jax.numpy as jnp
from jax.experimental import pallas as pl
from jax.experimental.pallas import tpu as pltpu

LEAK = 0.2
BN_EPS = 0.8
LANE = 128  # pad the head output to a multiple of 128 lanes (unmasked vst everywhere)


def _round_up(x, m):
    return ((x + m - 1) // m) * m


def _leaky_relu(x):
    return jnp.where(x >= 0, x, LEAK * x)


def _batchnorm_train(x, gamma, beta):
    # PyTorch BatchNorm1d training mode: batch mean, biased batch variance, eps=0.8.
    inv_n = 1.0 / x.shape[0]
    mean = jnp.sum(x, axis=0, keepdims=True) * inv_n
    centered = x - mean
    var = jnp.sum(centered * centered, axis=0, keepdims=True) * inv_n
    return centered * jax.lax.rsqrt(var + BN_EPS) * gamma + beta


# ------------------------------ fused kernel ----------------------------------

def generator_kernel(z_ref, w1_ref, b1_ref,
                     w2_ref, g2_ref, be2_ref,
                     w3_ref, g3_ref, be3_ref,
                     w4_ref, g4_ref, be4_ref,
                     w5_ref, b5_ref,
                     o_ref):
    bf = jnp.bfloat16

    # block 1: Linear(latent, 128) -> LeakyReLU (no BN, bias kept)
    h = jnp.dot(z_ref[...], w1_ref[...], preferred_element_type=jnp.float32)
    h = _leaky_relu(h + b1_ref[...])

    # block 2: Linear(128, 256) -> BN -> LeakyReLU   (bias cancelled by BN mean)
    h = jnp.dot(h.astype(bf), w2_ref[...], preferred_element_type=jnp.float32)
    h = _leaky_relu(_batchnorm_train(h, g2_ref[...], be2_ref[...]))

    # block 3: Linear(256, 512) -> BN -> LeakyReLU
    h = jnp.dot(h.astype(bf), w3_ref[...], preferred_element_type=jnp.float32)
    h = _leaky_relu(_batchnorm_train(h, g3_ref[...], be3_ref[...]))

    # block 4: Linear(512, 1024) -> BN -> LeakyReLU
    h = jnp.dot(h.astype(bf), w4_ref[...], preferred_element_type=jnp.float32)
    h = _leaky_relu(_batchnorm_train(h, g4_ref[...], be4_ref[...]))

    # head: Linear(1024, out_pad) -> Tanh (padded columns are sliced off outside)
    out = jnp.dot(h.astype(bf), w5_ref[...], preferred_element_type=jnp.float32)
    o_ref[...] = jnp.tanh(out + b5_ref[...])


# ------------------------------ wrapper ----------------------------------------

def prepare_generator_params(params, img_shape):
    """One-time (outside jit) weight preparation: bf16 cast + lane-dense head pad."""
    (w1, b1, w2, b2, g2, be2, w3, b3, g3, be3,
     w4, b4, g4, be4, w5, b5) = params
    del b2, b3, b4  # exactly cancelled by train-mode BatchNorm mean subtraction

    out_dim = int(math.prod(img_shape))
    out_pad = _round_up(out_dim, LANE)

    bf = jnp.bfloat16
    w1b, w2b, w3b, w4b = (w.astype(bf) for w in (w1, w2, w3, w4))
    w5p = jnp.pad(w5.astype(bf), ((0, 0), (0, out_pad - out_dim)))
    b5p = jnp.pad(b5, ((0, 0), (0, out_pad - out_dim)))

    prepped = (w1b, b1, w2b, g2, be2, w3b, g3, be3, w4b, g4, be4, w5p, b5p)
    return prepped, out_pad


def generator_forward(z, prepped, *, img_shape, out_pad):
    """z: (B, latent_dim) f32; prepped: output of prepare_generator_params."""
    B = z.shape[0]
    out_dim = int(math.prod(img_shape))

    args = (z.astype(jnp.bfloat16),) + tuple(prepped)

    # Scoped-VMEM budget ~ actual resident footprint (operands + output), small floor.
    footprint = sum(a.size * a.dtype.itemsize for a in args) + B * out_pad * 4
    vmem_limit = min(max(2 * footprint, 8 * 1024 * 1024), 100 * 1024 * 1024)

    vmem = pltpu.MemorySpace.VMEM
    out_flat = pl.pallas_call(
        generator_kernel,
        out_shape=jax.ShapeDtypeStruct((B, out_pad), jnp.float32),
        in_specs=[pl.BlockSpec(memory_space=vmem)] * len(args),
        out_specs=pl.BlockSpec(memory_space=vmem),
        compiler_params=pltpu.CompilerParams(vmem_limit_bytes=vmem_limit),
    )(*args)

    return out_flat[:, :out_dim].reshape(B, *img_shape)


# ----------------------- parameter init (deterministic) -----------------------

def init_linear(key, in_f, out_f):
    # Matches PyTorch nn.Linear default init: U(-1/sqrt(in_f), 1/sqrt(in_f)).
    kw, kb = jax.random.split(key)
    bound = 1.0 / math.sqrt(in_f)
    W = jax.random.uniform(kw, (in_f, out_f), jnp.float32, -bound, bound)
    b = jax.random.uniform(kb, (1, out_f), jnp.float32, -bound, bound)
    return W, b


def init_generator_params(key, latent_dim, img_shape):
    out_dim = int(math.prod(img_shape))
    k1, k2, k3, k4, k5 = jax.random.split(key, 5)
    w1, b1 = init_linear(k1, latent_dim, 128)
    w2, b2 = init_linear(k2, 128, 256)
    w3, b3 = init_linear(k3, 256, 512)
    w4, b4 = init_linear(k4, 512, 1024)
    w5, b5 = init_linear(k5, 1024, out_dim)
    # BatchNorm affine params at PyTorch defaults: gamma=1, beta=0.
    g2, be2 = jnp.ones((1, 256), jnp.float32), jnp.zeros((1, 256), jnp.float32)
    g3, be3 = jnp.ones((1, 512), jnp.float32), jnp.zeros((1, 512), jnp.float32)
    g4, be4 = jnp.ones((1, 1024), jnp.float32), jnp.zeros((1, 1024), jnp.float32)
    return [w1, b1,
            w2, b2, g2, be2,
            w3, b3, g3, be3,
            w4, b4, g4, be4,
            w5, b5]


# ------------------------------ pure-JAX f32 reference -------------------------

def generator_reference(z, params, img_shape):
    (w1, b1, w2, b2, g2, be2, w3, b3, g3, be3,
     w4, b4, g4, be4, w5, b5) = params

    def bn(x, g, be):
        mean = jnp.mean(x, axis=0, keepdims=True)
        var = jnp.mean((x - mean) ** 2, axis=0, keepdims=True)
        return (x - mean) * jax.lax.rsqrt(var + BN_EPS) * g + be

    h = _leaky_relu(z @ w1 + b1)
    h = _leaky_relu(bn(h @ w2 + b2, g2, be2))
    h = _leaky_relu(bn(h @ w3 + b3, g3, be3))
    h = _leaky_relu(bn(h @ w4 + b4, g4, be4))
    h = jnp.tanh(h @ w5 + b5)
    return h.reshape(z.shape[0], *img_shape)


if __name__ == "__main__":
    latent_dim = 32
    img_shape = (1, 8, 8)        # (channels, img_size, img_size) -> out_dim = 64
    batch = 8                    # whole batch in one call (BN uses batch statistics)

    key = jax.random.PRNGKey(0)
    kz, kp = jax.random.split(key)
    z = jax.random.normal(kz, (batch, latent_dim), jnp.float32)
    params = init_generator_params(kp, latent_dim, img_shape)

    # One-time weight prep (bf16 cast + head pad) outside the jitted forward.
    prepped, out_pad = prepare_generator_params(params, img_shape)

    fwd = jax.jit(functools.partial(generator_forward,
                                    img_shape=img_shape, out_pad=out_pad))
    img = fwd(z, prepped)
    img = jax.block_until_ready(img)

    ref = generator_reference(z, params, img_shape)
    assert img.shape == (batch,) + img_shape, img.shape
    # matmuls use bf16 operands / f32 accumulation -> loose tolerance vs the f32 reference
    assert jnp.allclose(img, ref, atol=5e-2, rtol=0.0), (
        "mismatch vs reference, max abs diff = %g" % float(jnp.max(jnp.abs(img - ref))))

    print("KERNEL_OK")
</pallas_src>

<mosaic_0001>
module attributes {stable_mosaic.version = 11 : i64} {
  func.func @generator_kernel(%arg0: memref<8x32xbf16, #tpu.memory_space<vmem>>, %arg1: memref<32x128xbf16, #tpu.memory_space<vmem>>, %arg2: memref<1x128xf32, #tpu.memory_space<vmem>>, %arg3: memref<128x256xbf16, #tpu.memory_space<vmem>>, %arg4: memref<1x256xf32, #tpu.memory_space<vmem>>, %arg5: memref<1x256xf32, #tpu.memory_space<vmem>>, %arg6: memref<256x512xbf16, #tpu.memory_space<vmem>>, %arg7: memref<1x512xf32, #tpu.memory_space<vmem>>, %arg8: memref<1x512xf32, #tpu.memory_space<vmem>>, %arg9: memref<512x1024xbf16, #tpu.memory_space<vmem>>, %arg10: memref<1x1024xf32, #tpu.memory_space<vmem>>, %arg11: memref<1x1024xf32, #tpu.memory_space<vmem>>, %arg12: memref<1024x128xbf16, #tpu.memory_space<vmem>>, %arg13: memref<1x128xf32, #tpu.memory_space<vmem>>, %arg14: memref<8x128xf32, #tpu.memory_space<vmem>>) attributes {dimension_semantics = [], scalar_prefetch = 0 : i64, scratch_operands = 0 : i64, tpu.core_type = #tpu.core_type<tc>} {
    %c0 = arith.constant 0 : index
    %c0_0 = arith.constant 0 : index
    %0 = vector.load %arg0[%c0, %c0_0] : memref<8x32xbf16, #tpu.memory_space<vmem>>, vector<8x32xbf16>
    %c0_1 = arith.constant 0 : index
    %c0_2 = arith.constant 0 : index
    %1 = vector.load %arg1[%c0_1, %c0_2] : memref<32x128xbf16, #tpu.memory_space<vmem>>, vector<32x128xbf16>
    %cst = arith.constant dense<0.000000e+00> : vector<8x128xf32>
    %2 = tpu.matmul %0, %1, %cst {dimension_numbers = #tpu.dot_dimension_numbers<[1], [0], [0], [1], [0, 0, 1, 1], [], []>} : vector<8x32xbf16>, vector<32x128xbf16>, vector<8x128xf32> -> vector<8x128xf32>
    %c0_3 = arith.constant 0 : index
    %c0_4 = arith.constant 0 : index
    %3 = vector.load %arg2[%c0_3, %c0_4] : memref<1x128xf32, #tpu.memory_space<vmem>>, vector<1x128xf32>
    %4 = vector.broadcast %3 : vector<1x128xf32> to vector<8x128xf32>
    %5 = arith.addf %2, %4 : vector<8x128xf32>
    %cst_5 = arith.constant 0.000000e+00 : f32
    %6 = vector.broadcast %cst_5 : f32 to vector<8x128xf32>
    %7 = arith.cmpf oge, %5, %6 : vector<8x128xf32>
    %cst_6 = arith.constant 2.000000e-01 : f32
    %8 = vector.broadcast %cst_6 : f32 to vector<8x128xf32>
    %9 = arith.mulf %8, %5 : vector<8x128xf32>
    %10 = arith.select %7, %5, %9 : vector<8x128xi1>, vector<8x128xf32>
    %11 = arith.truncf %10 : vector<8x128xf32> to vector<8x128xbf16>
    %c0_7 = arith.constant 0 : index
    %c0_8 = arith.constant 0 : index
    %12 = vector.load %arg3[%c0_7, %c0_8] : memref<128x256xbf16, #tpu.memory_space<vmem>>, vector<128x256xbf16>
    %cst_9 = arith.constant dense<0.000000e+00> : vector<8x256xf32>
    %13 = tpu.matmul %11, %12, %cst_9 {dimension_numbers = #tpu.dot_dimension_numbers<[1], [0], [0], [1], [0, 0, 1, 1], [], []>} : vector<8x128xbf16>, vector<128x256xbf16>, vector<8x256xf32> -> vector<8x256xf32>
    %c0_10 = arith.constant 0 : index
    %c0_11 = arith.constant 0 : index
    %14 = vector.load %arg4[%c0_10, %c0_11] : memref<1x256xf32, #tpu.memory_space<vmem>>, vector<1x256xf32>
    %c0_12 = arith.constant 0 : index
    %c0_13 = arith.constant 0 : index
    %15 = vector.load %arg5[%c0_12, %c0_13] : memref<1x256xf32, #tpu.memory_space<vmem>>, vector<1x256xf32>
    %cst_14 = arith.constant dense<0.000000e+00> : vector<256xf32>
    %16 = vector.multi_reduction <add>, %13, %cst_14 [0] : vector<8x256xf32> to vector<256xf32>
    %17 = vector.shape_cast %16 : vector<256xf32> to vector<1x256xf32>
    %cst_15 = arith.constant 1.250000e-01 : f32
    %18 = vector.broadcast %cst_15 : f32 to vector<1x256xf32>
    %19 = arith.mulf %17, %18 : vector<1x256xf32>
    %20 = vector.broadcast %19 : vector<1x256xf32> to vector<8x256xf32>
    %21 = arith.subf %13, %20 : vector<8x256xf32>
    %22 = arith.mulf %21, %21 : vector<8x256xf32>
    %cst_16 = arith.constant dense<0.000000e+00> : vector<256xf32>
    %23 = vector.multi_reduction <add>, %22, %cst_16 [0] : vector<8x256xf32> to vector<256xf32>
    %24 = vector.shape_cast %23 : vector<256xf32> to vector<1x256xf32>
    %cst_17 = arith.constant 1.250000e-01 : f32
    %25 = vector.broadcast %cst_17 : f32 to vector<1x256xf32>
    %26 = arith.mulf %24, %25 : vector<1x256xf32>
    %cst_18 = arith.constant 8.000000e-01 : f32
    %27 = vector.broadcast %cst_18 : f32 to vector<1x256xf32>
    %28 = arith.addf %26, %27 : vector<1x256xf32>
    %29 = math.rsqrt %28 : vector<1x256xf32>
    %30 = vector.broadcast %29 : vector<1x256xf32> to vector<8x256xf32>
    %31 = arith.mulf %21, %30 : vector<8x256xf32>
    %32 = vector.broadcast %14 : vector<1x256xf32> to vector<8x256xf32>
    %33 = arith.mulf %31, %32 : vector<8x256xf32>
    %34 = vector.broadcast %15 : vector<1x256xf32> to vector<8x256xf32>
    %35 = arith.addf %33, %34 : vector<8x256xf32>
    %cst_19 = arith.constant 0.000000e+00 : f32
    %36 = vector.broadcast %cst_19 : f32 to vector<8x256xf32>
    %37 = arith.cmpf oge, %35, %36 : vector<8x256xf32>
    %cst_20 = arith.constant 2.000000e-01 : f32
    %38 = vector.broadcast %cst_20 : f32 to vector<8x256xf32>
    %39 = arith.mulf %38, %35 : vector<8x256xf32>
    %40 = arith.select %37, %35, %39 : vector<8x256xi1>, vector<8x256xf32>
    %41 = arith.truncf %40 : vector<8x256xf32> to vector<8x256xbf16>
    %c0_21 = arith.constant 0 : index
    %c0_22 = arith.constant 0 : index
    %42 = vector.load %arg6[%c0_21, %c0_22] : memref<256x512xbf16, #tpu.memory_space<vmem>>, vector<256x512xbf16>
    %cst_23 = arith.constant dense<0.000000e+00> : vector<8x512xf32>
    %43 = tpu.matmul %41, %42, %cst_23 {dimension_numbers = #tpu.dot_dimension_numbers<[1], [0], [0], [1], [0, 0, 1, 1], [], []>} : vector<8x256xbf16>, vector<256x512xbf16>, vector<8x512xf32> -> vector<8x512xf32>
    %c0_24 = arith.constant 0 : index
    %c0_25 = arith.constant 0 : index
    %44 = vector.load %arg7[%c0_24, %c0_25] : memref<1x512xf32, #tpu.memory_space<vmem>>, vector<1x512xf32>
    %c0_26 = arith.constant 0 : index
    %c0_27 = arith.constant 0 : index
    %45 = vector.load %arg8[%c0_26, %c0_27] : memref<1x512xf32, #tpu.memory_space<vmem>>, vector<1x512xf32>
    %cst_28 = arith.constant dense<0.000000e+00> : vector<512xf32>
    %46 = vector.multi_reduction <add>, %43, %cst_28 [0] : vector<8x512xf32> to vector<512xf32>
    %47 = vector.shape_cast %46 : vector<512xf32> to vector<1x512xf32>
    %cst_29 = arith.constant 1.250000e-01 : f32
    %48 = vector.broadcast %cst_29 : f32 to vector<1x512xf32>
    %49 = arith.mulf %47, %48 : vector<1x512xf32>
    %50 = vector.broadcast %49 : vector<1x512xf32> to vector<8x512xf32>
    %51 = arith.subf %43, %50 : vector<8x512xf32>
    %52 = arith.mulf %51, %51 : vector<8x512xf32>
    %cst_30 = arith.constant dense<0.000000e+00> : vector<512xf32>
    %53 = vector.multi_reduction <add>, %52, %cst_30 [0] : vector<8x512xf32> to vector<512xf32>
    %54 = vector.shape_cast %53 : vector<512xf32> to vector<1x512xf32>
    %cst_31 = arith.constant 1.250000e-01 : f32
    %55 = vector.broadcast %cst_31 : f32 to vector<1x512xf32>
    %56 = arith.mulf %54, %55 : vector<1x512xf32>
    %cst_32 = arith.constant 8.000000e-01 : f32
    %57 = vector.broadcast %cst_32 : f32 to vector<1x512xf32>
    %58 = arith.addf %56, %57 : vector<1x512xf32>
    %59 = math.rsqrt %58 : vector<1x512xf32>
    %60 = vector.broadcast %59 : vector<1x512xf32> to vector<8x512xf32>
    %61 = arith.mulf %51, %60 : vector<8x512xf32>
    %62 = vector.broadcast %44 : vector<1x512xf32> to vector<8x512xf32>
    %63 = arith.mulf %61, %62 : vector<8x512xf32>
    %64 = vector.broadcast %45 : vector<1x512xf32> to vector<8x512xf32>
    %65 = arith.addf %63, %64 : vector<8x512xf32>
    %cst_33 = arith.constant 0.000000e+00 : f32
    %66 = vector.broadcast %cst_33 : f32 to vector<8x512xf32>
    %67 = arith.cmpf oge, %65, %66 : vector<8x512xf32>
    %cst_34 = arith.constant 2.000000e-01 : f32
    %68 = vector.broadcast %cst_34 : f32 to vector<8x512xf32>
    %69 = arith.mulf %68, %65 : vector<8x512xf32>
    %70 = arith.select %67, %65, %69 : vector<8x512xi1>, vector<8x512xf32>
    %71 = arith.truncf %70 : vector<8x512xf32> to vector<8x512xbf16>
    %c0_35 = arith.constant 0 : index
    %c0_36 = arith.constant 0 : index
    %72 = vector.load %arg9[%c0_35, %c0_36] : memref<512x1024xbf16, #tpu.memory_space<vmem>>, vector<512x1024xbf16>
    %cst_37 = arith.constant dense<0.000000e+00> : vector<8x1024xf32>
    %73 = tpu.matmul %71, %72, %cst_37 {dimension_numbers = #tpu.dot_dimension_numbers<[1], [0], [0], [1], [0, 0, 1, 1], [], []>} : vector<8x512xbf16>, vector<512x1024xbf16>, vector<8x1024xf32> -> vector<8x1024xf32>
    %c0_38 = arith.constant 0 : index
    %c0_39 = arith.constant 0 : index
    %74 = vector.load %arg10[%c0_38, %c0_39] : memref<1x1024xf32, #tpu.memory_space<vmem>>, vector<1x1024xf32>
    %c0_40 = arith.constant 0 : index
    %c0_41 = arith.constant 0 : index
    %75 = vector.load %arg11[%c0_40, %c0_41] : memref<1x1024xf32, #tpu.memory_space<vmem>>, vector<1x1024xf32>
    %cst_42 = arith.constant dense<0.000000e+00> : vector<1024xf32>
    %76 = vector.multi_reduction <add>, %73, %cst_42 [0] : vector<8x1024xf32> to vector<1024xf32>
    %77 = vector.shape_cast %76 : vector<1024xf32> to vector<1x1024xf32>
    %cst_43 = arith.constant 1.250000e-01 : f32
    %78 = vector.broadcast %cst_43 : f32 to vector<1x1024xf32>
    %79 = arith.mulf %77, %78 : vector<1x1024xf32>
    %80 = vector.broadcast %79 : vector<1x1024xf32> to vector<8x1024xf32>
    %81 = arith.subf %73, %80 : vector<8x1024xf32>
    %82 = arith.mulf %81, %81 : vector<8x1024xf32>
    %cst_44 = arith.constant dense<0.000000e+00> : vector<1024xf32>
    %83 = vector.multi_reduction <add>, %82, %cst_44 [0] : vector<8x1024xf32> to vector<1024xf32>
    %84 = vector.shape_cast %83 : vector<1024xf32> to vector<1x1024xf32>
    %cst_45 = arith.constant 1.250000e-01 : f32
    %85 = vector.broadcast %cst_45 : f32 to vector<1x1024xf32>
    %86 = arith.mulf %84, %85 : vector<1x1024xf32>
    %cst_46 = arith.constant 8.000000e-01 : f32
    %87 = vector.broadcast %cst_46 : f32 to vector<1x1024xf32>
    %88 = arith.addf %86, %87 : vector<1x1024xf32>
    %89 = math.rsqrt %88 : vector<1x1024xf32>
    %90 = vector.broadcast %89 : vector<1x1024xf32> to vector<8x1024xf32>
    %91 = arith.mulf %81, %90 : vector<8x1024xf32>
    %92 = vector.broadcast %74 : vector<1x1024xf32> to vector<8x1024xf32>
    %93 = arith.mulf %91, %92 : vector<8x1024xf32>
    %94 = vector.broadcast %75 : vector<1x1024xf32> to vector<8x1024xf32>
    %95 = arith.addf %93, %94 : vector<8x1024xf32>
    %cst_47 = arith.constant 0.000000e+00 : f32
    %96 = vector.broadcast %cst_47 : f32 to vector<8x1024xf32>
    %97 = arith.cmpf oge, %95, %96 : vector<8x1024xf32>
    %cst_48 = arith.constant 2.000000e-01 : f32
    %98 = vector.broadcast %cst_48 : f32 to vector<8x1024xf32>
    %99 = arith.mulf %98, %95 : vector<8x1024xf32>
    %100 = arith.select %97, %95, %99 : vector<8x1024xi1>, vector<8x1024xf32>
    %101 = arith.truncf %100 : vector<8x1024xf32> to vector<8x1024xbf16>
    %c0_49 = arith.constant 0 : index
    %c0_50 = arith.constant 0 : index
    %102 = vector.load %arg12[%c0_49, %c0_50] : memref<1024x128xbf16, #tpu.memory_space<vmem>>, vector<1024x128xbf16>
    %cst_51 = arith.constant dense<0.000000e+00> : vector<8x128xf32>
    %103 = tpu.matmul %101, %102, %cst_51 {dimension_numbers = #tpu.dot_dimension_numbers<[1], [0], [0], [1], [0, 0, 1, 1], [], []>} : vector<8x1024xbf16>, vector<1024x128xbf16>, vector<8x128xf32> -> vector<8x128xf32>
    %c0_52 = arith.constant 0 : index
    %c0_53 = arith.constant 0 : index
    %104 = vector.load %arg13[%c0_52, %c0_53] : memref<1x128xf32, #tpu.memory_space<vmem>>, vector<1x128xf32>
    %105 = vector.broadcast %104 : vector<1x128xf32> to vector<8x128xf32>
    %106 = arith.addf %103, %105 : vector<8x128xf32>
    %107 = math.tanh %106 : vector<8x128xf32>
    %c0_54 = arith.constant 0 : index
    %c0_55 = arith.constant 0 : index
    %108 = vector.load %arg14[%c0_54, %c0_55] : memref<8x128xf32, #tpu.memory_space<vmem>>, vector<8x128xf32>
    tpu.vector_store %arg14[%c0_54, %c0_55], %107 {strides = array<i32>} : memref<8x128xf32, #tpu.memory_space<vmem>>, vector<8x128xf32>,
    return
  }
}

</mosaic_0001>

<llo_original>
// kernel: generator_forward.1
$region0: #{generator_forward.1}
  #allocation0 [shape = 'u32[]', space=smem, size = 0x4, offset = 0x4, fixed_abs, tag = 'smem constant byte address 0x4 - core index']
  #allocation1 [shape = 'u32[72,128]{1,0:T(1,128)}', space=vmem, size = 0x9000, scoped, tag = 'internal scratch']
  %s0 = inlined_call_operand.vmem [shape: bf16[8,32], index: 0, kind: input, shape index: {}]
  %s1 = inlined_call_operand.hbm [shape: bf16[32,128], index: 1, kind: input, shape index: {}]
  %s2 = inlined_call_operand.hbm [shape: f32[1,128], index: 2, kind: input, shape index: {}]
  %s3 = inlined_call_operand.hbm [shape: bf16[128,256], index: 3, kind: input, shape index: {}]
  %s4 = inlined_call_operand.hbm [shape: f32[1,256], index: 4, kind: input, shape index: {}]
  %s5 = inlined_call_operand.hbm [shape: f32[1,256], index: 5, kind: input, shape index: {}]
  %s6 = inlined_call_operand.hbm [shape: bf16[256,512], index: 6, kind: input, shape index: {}]
  %s7 = inlined_call_operand.hbm [shape: f32[1,512], index: 7, kind: input, shape index: {}]
  %s8 = inlined_call_operand.hbm [shape: f32[1,512], index: 8, kind: input, shape index: {}]
  %s9 = inlined_call_operand.hbm [shape: bf16[512,1024], index: 9, kind: input, shape index: {}]
  %s10 = inlined_call_operand.vmem [shape: f32[1,1024], index: 10, kind: input, shape index: {}]
  %s11 = inlined_call_operand.vmem [shape: f32[1,1024], index: 11, kind: input, shape index: {}]
  %s12 = inlined_call_operand.hbm [shape: bf16[1024,128], index: 12, kind: input, shape index: {}]
  %s13 = inlined_call_operand.vmem [shape: f32[1,128], index: 13, kind: input, shape index: {}]
  %s14 = inlined_call_operand.vmem [shape: f32[8,128], index: 14, kind: output, shape index: {}]
  %s15 = sld [smem:[#allocation0]]
  $region106: #{generator_forward.1} parent=0
    _
  %s17 = ssub.s32 1, %s15
  %s18 = scalar_select 0, %s17, %s15
  $region1: #{generator_forward.1} parent=0
    #allocation2 [shape = 'u8[8192]{0}', space=vmem, size = 0x2000, scoped, tag = 'input window, operand 1, single buffered']
    #allocation3 [shape = 's32[1]{0}', space=sflag, size = 0x4, scoped, tag = 'scoped memory for generator_forward.1']
    #allocation4 [shape = 'u8[512]{0}', space=vmem, size = 0x400, scoped, tag = 'input window, operand 2, single buffered']
    #allocation5 [shape = 's32[1]{0}', space=sflag, size = 0x4, scoped, tag = 'scoped memory for generator_forward.1']
    #allocation6 [shape = 'u8[65536]{0}', space=vmem, size = 0x10000, scoped, tag = 'input window, operand 3, single buffered']
    #allocation7 [shape = 'u8[1024]{0}', space=vmem, size = 0x400, scoped, tag = 'input window, operand 4, single buffered']
    #allocation8 [shape = 's32[1]{0}', space=sflag, size = 0x4, scoped, tag = 'scoped memory for generator_forward.1']
    #allocation9 [shape = 'u8[1024]{0}', space=vmem, size = 0x400, scoped, tag = 'input window, operand 5, single buffered']
    #allocation10 [shape = 'u8[262144]{0}', space=vmem, size = 0x40000, scoped, tag = 'input window, operand 6, single buffered']
    #allocation11 [shape = 's32[1]{0}', space=sflag, size = 0x4, scoped, tag = 'scoped memory for generator_forward.1']
    #allocation12 [shape = 'u8[2048]{0}', space=vmem, size = 0x800, scoped, tag = 'input window, operand 7, single buffered']
    #allocation13 [shape = 'u8[2048]{0}', space=vmem, size = 0x800, scoped, tag = 'input window, operand 8, single buffered']
    #allocation14 [shape = 's32[1]{0}', space=sflag, size = 0x4, scoped, tag = 'scoped memory for generator_forward.1']
    #allocation15 [shape = 'u8[1048576]{0}', space=vmem, size = 0x100000, scoped, tag = 'input window, operand 9, single buffered']
    #allocation16 [shape = 'u8[262144]{0}', space=vmem, size = 0x40000, scoped, tag = 'input window, operand 12, single buffered']
    #allocation17 [shape = 's32[1]{0}', space=sflag, size = 0x4, scoped, tag = 'scoped memory for generator_forward.1']
    %19 = vsyncpa [#allocation3], 0
    %20 = vsyncpa [#allocation5], 0
    %21 = vsyncpa [#allocation8], 0
    %22 = vsyncpa [#allocation11], 0
    %23 = vsyncpa [#allocation14], 0
    %24 = vsyncpa [#allocation17], 0
    // Predicated region
    $region2: #{generator_forward.1} parent=1 // pred_check
      _
    $region3: #{generator_forward.1} parent=1 // pred_check_branch
      %26 = sbr.rel (0) target = $region5
    $region4: #{generator_forward.1} parent=1 // pred_region
      _
    $region5: #{generator_forward.1} parent=1 // pred_fallthru
      _
    // Predicated region
    $region6: #{generator_forward.1} parent=1 // pred_check
      _
    $region7: #{generator_forward.1} parent=1 // pred_check_branch
      %28 = sbr.rel (0) target = $region9
    $region8: #{generator_forward.1} parent=1 // pred_region
      %30 = vsyncadd [#allocation3], 0
      %s31 = sshll.u32 %s1, 4
      %s32 = int_to_ptr.hbm [resolvable:$true] %s31
      %s33 = sshll.u32 [#allocation2], 4
      %s34 = int_to_ptr.vmem [resolvable:$true] %s33
      %39 = dma.hbm_to_vmem [thread:$0]  %s32, 256, %s34, [#allocation3], 64, 64, 4
    $region9: #{generator_forward.1} parent=1 // pred_fallthru
      _
    // Predicated region
    $region10: #{generator_forward.1} parent=1 // pred_check
      _
    $region11: #{generator_forward.1} parent=1 // pred_check_branch
      %41 = sbr.rel (0) target = $region13
    $region12: #{generator_forward.1} parent=1 // pred_region
      %43 = vsyncadd [#allocation5], 0
      %s45 = sshll.u32 %s2, 4
      %s46 = int_to_ptr.hbm [resolvable:$true] %s45
      %s47 = sshll.u32 [#allocation4], 4
      %s48 = int_to_ptr.vmem [resolvable:$true] %s47
      %50 = dma.hbm_to_vmem [thread:$0]  %s46, 16, %s48, [#allocation5]
    $region13: #{generator_forward.1} parent=1 // pred_fallthru
      _
    // Predicated region
    $region14: #{generator_forward.1} parent=1 // pred_check
      _
    $region15: #{generator_forward.1} parent=1 // pred_check_branch
      %52 = sbr.rel (0) target = $region17
    $region16: #{generator_forward.1} parent=1 // pred_region
      %54 = vsyncadd [#allocation5], 0
      %s55 = sshll.u32 %s3, 4
      %s56 = int_to_ptr.hbm [resolvable:$true] %s55
      %s57 = sshll.u32 [#allocation6], 4
      %s58 = int_to_ptr.vmem [resolvable:$true] %s57
      %63 = dma.hbm_to_vmem [thread:$0]  %s56, 2048, %s58, [#allocation5], 128, 128, 8
    $region17: #{generator_forward.1} parent=1 // pred_fallthru
      _
    // Predicated region
    $region18: #{generator_forward.1} parent=1 // pred_check
      _
    $region19: #{generator_forward.1} parent=1 // pred_check_branch
      %65 = sbr.rel (0) target = $region21
    $region20: #{generator_forward.1} parent=1 // pred_region
      %67 = vsyncadd [#allocation8], 0
      %s69 = sshll.u32 %s4, 4
      %s70 = int_to_ptr.hbm [resolvable:$true] %s69
      %s71 = sshll.u32 [#allocation7], 4
      %s72 = int_to_ptr.vmem [resolvable:$true] %s71
      %74 = dma.hbm_to_vmem [thread:$0]  %s70, 32, %s72, [#allocation8]
    $region21: #{generator_forward.1} parent=1 // pred_fallthru
      _
    // Predicated region
    $region22: #{generator_forward.1} parent=1 // pred_check
      _
    $region23: #{generator_forward.1} parent=1 // pred_check_branch
      %76 = sbr.rel (0) target = $region25
    $region24: #{generator_forward.1} parent=1 // pred_region
      %78 = vsyncadd [#allocation8], 0
      %s80 = sshll.u32 %s5, 4
      %s81 = int_to_ptr.hbm [resolvable:$true] %s80
      %s82 = sshll.u32 [#allocation9], 4
      %s83 = int_to_ptr.vmem [resolvable:$true] %s82
      %85 = dma.hbm_to_vmem [thread:$0]  %s81, 32, %s83, [#allocation8]
    $region25: #{generator_forward.1} parent=1 // pred_fallthru
      _
    // Predicated region
    $region26: #{generator_forward.1} parent=1 // pred_check
      _
    $region27: #{generator_forward.1} parent=1 // pred_check_branch
      %87 = sbr.rel (0) target = $region29
    $region28: #{generator_forward.1} parent=1 // pred_region
      %89 = vsyncadd [#allocation11], 0
      %s90 = sshll.u32 %s6, 4
      %s91 = int_to_ptr.hbm [resolvable:$true] %s90
      %s92 = sshll.u32 [#allocation10], 4
      %s93 = int_to_ptr.vmem [resolvable:$true] %s92
      %98 = dma.hbm_to_vmem [thread:$0]  %s91, 8192, %s93, [#allocation11], 256, 256, 16
    $region29: #{generator_forward.1} parent=1 // pred_fallthru
      _
    // Predicated region
    $region30: #{generator_forward.1} parent=1 // pred_check
      _
    $region31: #{generator_forward.1} parent=1 // pred_check_branch
      %100 = sbr.rel (0) target = $region33
    $region32: #{generator_forward.1} parent=1 // pred_region
      %102 = vsyncadd [#allocation11], 0
      %s104 = sshll.u32 %s7, 4
      %s105 = int_to_ptr.hbm [resolvable:$true] %s104
      %s106 = sshll.u32 [#allocation12], 4
      %s107 = int_to_ptr.vmem [resolvable:$true] %s106
      %109 = dma.hbm_to_vmem [thread:$0]  %s105, 64, %s107, [#allocation11]
    $region33: #{generator_forward.1} parent=1 // pred_fallthru
      _
    // Predicated region
    $region34: #{generator_forward.1} parent=1 // pred_check
      _
    $region35: #{generator_forward.1} parent=1 // pred_check_branch
      %111 = sbr.rel (0) target = $region37
    $region36: #{generator_forward.1} parent=1 // pred_region
      %113 = vsyncadd [#allocation14], 0
      %s115 = sshll.u32 %s8, 4
      %s116 = int_to_ptr.hbm [resolvable:$true] %s115
      %s117 = sshll.u32 [#allocation13], 4
      %s118 = int_to_ptr.vmem [resolvable:$true] %s117
      %120 = dma.hbm_to_vmem [thread:$0]  %s116, 64, %s118, [#allocation14]
    $region37: #{generator_forward.1} parent=1 // pred_fallthru
      _
    // Predicated region
    $region38: #{generator_forward.1} parent=1 // pred_check
      _
    $region39: #{generator_forward.1} parent=1 // pred_check_branch
      %122 = sbr.rel (0) target = $region41
    $region40: #{generator_forward.1} parent=1 // pred_region
      %124 = vsyncadd [#allocation14], 0
      %s125 = sshll.u32 %s9, 4
      %s126 = int_to_ptr.hbm [resolvable:$true] %s125
      %s127 = sshll.u32 [#allocation15], 4
      %s128 = int_to_ptr.vmem [resolvable:$true] %s127
      %133 = dma.hbm_to_vmem [thread:$0]  %s126, 32768, %s128, [#allocation14], 512, 512, 32
    $region41: #{generator_forward.1} parent=1 // pred_fallthru
      _
    // Predicated region
    $region42: #{generator_forward.1} parent=1 // pred_check
      _
    $region43: #{generator_forward.1} parent=1 // pred_check_branch
      %135 = sbr.rel (0) target = $region45
    $region44: #{generator_forward.1} parent=1 // pred_region
      _
    $region45: #{generator_forward.1} parent=1 // pred_fallthru
      _
    // Predicated region
    $region46: #{generator_forward.1} parent=1 // pred_check
      _
    $region47: #{generator_forward.1} parent=1 // pred_check_branch
      %137 = sbr.rel (0) target = $region49
    $region48: #{generator_forward.1} parent=1 // pred_region
      _
    $region49: #{generator_forward.1} parent=1 // pred_fallthru
      _
    // Predicated region
    $region50: #{generator_forward.1} parent=1 // pred_check
      _
    $region51: #{generator_forward.1} parent=1 // pred_check_branch
      %139 = sbr.rel (0) target = $region53
    $region52: #{generator_forward.1} parent=1 // pred_region
      %141 = vsyncadd [#allocation17], 0
      %s142 = sshll.u32 %s12, 4
      %s143 = int_to_ptr.hbm [resolvable:$true] %s142
      %s144 = sshll.u32 [#allocation16], 4
      %s145 = int_to_ptr.vmem [resolvable:$true] %s144
      %150 = dma.hbm_to_vmem [thread:$0]  %s143, 8192, %s145, [#allocation17], 64, 64, 4
    $region53: #{generator_forward.1} parent=1 // pred_fallthru
      _
    // Predicated region
    $region54: #{generator_forward.1} parent=1 // pred_check
      _
    $region55: #{generator_forward.1} parent=1 // pred_check_branch
      %152 = sbr.rel (0) target = $region57
    $region56: #{generator_forward.1} parent=1 // pred_region
      _
    $region57: #{generator_forward.1} parent=1 // pred_fallthru
      _
    // Predicated region
    $region58: #{generator_forward.1} parent=1 // pred_check
      _
    $region59: #{generator_forward.1} parent=1 // pred_check_branch
      %154 = sbr.rel (0) target = $region61
    $region60: #{generator_forward.1} parent=1 // pred_region
      %156 = dma.done [#allocation3], 256
    $region61: #{generator_forward.1} parent=1 // pred_fallthru
      _
    // Predicated region
    $region62: #{generator_forward.1} parent=1 // pred_check
      _
    $region63: #{generator_forward.1} parent=1 // pred_check_branch
      %158 = sbr.rel (0) target = $region65
    $region64: #{generator_forward.1} parent=1 // pred_region
      %160 = dma.done [#allocation5], 16
    $region65: #{generator_forward.1} parent=1 // pred_fallthru
      _
    // Predicated region
    $region66: #{generator_forward.1} parent=1 // pred_check
      _
    $region67: #{generator_forward.1} parent=1 // pred_check_branch
      %162 = sbr.rel (0) target = $region69
    $region68: #{generator_forward.1} parent=1 // pred_region
      %164 = dma.done [#allocation5], 2048
    $region69: #{generator_forward.1} parent=1 // pred_fallthru
      _
    // Predicated region
    $region70: #{generator_forward.1} parent=1 // pred_check
      _
    $region71: #{generator_forward.1} parent=1 // pred_check_branch
      %166 = sbr.rel (0) target = $region73
    $region72: #{generator_forward.1} parent=1 // pred_region
      %168 = dma.done [#allocation8], 32
    $region73: #{generator_forward.1} parent=1 // pred_fallthru
      _
    // Predicated region
    $region74: #{generator_forward.1} parent=1 // pred_check
      _
    $region75: #{generator_forward.1} parent=1 // pred_check_branch
      %170 = sbr.rel (0) target = $region77
    $region76: #{generator_forward.1} parent=1 // pred_region
      %172 = dma.done [#allocation8], 32
    $region77: #{generator_forward.1} parent=1 // pred_fallthru
      _
    // Predicated region
    $region78: #{generator_forward.1} parent=1 // pred_check
      _
    $region79: #{generator_forward.1} parent=1 // pred_check_branch
      %174 = sbr.rel (0) target = $region81
    $region80: #{generator_forward.1} parent=1 // pred_region
      %176 = dma.done [#allocation11], 8192
    $region81: #{generator_forward.1} parent=1 // pred_fallthru
      _
    // Predicated region
    $region82: #{generator_forward.1} parent=1 // pred_check
      _
    $region83: #{generator_forward.1} parent=1 // pred_check_branch
      %178 = sbr.rel (0) target = $region85
    $region84: #{generator_forward.1} parent=1 // pred_region
      %180 = dma.done [#allocation11], 64
    $region85: #{generator_forward.1} parent=1 // pred_fallthru
      _
    // Predicated region
    $region86: #{generator_forward.1} parent=1 // pred_check
      _
    $region87: #{generator_forward.1} parent=1 // pred_check_branch
      %182 = sbr.rel (0) target = $region89
    $region88: #{generator_forward.1} parent=1 // pred_region
      %184 = dma.done [#allocation14], 64
    $region89: #{generator_forward.1} parent=1 // pred_fallthru
      _
    // Predicated region
    $region90: #{generator_forward.1} parent=1 // pred_check
      _
    $region91: #{generator_forward.1} parent=1 // pred_check_branch
      %186 = sbr.rel (0) target = $region93
    $region92: #{generator_forward.1} parent=1 // pred_region
      %188 = dma.done [#allocation14], 32768
    $region93: #{generator_forward.1} parent=1 // pred_fallthru
      _
    // Predicated region
    $region94: #{generator_forward.1} parent=1 // pred_check
      _
    $region95: #{generator_forward.1} parent=1 // pred_check_branch
      %190 = sbr.rel (0) target = $region97
    $region96: #{generator_forward.1} parent=1 // pred_region
      %192 = dma.done [#allocation17], 8192
    $region97: #{generator_forward.1} parent=1 // pred_fallthru
      _
    %v194 = vld [vmem:[%s0] sm:$0xf]
    %v195 = vld [vmem:[#allocation2] sm:$0xf]
    %v196 = vld [vmem:[#allocation2 + $0x4] sm:$0xf]
    %v197 = vld [vmem:[#allocation2 + $0x8] sm:$0xf]
    %v198 = vld [vmem:[#allocation2 + $0xc] sm:$0xf]
    %v199 = vld [vmem:[#allocation4] sm:$0x1]
    %v201 = vperm.slane %v199, 0
    %v207 = vunpack.c.l.b16 %v195
    %v208 = vunpack.c.l.b16 %v196
    %v209 = vunpack.c.l.b16 %v197
    %v210 = vunpack.c.l.b16 %v198
    %v211 = vpack.c.b16 %v208, %v207
    %v212 = vpack.c.b16 %v210, %v209
    %vm215 = vcmask 261120
    %v217 = vsel %vm215, %v194, 0
    %219 = vmatpush.bf16.msra.mxu0 0
    %220 = vmatpush.bf16.msra.mxu0 0
    %221 = vmatpush.bf16.msra.mxu0 0
    %222 = vmatpush.bf16.msra.mxu0 0
    %223 = vmatpush.bf16.msra.mxu0 0
    %224 = vmatpush.bf16.msra.mxu0 0
    %225 = vmatpush.bf16.msra.mxu0 %v212
    %226 = vmatpush.bf16.msra.mxu0 %v211
    %227 = vmatmul.bf16.gmra.mxu0 %v217
    %v228 = vpop.f32.mrf.mxu0
    %v229 = vadd.f32 %v201, %v228
    %v230 = vpop.f32.mrf.mxu0
    %231 = vdwg.mxu0
    %vm232 = vcmp.ge.f32.partialorder %v229, 0.0
    %v233 = vmul.f32 %v229, 0.2
    %v234 = vsel %vm232, %v229, %v233
    %v235 = vpack.c.bf16 %v234, %v234
    %v236 = vld [vmem:[#allocation6] sm:$0xff]
    %v237 = vld [vmem:[#allocation6 + $0x8] sm:$0xff]
    %v238 = vld [vmem:[#allocation6 + $0x10] sm:$0xff]
    %v239 = vld [vmem:[#allocation6 + $0x18] sm:$0xff]
    %v240 = vld [vmem:[#allocation6 + $0x20] sm:$0xff]
    %v241 = vld [vmem:[#allocation6 + $0x28] sm:$0xff]
    %v242 = vld [vmem:[#allocation6 + $0x30] sm:$0xff]
    %v243 = vld [vmem:[#allocation6 + $0x38] sm:$0xff]
    %v244 = vld [vmem:[#allocation6 + $0x40] sm:$0xff]
    %v245 = vld [vmem:[#allocation6 + $0x48] sm:$0xff]
    %v246 = vld [vmem:[#allocation6 + $0x50] sm:$0xff]
    %v247 = vld [vmem:[#allocation6 + $0x58] sm:$0xff]
    %v248 = vld [vmem:[#allocation6 + $0x60] sm:$0xff]
    %v249 = vld [vmem:[#allocation6 + $0x68] sm:$0xff]
    %v250 = vld [vmem:[#allocation6 + $0x70] sm:$0xff]
    %v251 = vld [vmem:[#allocation6 + $0x78] sm:$0xff]
    %v268 = vunpack.c.l.b16 %v236
    %v269 = vunpack.c.h.b16 %v236
    %v270 = vunpack.c.l.b16 %v237
    %v271 = vunpack.c.h.b16 %v237
    %v272 = vunpack.c.l.b16 %v238
    %v273 = vunpack.c.h.b16 %v238
    %v274 = vunpack.c.l.b16 %v239
    %v275 = vunpack.c.h.b16 %v239
    %v276 = vunpack.c.l.b16 %v240
    %v277 = vunpack.c.h.b16 %v240
    %v278 = vunpack.c.l.b16 %v241
    %v279 = vunpack.c.h.b16 %v241
    %v280 = vunpack.c.l.b16 %v242
    %v281 = vunpack.c.h.b16 %v242
    %v282 = vunpack.c.l.b16 %v243
    %v283 = vunpack.c.h.b16 %v243
    %v284 = vunpack.c.l.b16 %v244
    %v285 = vunpack.c.h.b16 %v244
    %v286 = vunpack.c.l.b16 %v245
    %v287 = vunpack.c.h.b16 %v245
    %v288 = vunpack.c.l.b16 %v246
    %v289 = vunpack.c.h.b16 %v246
    %v290 = vunpack.c.l.b16 %v247
    %v291 = vunpack.c.h.b16 %v247
    %v292 = vunpack.c.l.b16 %v248
    %v293 = vunpack.c.h.b16 %v248
    %v294 = vunpack.c.l.b16 %v249
    %v295 = vunpack.c.h.b16 %v249
    %v296 = vunpack.c.l.b16 %v250
    %v297 = vunpack.c.h.b16 %v250
    %v298 = vunpack.c.l.b16 %v251
    %v299 = vunpack.c.h.b16 %v251
    %v300 = vpack.c.b16 %v270, %v268
    %v301 = vpack.c.b16 %v271, %v269
    %v302 = vpack.c.b16 %v274, %v272
    %v303 = vpack.c.b16 %v275, %v273
    %v304 = vpack.c.b16 %v278, %v276
    %v305 = vpack.c.b16 %v279, %v277
    %v306 = vpack.c.b16 %v282, %v280
    %v307 = vpack.c.b16 %v283, %v281
    %v308 = vpack.c.b16 %v286, %v284
    %v309 = vpack.c.b16 %v287, %v285
    %v310 = vpack.c.b16 %v290, %v288
    %v311 = vpack.c.b16 %v291, %v289
    %v312 = vpack.c.b16 %v294, %v292
    %v313 = vpack.c.b16 %v295, %v293
    %v314 = vpack.c.b16 %v298, %v296
    %v315 = vpack.c.b16 %v299, %v297
    %332 = vmatpush.bf16.msra.mxu0 %v314
    %333 = vmatpush.bf16.msra.mxu0 %v312
    %334 = vmatpush.bf16.msra.mxu0 %v310
    %335 = vmatpush.bf16.msra.mxu0 %v308
    %336 = vmatpush.bf16.msra.mxu0 %v306
    %337 = vmatpush.bf16.msra.mxu0 %v304
    %338 = vmatpush.bf16.msra.mxu0 %v302
    %339 = vmatpush.bf16.msra.mxu0 %v300
    %340 = vmatmul.bf16.gmra.mxu0 %v235
    %v341 = vpop.f32.mrf.mxu0
    %v342 = vadd.f32 0.0, %v341
    %v343 = vpop.f32.mrf.mxu0
    %344 = vdwg.mxu0
    %345 = vmatpush.bf16.msra.mxu0 %v315
    %346 = vmatpush.bf16.msra.mxu0 %v313
    %347 = vmatpush.bf16.msra.mxu0 %v311
    %348 = vmatpush.bf16.msra.mxu0 %v309
    %349 = vmatpush.bf16.msra.mxu0 %v307
    %350 = vmatpush.bf16.msra.mxu0 %v305
    %351 = vmatpush.bf16.msra.mxu0 %v303
    %352 = vmatpush.bf16.msra.mxu0 %v301
    %353 = vmatmul.bf16.gmra.mxu0 %v235
    %v354 = vpop.f32.mrf.mxu0
    %v355 = vadd.f32 0.0, %v354
    %v356 = vpop.f32.mrf.mxu0
    %357 = vdwg.mxu0
    %v358 = vld [vmem:[#allocation7] sm:$0x3]
    %v359 = vld [vmem:[#allocation9] sm:$0x3]
    %v360 = vrot.slane %v342, 4
    %v361 = vadd.f32 %v342, %v360
    %v362 = vrot.slane %v361, 2
    %v363 = vadd.f32 %v361, %v362
    %v364 = vrot.slane %v363, 1
    %v365 = vadd.f32 %v363, %v364
    %v366 = vrot.slane %v355, 4
    %v367 = vadd.f32 %v355, %v366
    %v368 = vrot.slane %v367, 2
    %v369 = vadd.f32 %v367, %v368
    %v370 = vrot.slane %v369, 1
    %v371 = vadd.f32 %v369, %v370
    %v372 = vmul.f32 %v365, 0.125
    %v373 = vmul.f32 %v371, 0.125
    %v374 = vsub.f32 %v342, %v372
    %v375 = vsub.f32 %v355, %v373
    %v376 = vmul.f32 %v374, %v374
    %v377 = vmul.f32 %v375, %v375
    %v378 = vrot.slane %v376, 4
    %v379 = vadd.f32 %v376, %v378
    %v380 = vrot.slane %v379, 2
    %v381 = vadd.f32 %v379, %v380
    %v382 = vrot.slane %v381, 1
    %v383 = vadd.f32 %v381, %v382
    %v384 = vrot.slane %v377, 4
    %v385 = vadd.f32 %v377, %v384
    %v386 = vrot.slane %v385, 2
    %v387 = vadd.f32 %v385, %v386
    %v388 = vrot.slane %v387, 1
    %v389 = vadd.f32 %v387, %v388
    %v390 = vmul.f32 %v383, 0.125
    %v391 = vmul.f32 %v389, 0.125
    %v392 = vadd.f32 %v390, 0.8
    %v393 = vadd.f32 %v391, 0.8
    %v394 = vrsqrt.pop %v392
    %v395 = vmul.f32 %v394, %v392
    %v396 = vmul.f32 %v395, %v394
    %v397 = vmul.f32 0.5, %v396
    %v398 = vsub.f32 1.5, %v397
    %v399 = vmul.f32 %v394, %v398
    %vm400 = vweird.f32 %v392
    %vm401 = vweird.f32 %v394
    %vm402 = vmor %vm400, %vm401
    %v403 = vsel %vm402, %v394, %v399
    %v404 = vrsqrt.pop %v393
    %v405 = vmul.f32 %v404, %v393
    %v406 = vmul.f32 %v405, %v404
    %v407 = vmul.f32 0.5, %v406
    %v408 = vsub.f32 1.5, %v407
    %v409 = vmul.f32 %v404, %v408
    %vm410 = vweird.f32 %v393
    %vm411 = vweird.f32 %v404
    %vm412 = vmor %vm410, %vm411
    %v413 = vsel %vm412, %v404, %v409
    %v414 = vmul.f32 %v374, %v403
    %v415 = vmul.f32 %v375, %v413
    %v417 = vperm.slane %v358, 0
    %v418 = vperm.slane %v358, 1
    %v421 = vmul.f32 %v414, %v417
    %v422 = vmul.f32 %v415, %v418
    %v424 = vperm.slane %v359, 0
    %v425 = vperm.slane %v359, 1
    %v428 = vadd.f32 %v421, %v424
    %v429 = vadd.f32 %v422, %v425
    %vm430 = vcmp.ge.f32.partialorder %v428, 0.0
    %vm431 = vcmp.ge.f32.partialorder %v429, 0.0
    %v432 = vmul.f32 %v428, 0.2
    %v433 = vmul.f32 %v429, 0.2
    %v434 = vsel %vm430, %v428, %v432
    %v435 = vsel %vm431, %v429, %v433
    %v436 = vpack.c.bf16 %v434, %v434
    %v437 = vpack.c.bf16 %v435, %v435
    %v438 = vld [vmem:[#allocation10] sm:$0xff]
    %v439 = vld [vmem:[#allocation10 + $0x8] sm:$0xff]
    %v440 = vld [vmem:[#allocation10 + $0x10] sm:$0xff]
    %v441 = vld [vmem:[#allocation10 + $0x18] sm:$0xff]
    %v442 = vld [vmem:[#allocation10 + $0x20] sm:$0xff]
    %v443 = vld [vmem:[#allocation10 + $0x28] sm:$0xff]
    %v444 = vld [vmem:[#allocation10 + $0x30] sm:$0xff]
    %v445 = vld [vmem:[#allocation10 + $0x38] sm:$0xff]
    %v446 = vld [vmem:[#allocation10 + $0x40] sm:$0xff]
    %v447 = vld [vmem:[#allocation10 + $0x48] sm:$0xff]
    %v448 = vld [vmem:[#allocation10 + $0x50] sm:$0xff]
    %v449 = vld [vmem:[#allocation10 + $0x58] sm:$0xff]
    %v450 = vld [vmem:[#allocation10 + $0x60] sm:$0xff]
    %v451 = vld [vmem:[#allocation10 + $0x68] sm:$0xff]
    %v452 = vld [vmem:[#allocation10 + $0x70] sm:$0xff]
    %v453 = vld [vmem:[#allocation10 + $0x78] sm:$0xff]
    %v454 = vld [vmem:[#allocation10 + $0x80] sm:$0xff]
    %v455 = vld [vmem:[#allocation10 + $0x88] sm:$0xff]
    %v456 = vld [vmem:[#allocation10 + $0x90] sm:$0xff]
    %v457 = vld [vmem:[#allocation10 + $0x98] sm:$0xff]
    %v458 = vld [vmem:[#allocation10 + $0xa0] sm:$0xff]
    %v459 = vld [vmem:[#allocation10 + $0xa8] sm:$0xff]
    %v460 = vld [vmem:[#allocation10 + $0xb0] sm:$0xff]
    %v461 = vld [vmem:[#allocation10 + $0xb8] sm:$0xff]
    %v462 = vld [vmem:[#allocation10 + $0xc0] sm:$0xff]
    %v463 = vld [vmem:[#allocation10 + $0xc8] sm:$0xff]
    %v464 = vld [vmem:[#allocation10 + $0xd0] sm:$0xff]
    %v465 = vld [vmem:[#allocation10 + $0xd8] sm:$0xff]
    %v466 = vld [vmem:[#allocation10 + $0xe0] sm:$0xff]
    %v467 = vld [vmem:[#allocation10 + $0xe8] sm:$0xff]
    %v468 = vld [vmem:[#allocation10 + $0xf0] sm:$0xff]
    %v469 = vld [vmem:[#allocation10 + $0xf8] sm:$0xff]
    %v470 = vld [vmem:[#allocation10 + $0x100] sm:$0xff]
    %v471 = vld [vmem:[#allocation10 + $0x108] sm:$0xff]
    %v472 = vld [vmem:[#allocation10 + $0x110] sm:$0xff]
    %v473 = vld [vmem:[#allocation10 + $0x118] sm:$0xff]
    %v474 = vld [vmem:[#allocation10 + $0x120] sm:$0xff]
    %v475 = vld [vmem:[#allocation10 + $0x128] sm:$0xff]
    %v476 = vld [vmem:[#allocation10 + $0x130] sm:$0xff]
    %v477 = vld [vmem:[#allocation10 + $0x138] sm:$0xff]
    %v478 = vld [vmem:[#allocation10 + $0x140] sm:$0xff]
    %v479 = vld [vmem:[#allocation10 + $0x148] sm:$0xff]
    %v480 = vld [vmem:[#allocation10 + $0x150] sm:$0xff]
    %v481 = vld [vmem:[#allocation10 + $0x158] sm:$0xff]
    %v482 = vld [vmem:[#allocation10 + $0x160] sm:$0xff]
    %v483 = vld [vmem:[#allocation10 + $0x168] sm:$0xff]
    %v484 = vld [vmem:[#allocation10 + $0x170] sm:$0xff]
    %v485 = vld [vmem:[#allocation10 + $0x178] sm:$0xff]
    %v486 = vld [vmem:[#allocation10 + $0x180] sm:$0xff]
    %v487 = vld [vmem:[#allocation10 + $0x188] sm:$0xff]
    %v488 = vld [vmem:[#allocation10 + $0x190] sm:$0xff]
    %v489 = vld [vmem:[#allocation10 + $0x198] sm:$0xff]
    %v490 = vld [vmem:[#allocation10 + $0x1a0] sm:$0xff]
    %v491 = vld [vmem:[#allocation10 + $0x1a8] sm:$0xff]
    %v492 = vld [vmem:[#allocation10 + $0x1b0] sm:$0xff]
    %v493 = vld [vmem:[#allocation10 + $0x1b8] sm:$0xff]
    %v494 = vld [vmem:[#allocation10 + $0x1c0] sm:$0xff]
    %v495 = vld [vmem:[#allocation10 + $0x1c8] sm:$0xff]
    %v496 = vld [vmem:[#allocation10 + $0x1d0] sm:$0xff]
    %v497 = vld [vmem:[#allocation10 + $0x1d8] sm:$0xff]
    %v498 = vld [vmem:[#allocation10 + $0x1e0] sm:$0xff]
    %v499 = vld [vmem:[#allocation10 + $0x1e8] sm:$0xff]
    %v500 = vld [vmem:[#allocation10 + $0x1f0] sm:$0xff]
    %v501 = vld [vmem:[#allocation10 + $0x1f8] sm:$0xff]
    %v566 = vunpack.c.l.b16 %v438
    %v567 = vunpack.c.h.b16 %v438
    %v568 = vunpack.c.l.b16 %v439
    %v569 = vunpack.c.h.b16 %v439
    %v570 = vunpack.c.l.b16 %v440
    %v571 = vunpack.c.h.b16 %v440
    %v572 = vunpack.c.l.b16 %v441
    %v573 = vunpack.c.h.b16 %v441
    %v574 = vunpack.c.l.b16 %v442
    %v575 = vunpack.c.h.b16 %v442
    %v576 = vunpack.c.l.b16 %v443
    %v577 = vunpack.c.h.b16 %v443
    %v578 = vunpack.c.l.b16 %v444
    %v579 = vunpack.c.h.b16 %v444
    %v580 = vunpack.c.l.b16 %v445
    %v581 = vunpack.c.h.b16 %v445
    %v582 = vunpack.c.l.b16 %v446
    %v583 = vunpack.c.h.b16 %v446
    %v584 = vunpack.c.l.b16 %v447
    %v585 = vunpack.c.h.b16 %v447
    %v586 = vunpack.c.l.b16 %v448
    %v587 = vunpack.c.h.b16 %v448
    %v588 = vunpack.c.l.b16 %v449
    %v589 = vunpack.c.h.b16 %v449
    %v590 = vunpack.c.l.b16 %v450
    %v591 = vunpack.c.h.b16 %v450
    %v592 = vunpack.c.l.b16 %v451
    %v593 = vunpack.c.h.b16 %v451
    %v594 = vunpack.c.l.b16 %v452
    %v595 = vunpack.c.h.b16 %v452
    %v596 = vunpack.c.l.b16 %v453
    %v597 = vunpack.c.h.b16 %v453
    %v598 = vunpack.c.l.b16 %v454
    %v599 = vunpack.c.h.b16 %v454
    %v600 = vunpack.c.l.b16 %v455
    %v601 = vunpack.c.h.b16 %v455
    %v602 = vunpack.c.l.b16 %v456
    %v603 = vunpack.c.h.b16 %v456
    %v604 = vunpack.c.l.b16 %v457
    %v605 = vunpack.c.h.b16 %v457
    %v606 = vunpack.c.l.b16 %v458
    %v607 = vunpack.c.h.b16 %v458
    %v608 = vunpack.c.l.b16 %v459
    %v609 = vunpack.c.h.b16 %v459
    %v610 = vunpack.c.l.b16 %v460
    %v611 = vunpack.c.h.b16 %v460
    %v612 = vunpack.c.l.b16 %v461
    %v613 = vunpack.c.h.b16 %v461
    %v614 = vunpack.c.l.b16 %v462
    %v615 = vunpack.c.h.b16 %v462
    %v616 = vunpack.c.l.b16 %v463
    %v617 = vunpack.c.h.b16 %v463
    %v618 = vunpack.c.l.b16 %v464
    %v619 = vunpack.c.h.b16 %v464
    %v620 = vunpack.c.l.b16 %v465
    %v621 = vunpack.c.h.b16 %v465
    %v622 = vunpack.c.l.b16 %v466
    %v623 = vunpack.c.h.b16 %v466
    %v624 = vunpack.c.l.b16 %v467
    %v625 = vunpack.c.h.b16 %v467
    %v626 = vunpack.c.l.b16 %v468
    %v627 = vunpack.c.h.b16 %v468
    %v628 = vunpack.c.l.b16 %v469
    %v629 = vunpack.c.h.b16 %v469
    %v630 = vunpack.c.l.b16 %v470
    %v631 = vunpack.c.h.b16 %v470
    %v632 = vunpack.c.l.b16 %v471
    %v633 = vunpack.c.h.b16 %v471
    %v634 = vunpack.c.l.b16 %v472
    %v635 = vunpack.c.h.b16 %v472
    %v636 = vunpack.c.l.b16 %v473
    %v637 = vunpack.c.h.b16 %v473
    %v638 = vunpack.c.l.b16 %v474
    %v639 = vunpack.c.h.b16 %v474
    %v640 = vunpack.c.l.b16 %v475
    %v641 = vunpack.c.h.b16 %v475
    %v642 = vunpack.c.l.b16 %v476
    %v643 = vunpack.c.h.b16 %v476
    %v644 = vunpack.c.l.b16 %v477
    %v645 = vunpack.c.h.b16 %v477
    %v646 = vunpack.c.l.b16 %v478
    %v647 = vunpack.c.h.b16 %v478
    %v648 = vunpack.c.l.b16 %v479
    %v649 = vunpack.c.h.b16 %v479
    %v650 = vunpack.c.l.b16 %v480
    %v651 = vunpack.c.h.b16 %v480
    %v652 = vunpack.c.l.b16 %v481
    %v653 = vunpack.c.h.b16 %v481
    %v654 = vunpack.c.l.b16 %v482
    %v655 = vunpack.c.h.b16 %v482
    %v656 = vunpack.c.l.b16 %v483
    %v657 = vunpack.c.h.b16 %v483
    %v658 = vunpack.c.l.b16 %v484
    %v659 = vunpack.c.h.b16 %v484
    %v660 = vunpack.c.l.b16 %v485
    %v661 = vunpack.c.h.b16 %v485
    %v662 = vunpack.c.l.b16 %v486
    %v663 = vunpack.c.h.b16 %v486
    %v664 = vunpack.c.l.b16 %v487
    %v665 = vunpack.c.h.b16 %v487
    %v666 = vunpack.c.l.b16 %v488
    %v667 = vunpack.c.h.b16 %v488
    %v668 = vunpack.c.l.b16 %v489
    %v669 = vunpack.c.h.b16 %v489
    %v670 = vunpack.c.l.b16 %v490
    %v671 = vunpack.c.h.b16 %v490
    %v672 = vunpack.c.l.b16 %v491
    %v673 = vunpack.c.h.b16 %v491
    %v674 = vunpack.c.l.b16 %v492
    %v675 = vunpack.c.h.b16 %v492
    %v676 = vunpack.c.l.b16 %v493
    %v677 = vunpack.c.h.b16 %v493
    %v678 = vunpack.c.l.b16 %v494
    %v679 = vunpack.c.h.b16 %v494
    %v680 = vunpack.c.l.b16 %v495
    %v681 = vunpack.c.h.b16 %v495
    %v682 = vunpack.c.l.b16 %v496
    %v683 = vunpack.c.h.b16 %v496
    %v684 = vunpack.c.l.b16 %v497
    %v685 = vunpack.c.h.b16 %v497
    %v686 = vunpack.c.l.b16 %v498
    %v687 = vunpack.c.h.b16 %v498
    %v688 = vunpack.c.l.b16 %v499
    %v689 = vunpack.c.h.b16 %v499
    %v690 = vunpack.c.l.b16 %v500
    %v691 = vunpack.c.h.b16 %v500
    %v692 = vunpack.c.l.b16 %v501
    %v693 = vunpack.c.h.b16 %v501
    %v694 = vpack.c.b16 %v570, %v566
    %v695 = vpack.c.b16 %v571, %v567
    %v696 = vpack.c.b16 %v572, %v568
    %v697 = vpack.c.b16 %v573, %v569
    %v698 = vpack.c.b16 %v578, %v574
    %v699 = vpack.c.b16 %v579, %v575
    %v700 = vpack.c.b16 %v580, %v576
    %v701 = vpack.c.b16 %v581, %v577
    %v702 = vpack.c.b16 %v586, %v582
    %v703 = vpack.c.b16 %v587, %v583
    %v704 = vpack.c.b16 %v588, %v584
    %v705 = vpack.c.b16 %v589, %v585
    %v706 = vpack.c.b16 %v594, %v590
    %v707 = vpack.c.b16 %v595, %v591
    %v708 = vpack.c.b16 %v596, %v592
    %v709 = vpack.c.b16 %v597, %v593
    %v710 = vpack.c.b16 %v602, %v598
    %v711 = vpack.c.b16 %v603, %v599
    %v712 = vpack.c.b16 %v604, %v600
    %v713 = vpack.c.b16 %v605, %v601
    %v714 = vpack.c.b16 %v610, %v606
    %v715 = vpack.c.b16 %v611, %v607
    %v716 = vpack.c.b16 %v612, %v608
    %v717 = vpack.c.b16 %v613, %v609
    %v718 = vpack.c.b16 %v618, %v614
    %v719 = vpack.c.b16 %v619, %v615
    %v720 = vpack.c.b16 %v620, %v616
    %v721 = vpack.c.b16 %v621, %v617
    %v722 = vpack.c.b16 %v626, %v622
    %v723 = vpack.c.b16 %v627, %v623
    %v724 = vpack.c.b16 %v628, %v624
    %v725 = vpack.c.b16 %v629, %v625
    %v726 = vpack.c.b16 %v634, %v630
    %v727 = vpack.c.b16 %v635, %v631
    %v728 = vpack.c.b16 %v636, %v632
    %v729 = vpack.c.b16 %v637, %v633
    %v730 = vpack.c.b16 %v642, %v638
    %v731 = vpack.c.b16 %v643, %v639
    %v732 = vpack.c.b16 %v644, %v640
    %v733 = vpack.c.b16 %v645, %v641
    %v734 = vpack.c.b16 %v650, %v646
    %v735 = vpack.c.b16 %v651, %v647
    %v736 = vpack.c.b16 %v652, %v648
    %v737 = vpack.c.b16 %v653, %v649
    %v738 = vpack.c.b16 %v658, %v654
    %v739 = vpack.c.b16 %v659, %v655
    %v740 = vpack.c.b16 %v660, %v656
    %v741 = vpack.c.b16 %v661, %v657
    %v742 = vpack.c.b16 %v666, %v662
    %v743 = vpack.c.b16 %v667, %v663
    %v744 = vpack.c.b16 %v668, %v664
    %v745 = vpack.c.b16 %v669, %v665
    %v746 = vpack.c.b16 %v674, %v670
    %v747 = vpack.c.b16 %v675, %v671
    %v748 = vpack.c.b16 %v676, %v672
    %v749 = vpack.c.b16 %v677, %v673
    %v750 = vpack.c.b16 %v682, %v678
    %v751 = vpack.c.b16 %v683, %v679
    %v752 = vpack.c.b16 %v684, %v680
    %v753 = vpack.c.b16 %v685, %v681
    %v754 = vpack.c.b16 %v690, %v686
    %v755 = vpack.c.b16 %v691, %v687
    %v756 = vpack.c.b16 %v692, %v688
    %v757 = vpack.c.b16 %v693, %v689
    %822 = vmatpush.bf16.msra.mxu0 %v722
    %823 = vmatpush.bf16.msra.mxu0 %v718
    %824 = vmatpush.bf16.msra.mxu0 %v714
    %825 = vmatpush.bf16.msra.mxu0 %v710
    %826 = vmatpush.bf16.msra.mxu0 %v706
    %827 = vmatpush.bf16.msra.mxu0 %v702
    %828 = vmatpush.bf16.msra.mxu0 %v698
    %829 = vmatpush.bf16.msra.mxu0 %v694
    %830 = vmatmul.bf16.gmra.mxu0 %v436
    %v831 = vpop.f32.mrf.mxu0
    %v832 = vadd.f32 0.0, %v831
    %v833 = vpop.f32.mrf.mxu0
    %834 = vdwg.mxu0
    %835 = vmatpush.bf16.msra.mxu0 %v754
    %836 = vmatpush.bf16.msra.mxu0 %v750
    %837 = vmatpush.bf16.msra.mxu0 %v746
    %838 = vmatpush.bf16.msra.mxu0 %v742
    %839 = vmatpush.bf16.msra.mxu0 %v738
    %840 = vmatpush.bf16.msra.mxu0 %v734
    %841 = vmatpush.bf16.msra.mxu0 %v730
    %842 = vmatpush.bf16.msra.mxu0 %v726
    %843 = vmatmul.bf16.gmra.mxu0 %v437
    %v844 = vpop.f32.mrf.mxu0
    %v845 = vadd.f32 %v832, %v844
    %v846 = vpop.f32.mrf.mxu0
    %847 = vdwg.mxu0
    %848 = vmatpush.bf16.msra.mxu0 %v723
    %849 = vmatpush.bf16.msra.mxu0 %v719
    %850 = vmatpush.bf16.msra.mxu0 %v715
    %851 = vmatpush.bf16.msra.mxu0 %v711
    %852 = vmatpush.bf16.msra.mxu0 %v707
    %853 = vmatpush.bf16.msra.mxu0 %v703
    %854 = vmatpush.bf16.msra.mxu0 %v699
    %855 = vmatpush.bf16.msra.mxu0 %v695
    %856 = vmatmul.bf16.gmra.mxu0 %v436
    %v857 = vpop.f32.mrf.mxu0
    %v858 = vadd.f32 0.0, %v857
    %v859 = vpop.f32.mrf.mxu0
    %860 = vdwg.mxu0
    %861 = vmatpush.bf16.msra.mxu0 %v755
    %862 = vmatpush.bf16.msra.mxu0 %v751
    %863 = vmatpush.bf16.msra.mxu0 %v747
    %864 = vmatpush.bf16.msra.mxu0 %v743
    %865 = vmatpush.bf16.msra.mxu0 %v739
    %866 = vmatpush.bf16.msra.mxu0 %v735
    %867 = vmatpush.bf16.msra.mxu0 %v731
    %868 = vmatpush.bf16.msra.mxu0 %v727
    %869 = vmatmul.bf16.gmra.mxu0 %v437
    %v870 = vpop.f32.mrf.mxu0
    %v871 = vadd.f32 %v858, %v870
    %v872 = vpop.f32.mrf.mxu0
    %873 = vdwg.mxu0
    %874 = vmatpush.bf16.msra.mxu0 %v724
    %875 = vmatpush.bf16.msra.mxu0 %v720
    %876 = vmatpush.bf16.msra.mxu0 %v716
    %877 = vmatpush.bf16.msra.mxu0 %v712
    %878 = vmatpush.bf16.msra.mxu0 %v708
    %879 = vmatpush.bf16.msra.mxu0 %v704
    %880 = vmatpush.bf16.msra.mxu0 %v700
    %881 = vmatpush.bf16.msra.mxu0 %v696
    %882 = vmatmul.bf16.gmra.mxu0 %v436
    %v883 = vpop.f32.mrf.mxu0
    %v884 = vadd.f32 0.0, %v883
    %v885 = vpop.f32.mrf.mxu0
    %886 = vdwg.mxu0
    %887 = vmatpush.bf16.msra.mxu0 %v756
    %888 = vmatpush.bf16.msra.mxu0 %v752
    %889 = vmatpush.bf16.msra.mxu0 %v748
    %890 = vmatpush.bf16.msra.mxu0 %v744
    %891 = vmatpush.bf16.msra.mxu0 %v740
    %892 = vmatpush.bf16.msra.mxu0 %v736
    %893 = vmatpush.bf16.msra.mxu0 %v732
    %894 = vmatpush.bf16.msra.mxu0 %v728
    %895 = vmatmul.bf16.gmra.mxu0 %v437
    %v896 = vpop.f32.mrf.mxu0
    %v897 = vadd.f32 %v884, %v896
    %v898 = vpop.f32.mrf.mxu0
    %899 = vdwg.mxu0
    %900 = vmatpush.bf16.msra.mxu0 %v725
    %901 = vmatpush.bf16.msra.mxu0 %v721
    %902 = vmatpush.bf16.msra.mxu0 %v717
    %903 = vmatpush.bf16.msra.mxu0 %v713
    %904 = vmatpush.bf16.msra.mxu0 %v709
    %905 = vmatpush.bf16.msra.mxu0 %v705
    %906 = vmatpush.bf16.msra.mxu0 %v701
    %907 = vmatpush.bf16.msra.mxu0 %v697
    %908 = vmatmul.bf16.gmra.mxu0 %v436
    %v909 = vpop.f32.mrf.mxu0
    %v910 = vadd.f32 0.0, %v909
    %v911 = vpop.f32.mrf.mxu0
    %912 = vdwg.mxu0
    %913 = vmatpush.bf16.msra.mxu0 %v757
    %914 = vmatpush.bf16.msra.mxu0 %v753
    %915 = vmatpush.bf16.msra.mxu0 %v749
    %916 = vmatpush.bf16.msra.mxu0 %v745
    %917 = vmatpush.bf16.msra.mxu0 %v741
    %918 = vmatpush.bf16.msra.mxu0 %v737
    %919 = vmatpush.bf16.msra.mxu0 %v733
    %920 = vmatpush.bf16.msra.mxu0 %v729
    %921 = vmatmul.bf16.gmra.mxu0 %v437
    %v922 = vpop.f32.mrf.mxu0
    %v923 = vadd.f32 %v910, %v922
    %v924 = vpop.f32.mrf.mxu0
    %925 = vdwg.mxu0
    %v926 = vld [vmem:[#allocation12] sm:$0xf]
    %v927 = vld [vmem:[#allocation13] sm:$0xf]
    %v928 = vrot.slane %v845, 4
    %v929 = vadd.f32 %v845, %v928
    %v930 = vrot.slane %v929, 2
    %v931 = vadd.f32 %v929, %v930
    %v932 = vrot.slane %v931, 1
    %v933 = vadd.f32 %v931, %v932
    %v934 = vrot.slane %v871, 4
    %v935 = vadd.f32 %v871, %v934
    %v936 = vrot.slane %v935, 2
    %v937 = vadd.f32 %v935, %v936
    %v938 = vrot.slane %v937, 1
    %v939 = vadd.f32 %v937, %v938
    %v940 = vrot.slane %v897, 4
    %v941 = vadd.f32 %v897, %v940
    %v942 = vrot.slane %v941, 2
    %v943 = vadd.f32 %v941, %v942
    %v944 = vrot.slane %v943, 1
    %v945 = vadd.f32 %v943, %v944
    %v946 = vrot.slane %v923, 4
    %v947 = vadd.f32 %v923, %v946
    %v948 = vrot.slane %v947, 2
    %v949 = vadd.f32 %v947, %v948
    %v950 = vrot.slane %v949, 1
    %v951 = vadd.f32 %v949, %v950
    %v952 = vmul.f32 %v933, 0.125
    %v953 = vmul.f32 %v939, 0.125
    %v954 = vmul.f32 %v945, 0.125
    %v955 = vmul.f32 %v951, 0.125
    %v956 = vsub.f32 %v845, %v952
    %v957 = vsub.f32 %v871, %v953
    %v958 = vsub.f32 %v897, %v954
    %v959 = vsub.f32 %v923, %v955
    %v960 = vmul.f32 %v956, %v956
    %v961 = vmul.f32 %v957, %v957
    %v962 = vmul.f32 %v958, %v958
    %v963 = vmul.f32 %v959, %v959
    %v964 = vrot.slane %v960, 4
    %v965 = vadd.f32 %v960, %v964
    %v966 = vrot.slane %v965, 2
    %v967 = vadd.f32 %v965, %v966
    %v968 = vrot.slane %v967, 1
    %v969 = vadd.f32 %v967, %v968
    %v970 = vrot.slane %v961, 4
    %v971 = vadd.f32 %v961, %v970
    %v972 = vrot.slane %v971, 2
    %v973 = vadd.f32 %v971, %v972
    %v974 = vrot.slane %v973, 1
    %v975 = vadd.f32 %v973, %v974
    %v976 = vrot.slane %v962, 4
    %v977 = vadd.f32 %v962, %v976
    %v978 = vrot.slane %v977, 2
    %v979 = vadd.f32 %v977, %v978
    %v980 = vrot.slane %v979, 1
    %v981 = vadd.f32 %v979, %v980
    %v982 = vrot.slane %v963, 4
    %v983 = vadd.f32 %v963, %v982
    %v984 = vrot.slane %v983, 2
    %v985 = vadd.f32 %v983, %v984
    %v986 = vrot.slane %v985, 1
    %v987 = vadd.f32 %v985, %v986
    %v988 = vmul.f32 %v969, 0.125
    %v989 = vmul.f32 %v975, 0.125
    %v990 = vmul.f32 %v981, 0.125
    %v991 = vmul.f32 %v987, 0.125
    %v992 = vadd.f32 %v988, 0.8
    %v993 = vadd.f32 %v989, 0.8
    %v994 = vadd.f32 %v990, 0.8
    %v995 = vadd.f32 %v991, 0.8
    %v996 = vrsqrt.pop %v992
    %v997 = vmul.f32 %v996, %v992
    %v998 = vmul.f32 %v997, %v996
    %v999 = vmul.f32 0.5, %v998
    %v1000 = vsub.f32 1.5, %v999
    %v1001 = vmul.f32 %v996, %v1000
    %vm1002 = vweird.f32 %v992
    %vm1003 = vweird.f32 %v996
    %vm1004 = vmor %vm1002, %vm1003
    %v1005 = vsel %vm1004, %v996, %v1001
    %v1006 = vrsqrt.pop %v993
    %v1007 = vmul.f32 %v1006, %v993
    %v1008 = vmul.f32 %v1007, %v1006
    %v1009 = vmul.f32 0.5, %v1008
    %v1010 = vsub.f32 1.5, %v1009
    %v1011 = vmul.f32 %v1006, %v1010
    %vm1012 = vweird.f32 %v993
    %vm1013 = vweird.f32 %v1006
    %vm1014 = vmor %vm1012, %vm1013
    %v1015 = vsel %vm1014, %v1006, %v1011
    %v1016 = vrsqrt.pop %v994
    %v1017 = vmul.f32 %v1016, %v994
    %v1018 = vmul.f32 %v1017, %v1016
    %v1019 = vmul.f32 0.5, %v1018
    %v1020 = vsub.f32 1.5, %v1019
    %v1021 = vmul.f32 %v1016, %v1020
    %vm1022 = vweird.f32 %v994
    %vm1023 = vweird.f32 %v1016
    %vm1024 = vmor %vm1022, %vm1023
    %v1025 = vsel %vm1024, %v1016, %v1021
    %v1026 = vrsqrt.pop %v995
    %v1027 = vmul.f32 %v1026, %v995
    %v1028 = vmul.f32 %v1027, %v1026
    %v1029 = vmul.f32 0.5, %v1028
    %v1030 = vsub.f32 1.5, %v1029
    %v1031 = vmul.f32 %v1026, %v1030
    %vm1032 = vweird.f32 %v995
    %vm1033 = vweird.f32 %v1026
    %vm1034 = vmor %vm1032, %vm1033
    %v1035 = vsel %vm1034, %v1026, %v1031
    %v1036 = vmul.f32 %v956, %v1005
    %v1037 = vmul.f32 %v957, %v1015
    %v1038 = vmul.f32 %v958, %v1025
    %v1039 = vmul.f32 %v959, %v1035
    %v1041 = vperm.slane %v926, 0
    %v1042 = vperm.slane %v926, 1
    %v1043 = vperm.slane %v926, 2
    %v1044 = vperm.slane %v926, 3
    %v1049 = vmul.f32 %v1036, %v1041
    %v1050 = vmul.f32 %v1037, %v1042
    %v1051 = vmul.f32 %v1038, %v1043
    %v1052 = vmul.f32 %v1039, %v1044
    %v1054 = vperm.slane %v927, 0
    %v1055 = vperm.slane %v927, 1
    %v1056 = vperm.slane %v927, 2
    %v1057 = vperm.slane %v927, 3
    %v1062 = vadd.f32 %v1049, %v1054
    %v1063 = vadd.f32 %v1050, %v1055
    %v1064 = vadd.f32 %v1051, %v1056
    %v1065 = vadd.f32 %v1052, %v1057
    %vm1066 = vcmp.ge.f32.partialorder %v1062, 0.0
    %vm1067 = vcmp.ge.f32.partialorder %v1063, 0.0
    %vm1068 = vcmp.ge.f32.partialorder %v1064, 0.0
    %vm1069 = vcmp.ge.f32.partialorder %v1065, 0.0
    %v1070 = vmul.f32 %v1062, 0.2
    %v1071 = vmul.f32 %v1063, 0.2
    %v1072 = vmul.f32 %v1064, 0.2
    %v1073 = vmul.f32 %v1065, 0.2
    %v1074 = vsel %vm1066, %v1062, %v1070
    %v1075 = vsel %vm1067, %v1063, %v1071
    %v1076 = vsel %vm1068, %v1064, %v1072
    %v1077 = vsel %vm1069, %v1065, %v1073
    %v1078 = vpack.c.bf16 %v1074, %v1074
    %v1079 = vpack.c.bf16 %v1075, %v1075
    %v1080 = vpack.c.bf16 %v1076, %v1076
    %v1081 = vpack.c.bf16 %v1077, %v1077
    %v1082 = vld [vmem:[#allocation15] sm:$0xff]
    %v1083 = vld [vmem:[#allocation15 + $0x8] sm:$0xff]
    %v1084 = vld [vmem:[#allocation15 + $0x10] sm:$0xff]
    %v1085 = vld [vmem:[#allocation15 + $0x18] sm:$0xff]
    %v1086 = vld [vmem:[#allocation15 + $0x20] sm:$0xff]
    %v1087 = vld [vmem:[#allocation15 + $0x28] sm:$0xff]
    %v1088 = vld [vmem:[#allocation15 + $0x30] sm:$0xff]
    %v1089 = vld [vmem:[#allocation15 + $0x38] sm:$0xff]
    %v1090 = vld [vmem:[#allocation15 + $0x40] sm:$0xff]
    %v1091 = vld [vmem:[#allocation15 + $0x48] sm:$0xff]
    %v1092 = vld [vmem:[#allocation15 + $0x50] sm:$0xff]
    %v1093 = vld [vmem:[#allocation15 + $0x58] sm:$0xff]
    %v1094 = vld [vmem:[#allocation15 + $0x60] sm:$0xff]
    %v1095 = vld [vmem:[#allocation15 + $0x68] sm:$0xff]
    %v1096 = vld [vmem:[#allocation15 + $0x70] sm:$0xff]
    %v1097 = vld [vmem:[#allocation15 + $0x78] sm:$0xff]
    %v1098 = vld [vmem:[#allocation15 + $0x80] sm:$0xff]
    %v1099 = vld [vmem:[#allocation15 + $0x88] sm:$0xff]
    %v1100 = vld [vmem:[#allocation15 + $0x90] sm:$0xff]
    %v1101 = vld [vmem:[#allocation15 + $0x98] sm:$0xff]
    %v1102 = vld [vmem:[#allocation15 + $0xa0] sm:$0xff]
    %v1103 = vld [vmem:[#allocation15 + $0xa8] sm:$0xff]
    %v1104 = vld [vmem:[#allocation15 + $0xb0] sm:$0xff]
    %v1105 = vld [vmem:[#allocation15 + $0xb8] sm:$0xff]
    %v1106 = vld [vmem:[#allocation15 + $0xc0] sm:$0xff]
    %v1107 = vld [vmem:[#allocation15 + $0xc8] sm:$0xff]
    %v1108 = vld [vmem:[#allocation15 + $0xd0] sm:$0xff]
    %v1109 = vld [vmem:[#allocation15 + $0xd8] sm:$0xff]
    %v1110 = vld [vmem:[#allocation15 + $0xe0] sm:$0xff]
    %v1111 = vld [vmem:[#allocation15 + $0xe8] sm:$0xff]
    %v1112 = vld [vmem:[#allocation15 + $0xf0] sm:$0xff]
    %v1113 = vld [vmem:[#allocation15 + $0xf8] sm:$0xff]
    %v1114 = vld [vmem:[#allocation15 + $0x100] sm:$0xff]
    %v1115 = vld [vmem:[#allocation15 + $0x108] sm:$0xff]
    %v1116 = vld [vmem:[#allocation15 + $0x110] sm:$0xff]
    %v1117 = vld [vmem:[#allocation15 + $0x118] sm:$0xff]
    %v1118 = vld [vmem:[#allocation15 + $0x120] sm:$0xff]
    %v1119 = vld [vmem:[#allocation15 + $0x128] sm:$0xff]
    %v1120 = vld [vmem:[#allocation15 + $0x130] sm:$0xff]
    %v1121 = vld [vmem:[#allocation15 + $0x138] sm:$0xff]
    %v1122 = vld [vmem:[#allocation15 + $0x140] sm:$0xff]
    %v1123 = vld [vmem:[#allocation15 + $0x148] sm:$0xff]
    %v1124 = vld [vmem:[#allocation15 + $0x150] sm:$0xff]
    %v1125 = vld [vmem:[#allocation15 + $0x158] sm:$0xff]
    %v1126 = vld [vmem:[#allocation15 + $0x160] sm:$0xff]
    %v1127 = vld [vmem:[#allocation15 + $0x168] sm:$0xff]
    %v1128 = vld [vmem:[#allocation15 + $0x170] sm:$0xff]
    %v1129 = vld [vmem:[#allocation15 + $0x178] sm:$0xff]
    %v1130 = vld [vmem:[#allocation15 + $0x180] sm:$0xff]
    %v1131 = vld [vmem:[#allocation15 + $0x188] sm:$0xff]
    %v1132 = vld [vmem:[#allocation15 + $0x190] sm:$0xff]
    %v1133 = vld [vmem:[#allocation15 + $0x198] sm:$0xff]
    %v1134 = vld [vmem:[#allocation15 + $0x1a0] sm:$0xff]
    %v1135 = vld [vmem:[#allocation15 + $0x1a8] sm:$0xff]
    %v1136 = vld [vmem:[#allocation15 + $0x1b0] sm:$0xff]
    %v1137 = vld [vmem:[#allocation15 + $0x1b8] sm:$0xff]
    %v1138 = vld [vmem:[#allocation15 + $0x1c0] sm:$0xff]
    %v1139 = vld [vmem:[#allocation15 + $0x1c8] sm:$0xff]
    %v1140 = vld [vmem:[#allocation15 + $0x1d0] sm:$0xff]
    %v1141 = vld [vmem:[#allocation15 + $0x1d8] sm:$0xff]
    %v1142 = vld [vmem:[#allocation15 + $0x1e0] sm:$0xff]
    %v1143 = vld [vmem:[#allocation15 + $0x1e8] sm:$0xff]
    %v1144 = vld [vmem:[#allocation15 + $0x1f0] sm:$0xff]
    %v1145 = vld [vmem:[#allocation15 + $0x1f8] sm:$0xff]
    %v1146 = vld [vmem:[#allocation15 + $0x200] sm:$0xff]
    %v1147 = vld [vmem:[#allocation15 + $0x208] sm:$0xff]
    %v1148 = vld [vmem:[#allocation15 + $0x210] sm:$0xff]
    %v1149 = vld [vmem:[#allocation15 + $0x218] sm:$0xff]
    %v1150 = vld [vmem:[#allocation15 + $0x220] sm:$0xff]
    %v1151 = vld [vmem:[#allocation15 + $0x228] sm:$0xff]
    %v1152 = vld [vmem:[#allocation15 + $0x230] sm:$0xff]
    %v1153 = vld [vmem:[#allocation15 + $0x238] sm:$0xff]
    %v1154 = vld [vmem:[#allocation15 + $0x240] sm:$0xff]
    %v1155 = vld [vmem:[#allocation15 + $0x248] sm:$0xff]
    %v1156 = vld [vmem:[#allocation15 + $0x250] sm:$0xff]
    %v1157 = vld [vmem:[#allocation15 + $0x258] sm:$0xff]
    %v1158 = vld [vmem:[#allocation15 + $0x260] sm:$0xff]
    %v1159 = vld [vmem:[#allocation15 + $0x268] sm:$0xff]
    %v1160 = vld [vmem:[#allocation15 + $0x270] sm:$0xff]
    %v1161 = vld [vmem:[#allocation15 + $0x278] sm:$0xff]
    %v1162 = vld [vmem:[#allocation15 + $0x280] sm:$0xff]
    %v1163 = vld [vmem:[#allocation15 + $0x288] sm:$0xff]
    %v1164 = vld [vmem:[#allocation15 + $0x290] sm:$0xff]
    %v1165 = vld [vmem:[#allocation15 + $0x298] sm:$0xff]
    %v1166 = vld [vmem:[#allocation15 + $0x2a0] sm:$0xff]
    %v1167 = vld [vmem:[#allocation15 + $0x2a8] sm:$0xff]
    %v1168 = vld [vmem:[#allocation15 + $0x2b0] sm:$0xff]
    %v1169 = vld [vmem:[#allocation15 + $0x2b8] sm:$0xff]
    %v1170 = vld [vmem:[#allocation15 + $0x2c0] sm:$0xff]
    %v1171 = vld [vmem:[#allocation15 + $0x2c8] sm:$0xff]
    %v1172 = vld [vmem:[#allocation15 + $0x2d0] sm:$0xff]
    %v1173 = vld [vmem:[#allocation15 + $0x2d8] sm:$0xff]
    %v1174 = vld [vmem:[#allocation15 + $0x2e0] sm:$0xff]
    %v1175 = vld [vmem:[#allocation15 + $0x2e8] sm:$0xff]
    %v1176 = vld [vmem:[#allocation15 + $0x2f0] sm:$0xff]
    %v1177 = vld [vmem:[#allocation15 + $0x2f8] sm:$0xff]
    %v1178 = vld [vmem:[#allocation15 + $0x300] sm:$0xff]
    %v1179 = vld [vmem:[#allocation15 + $0x308] sm:$0xff]
    %v1180 = vld [vmem:[#allocation15 + $0x310] sm:$0xff]
    %v1181 = vld [vmem:[#allocation15 + $0x318] sm:$0xff]
    %v1182 = vld [vmem:[#allocation15 + $0x320] sm:$0xff]
    %v1183 = vld [vmem:[#allocation15 + $0x328] sm:$0xff]
    %v1184 = vld [vmem:[#allocation15 + $0x330] sm:$0xff]
    %v1185 = vld [vmem:[#allocation15 + $0x338] sm:$0xff]
    %v1186 = vld [vmem:[#allocation15 + $0x340] sm:$0xff]
    %v1187 = vld [vmem:[#allocation15 + $0x348] sm:$0xff]
    %v1188 = vld [vmem:[#allocation15 + $0x350] sm:$0xff]
    %v1189 = vld [vmem:[#allocation15 + $0x358] sm:$0xff]
    %v1190 = vld [vmem:[#allocation15 + $0x360] sm:$0xff]
    %v1191 = vld [vmem:[#allocation15 + $0x368] sm:$0xff]
    %v1192 = vld [vmem:[#allocation15 + $0x370] sm:$0xff]
    %v1193 = vld [vmem:[#allocation15 + $0x378] sm:$0xff]
    %v1194 = vld [vmem:[#allocation15 + $0x380] sm:$0xff]
    %v1195 = vld [vmem:[#allocation15 + $0x388] sm:$0xff]
    %v1196 = vld [vmem:[#allocation15 + $0x390] sm:$0xff]
    %v1197 = vld [vmem:[#allocation15 + $0x398] sm:$0xff]
    %v1198 = vld [vmem:[#allocation15 + $0x3a0] sm:$0xff]
    %v1199 = vld [vmem:[#allocation15 + $0x3a8] sm:$0xff]
    %v1200 = vld [vmem:[#allocation15 + $0x3b0] sm:$0xff]
    %v1201 = vld [vmem:[#allocation15 + $0x3b8] sm:$0xff]
    %v1202 = vld [vmem:[#allocation15 + $0x3c0] sm:$0xff]
    %v1203 = vld [vmem:[#allocation15 + $0x3c8] sm:$0xff]
    %v1204 = vld [vmem:[#allocation15 + $0x3d0] sm:$0xff]
    %v1205 = vld [vmem:[#allocation15 + $0x3d8] sm:$0xff]
    %v1206 = vld [vmem:[#allocation15 + $0x3e0] sm:$0xff]
    %v1207 = vld [vmem:[#allocation15 + $0x3e8] sm:$0xff]
    %v1208 = vld [vmem:[#allocation15 + $0x3f0] sm:$0xff]
    %v1209 = vld [vmem:[#allocation15 + $0x3f8] sm:$0xff]
    %v1210 = vld [vmem:[#allocation15 + $0x400] sm:$0xff]
    %v1211 = vld [vmem:[#allocation15 + $0x408] sm:$0xff]
    %v1212 = vld [vmem:[#allocation15 + $0x410] sm:$0xff]
    %v1213 = vld [vmem:[#allocation15 + $0x418] sm:$0xff]
    %v1214 = vld [vmem:[#allocation15 + $0x420] sm:$0xff]
    %v1215 = vld [vmem:[#allocation15 + $0x428] sm:$0xff]
    %v1216 = vld [vmem:[#allocation15 + $0x430] sm:$0xff]
    %v1217 = vld [vmem:[#allocation15 + $0x438] sm:$0xff]
    %v1218 = vld [vmem:[#allocation15 + $0x440] sm:$0xff]
    %v1219 = vld [vmem:[#allocation15 + $0x448] sm:$0xff]
    %v1220 = vld [vmem:[#allocation15 + $0x450] sm:$0xff]
    %v1221 = vld [vmem:[#allocation15 + $0x458] sm:$0xff]
    %v1222 = vld [vmem:[#allocation15 + $0x460] sm:$0xff]
    %v1223 = vld [vmem:[#allocation15 + $0x468] sm:$0xff]
    %v1224 = vld [vmem:[#allocation15 + $0x470] sm:$0xff]
    %v1225 = vld [vmem:[#allocation15 + $0x478] sm:$0xff]
    %v1226 = vld [vmem:[#allocation15 + $0x480] sm:$0xff]
    %v1227 = vld [vmem:[#allocation15 + $0x488] sm:$0xff]
    %v1228 = vld [vmem:[#allocation15 + $0x490] sm:$0xff]
    %v1229 = vld [vmem:[#allocation15 + $0x498] sm:$0xff]
    %v1230 = vld [vmem:[#allocation15 + $0x4a0] sm:$0xff]
    %v1231 = vld [vmem:[#allocation15 + $0x4a8] sm:$0xff]
    %v1232 = vld [vmem:[#allocation15 + $0x4b0] sm:$0xff]
    %v1233 = vld [vmem:[#allocation15 + $0x4b8] sm:$0xff]
    %v1234 = vld [vmem:[#allocation15 + $0x4c0] sm:$0xff]
    %v1235 = vld [vmem:[#allocation15 + $0x4c8] sm:$0xff]
    %v1236 = vld [vmem:[#allocation15 + $0x4d0] sm:$0xff]
    %v1237 = vld [vmem:[#allocation15 + $0x4d8] sm:$0xff]
    %v1238 = vld [vmem:[#allocation15 + $0x4e0] sm:$0xff]
    %v1239 = vld [vmem:[#allocation15 + $0x4e8] sm:$0xff]
    %v1240 = vld [vmem:[#allocation15 + $0x4f0] sm:$0xff]
    %v1241 = vld [vmem:[#allocation15 + $0x4f8] sm:$0xff]
    %v1242 = vld [vmem:[#allocation15 + $0x500] sm:$0xff]
    %v1243 = vld [vmem:[#allocation15 + $0x508] sm:$0xff]
    %v1244 = vld [vmem:[#allocation15 + $0x510] sm:$0xff]
    %v1245 = vld [vmem:[#allocation15 + $0x518] sm:$0xff]
    %v1246 = vld [vmem:[#allocation15 + $0x520] sm:$0xff]
    %v1247 = vld [vmem:[#allocation15 + $0x528] sm:$0xff]
    %v1248 = vld [vmem:[#allocation15 + $0x530] sm:$0xff]
    %v1249 = vld [vmem:[#allocation15 + $0x538] sm:$0xff]
    %v1250 = vld [vmem:[#allocation15 + $0x540] sm:$0xff]
    %v1251 = vld [vmem:[#allocation15 + $0x548] sm:$0xff]
    %v1252 = vld [vmem:[#allocation15 + $0x550] sm:$0xff]
    %v1253 = vld [vmem:[#allocation15 + $0x558] sm:$0xff]
    %v1254 = vld [vmem:[#allocation15 + $0x560] sm:$0xff]
    %v1255 = vld [vmem:[#allocation15 + $0x568] sm:$0xff]
    %v1256 = vld [vmem:[#allocation15 + $0x570] sm:$0xff]
    %v1257 = vld [vmem:[#allocation15 + $0x578] sm:$0xff]
    %v1258 = vld [vmem:[#allocation15 + $0x580] sm:$0xff]
    %v1259 = vld [vmem:[#allocation15 + $0x588] sm:$0xff]
    %v1260 = vld [vmem:[#allocation15 + $0x590] sm:$0xff]
    %v1261 = vld [vmem:[#allocation15 + $0x598] sm:$0xff]
    %v1262 = vld [vmem:[#allocation15 + $0x5a0] sm:$0xff]
    %v1263 = vld [vmem:[#allocation15 + $0x5a8] sm:$0xff]
    %v1264 = vld [vmem:[#allocation15 + $0x5b0] sm:$0xff]
    %v1265 = vld [vmem:[#allocation15 + $0x5b8] sm:$0xff]
    %v1266 = vld [vmem:[#allocation15 + $0x5c0] sm:$0xff]
    %v1267 = vld [vmem:[#allocation15 + $0x5c8] sm:$0xff]
    %v1268 = vld [vmem:[#allocation15 + $0x5d0] sm:$0xff]
    %v1269 = vld [vmem:[#allocation15 + $0x5d8] sm:$0xff]
    %v1270 = vld [vmem:[#allocation15 + $0x5e0] sm:$0xff]
    %v1271 = vld [vmem:[#allocation15 + $0x5e8] sm:$0xff]
    %v1272 = vld [vmem:[#allocation15 + $0x5f0] sm:$0xff]
    %v1273 = vld [vmem:[#allocation15 + $0x5f8] sm:$0xff]
    %v1274 = vld [vmem:[#allocation15 + $0x600] sm:$0xff]
    %v1275 = vld [vmem:[#allocation15 + $0x608] sm:$0xff]
    %v1276 = vld [vmem:[#allocation15 + $0x610] sm:$0xff]
    %v1277 = vld [vmem:[#allocation15 + $0x618] sm:$0xff]
    %v1278 = vld [vmem:[#allocation15 + $0x620] sm:$0xff]
    %v1279 = vld [vmem:[#allocation15 + $0x628] sm:$0xff]
    %v1280 = vld [vmem:[#allocation15 + $0x630] sm:$0xff]
    %v1281 = vld [vmem:[#allocation15 + $0x638] sm:$0xff]
    %v1282 = vld [vmem:[#allocation15 + $0x640] sm:$0xff]
    %v1283 = vld [vmem:[#allocation15 + $0x648] sm:$0xff]
    %v1284 = vld [vmem:[#allocation15 + $0x650] sm:$0xff]
    %v1285 = vld [vmem:[#allocation15 + $0x658] sm:$0xff]
    %v1286 = vld [vmem:[#allocation15 + $0x660] sm:$0xff]
    %v1287 = vld [vmem:[#allocation15 + $0x668] sm:$0xff]
    %v1288 = vld [vmem:[#allocation15 + $0x670] sm:$0xff]
    %v1289 = vld [vmem:[#allocation15 + $0x678] sm:$0xff]
    %v1290 = vld [vmem:[#allocation15 + $0x680] sm:$0xff]
    %v1291 = vld [vmem:[#allocation15 + $0x688] sm:$0xff]
    %v1292 = vld [vmem:[#allocation15 + $0x690] sm:$0xff]
    %v1293 = vld [vmem:[#allocation15 + $0x698] sm:$0xff]
    %v1294 = vld [vmem:[#allocation15 + $0x6a0] sm:$0xff]
    %v1295 = vld [vmem:[#allocation15 + $0x6a8] sm:$0xff]
    %v1296 = vld [vmem:[#allocation15 + $0x6b0] sm:$0xff]
    %v1297 = vld [vmem:[#allocation15 + $0x6b8] sm:$0xff]
    %v1298 = vld [vmem:[#allocation15 + $0x6c0] sm:$0xff]
    %v1299 = vld [vmem:[#allocation15 + $0x6c8] sm:$0xff]
    %v1300 = vld [vmem:[#allocation15 + $0x6d0] sm:$0xff]
    %v1301 = vld [vmem:[#allocation15 + $0x6d8] sm:$0xff]
    %v1302 = vld [vmem:[#allocation15 + $0x6e0] sm:$0xff]
    %v1303 = vld [vmem:[#allocation15 + $0x6e8] sm:$0xff]
    %v1304 = vld [vmem:[#allocation15 + $0x6f0] sm:$0xff]
    %v1305 = vld [vmem:[#allocation15 + $0x6f8] sm:$0xff]
    %v1306 = vld [vmem:[#allocation15 + $0x700] sm:$0xff]
    %v1307 = vld [vmem:[#allocation15 + $0x708] sm:$0xff]
    %v1308 = vld [vmem:[#allocation15 + $0x710] sm:$0xff]
    %v1309 = vld [vmem:[#allocation15 + $0x718] sm:$0xff]
    %v1310 = vld [vmem:[#allocation15 + $0x720] sm:$0xff]
    %v1311 = vld [vmem:[#allocation15 + $0x728] sm:$0xff]
    %v1312 = vld [vmem:[#allocation15 + $0x730] sm:$0xff]
    %v1313 = vld [vmem:[#allocation15 + $0x738] sm:$0xff]
    %v1314 = vld [vmem:[#allocation15 + $0x740] sm:$0xff]
    %v1315 = vld [vmem:[#allocation15 + $0x748] sm:$0xff]
    %v1316 = vld [vmem:[#allocation15 + $0x750] sm:$0xff]
    %v1317 = vld [vmem:[#allocation15 + $0x758] sm:$0xff]
    %v1318 = vld [vmem:[#allocation15 + $0x760] sm:$0xff]
    %v1319 = vld [vmem:[#allocation15 + $0x768] sm:$0xff]
    %v1320 = vld [vmem:[#allocation15 + $0x770] sm:$0xff]
    %v1321 = vld [vmem:[#allocation15 + $0x778] sm:$0xff]
    %v1322 = vld [vmem:[#allocation15 + $0x780] sm:$0xff]
    %v1323 = vld [vmem:[#allocation15 + $0x788] sm:$0xff]
    %v1324 = vld [vmem:[#allocation15 + $0x790] sm:$0xff]
    %v1325 = vld [vmem:[#allocation15 + $0x798] sm:$0xff]
    %v1326 = vld [vmem:[#allocation15 + $0x7a0] sm:$0xff]
    %v1327 = vld [vmem:[#allocation15 + $0x7a8] sm:$0xff]
    %v1328 = vld [vmem:[#allocation15 + $0x7b0] sm:$0xff]
    %v1329 = vld [vmem:[#allocation15 + $0x7b8] sm:$0xff]
    %v1330 = vld [vmem:[#allocation15 + $0x7c0] sm:$0xff]
    %v1331 = vld [vmem:[#allocation15 + $0x7c8] sm:$0xff]
    %v1332 = vld [vmem:[#allocation15 + $0x7d0] sm:$0xff]
    %v1333 = vld [vmem:[#allocation15 + $0x7d8] sm:$0xff]
    %v1334 = vld [vmem:[#allocation15 + $0x7e0] sm:$0xff]
    %v1335 = vld [vmem:[#allocation15 + $0x7e8] sm:$0xff]
    %v1336 = vld [vmem:[#allocation15 + $0x7f0] sm:$0xff]
    %v1337 = vld [vmem:[#allocation15 + $0x7f8] sm:$0xff]
    %v1594 = vunpack.c.l.b16 %v1082
    %v1595 = vunpack.c.h.b16 %v1082
    %v1596 = vunpack.c.l.b16 %v1083
    %v1597 = vunpack.c.h.b16 %v1083
    %v1598 = vunpack.c.l.b16 %v1084
    %v1599 = vunpack.c.h.b16 %v1084
    %v1600 = vunpack.c.l.b16 %v1085
    %v1601 = vunpack.c.h.b16 %v1085
    %v1602 = vunpack.c.l.b16 %v1086
    %v1603 = vunpack.c.h.b16 %v1086
    %v1604 = vunpack.c.l.b16 %v1087
    %v1605 = vunpack.c.h.b16 %v1087
    %v1606 = vunpack.c.l.b16 %v1088
    %v1607 = vunpack.c.h.b16 %v1088
    %v1608 = vunpack.c.l.b16 %v1089
    %v1609 = vunpack.c.h.b16 %v1089
    %v1610 = vunpack.c.l.b16 %v1090
    %v1611 = vunpack.c.h.b16 %v1090
    %v1612 = vunpack.c.l.b16 %v1091
    %v1613 = vunpack.c.h.b16 %v1091
    %v1614 = vunpack.c.l.b16 %v1092
    %v1615 = vunpack.c.h.b16 %v1092
    %v1616 = vunpack.c.l.b16 %v1093
    %v1617 = vunpack.c.h.b16 %v1093
    %v1618 = vunpack.c.l.b16 %v1094
    %v1619 = vunpack.c.h.b16 %v1094
    %v1620 = vunpack.c.l.b16 %v1095
    %v1621 = vunpack.c.h.b16 %v1095
    %v1622 = vunpack.c.l.b16 %v1096
    %v1623 = vunpack.c.h.b16 %v1096
    %v1624 = vunpack.c.l.b16 %v1097
    %v1625 = vunpack.c.h.b16 %v1097
    %v1626 = vunpack.c.l.b16 %v1098
    %v1627 = vunpack.c.h.b16 %v1098
    %v1628 = vunpack.c.l.b16 %v1099
    %v1629 = vunpack.c.h.b16 %v1099
    %v1630 = vunpack.c.l.b16 %v1100
    %v1631 = vunpack.c.h.b16 %v1100
    %v1632 = vunpack.c.l.b16 %v1101
    %v1633 = vunpack.c.h.b16 %v1101
    %v1634 = vunpack.c.l.b16 %v1102
    %v1635 = vunpack.c.h.b16 %v1102
    %v1636 = vunpack.c.l.b16 %v1103
    %v1637 = vunpack.c.h.b16 %v1103
    %v1638 = vunpack.c.l.b16 %v1104
    %v1639 = vunpack.c.h.b16 %v1104
    %v1640 = vunpack.c.l.b16 %v1105
    %v1641 = vunpack.c.h.b16 %v1105
    %v1642 = vunpack.c.l.b16 %v1106
    %v1643 = vunpack.c.h.b16 %v1106
    %v1644 = vunpack.c.l.b16 %v1107
    %v1645 = vunpack.c.h.b16 %v1107
    %v1646 = vunpack.c.l.b16 %v1108
    %v1647 = vunpack.c.h.b16 %v1108
    %v1648 = vunpack.c.l.b16 %v1109
    %v1649 = vunpack.c.h.b16 %v1109
    %v1650 = vunpack.c.l.b16 %v1110
    %v1651 = vunpack.c.h.b16 %v1110
    %v1652 = vunpack.c.l.b16 %v1111
    %v1653 = vunpack.c.h.b16 %v1111
    %v1654 = vunpack.c.l.b16 %v1112
    %v1655 = vunpack.c.h.b16 %v1112
    %v1656 = vunpack.c.l.b16 %v1113
    %v1657 = vunpack.c.h.b16 %v1113
    %v1658 = vunpack.c.l.b16 %v1114
    %v1659 = vunpack.c.h.b16 %v1114
    %v1660 = vunpack.c.l.b16 %v1115
    %v1661 = vunpack.c.h.b16 %v1115
    %v1662 = vunpack.c.l.b16 %v1116
    %v1663 = vunpack.c.h.b16 %v1116
    %v1664 = vunpack.c.l.b16 %v1117
    %v1665 = vunpack.c.h.b16 %v1117
    %v1666 = vunpack.c.l.b16 %v1118
    %v1667 = vunpack.c.h.b16 %v1118
    %v1668 = vunpack.c.l.b16 %v1119
    %v1669 = vunpack.c.h.b16 %v1119
    %v1670 = vunpack.c.l.b16 %v1120
    %v1671 = vunpack.c.h.b16 %v1120
    %v1672 = vunpack.c.l.b16 %v1121
    %v1673 = vunpack.c.h.b16 %v1121
    %v1674 = vunpack.c.l.b16 %v1122
    %v1675 = vunpack.c.h.b16 %v1122
    %v1676 = vunpack.c.l.b16 %v1123
    %v1677 = vunpack.c.h.b16 %v1123
    %v1678 = vunpack.c.l.b16 %v1124
    %v1679 = vunpack.c.h.b16 %v1124
    %v1680 = vunpack.c.l.b16 %v1125
    %v1681 = vunpack.c.h.b16 %v1125
    %v1682 = vunpack.c.l.b16 %v1126
    %v1683 = vunpack.c.h.b16 %v1126
    %v1684 = vunpack.c.l.b16 %v1127
    %v1685 = vunpack.c.h.b16 %v1127
    %v1686 = vunpack.c.l.b16 %v1128
    %v1687 = vunpack.c.h.b16 %v1128
    %v1688 = vunpack.c.l.b16 %v1129
    %v1689 = vunpack.c.h.b16 %v1129
    %v1690 = vunpack.c.l.b16 %v1130
    %v1691 = vunpack.c.h.b16 %v1130
    %v1692 = vunpack.c.l.b16 %v1131
    %v1693 = vunpack.c.h.b16 %v1131
    %v1694 = vunpack.c.l.b16 %v1132
    %v1695 = vunpack.c.h.b16 %v1132
    %v1696 = vunpack.c.l.b16 %v1133
    %v1697 = vunpack.c.h.b16 %v1133
    %v1698 = vunpack.c.l.b16 %v1134
    %v1699 = vunpack.c.h.b16 %v1134
    %v1700 = vunpack.c.l.b16 %v1135
    %v1701 = vunpack.c.h.b16 %v1135
    %v1702 = vunpack.c.l.b16 %v1136
    %v1703 = vunpack.c.h.b16 %v1136
    %v1704 = vunpack.c.l.b16 %v1137
    %v1705 = vunpack.c.h.b16 %v1137
    %v1706 = vunpack.c.l.b16 %v1138
    %v1707 = vunpack.c.h.b16 %v1138
    %v1708 = vunpack.c.l.b16 %v1139
    %v1709 = vunpack.c.h.b16 %v1139
    %v1710 = vunpack.c.l.b16 %v1140
    %v1711 = vunpack.c.h.b16 %v1140
    %v1712 = vunpack.c.l.b16 %v1141
    %v1713 = vunpack.c.h.b16 %v1141
    %v1714 = vunpack.c.l.b16 %v1142
    %v1715 = vunpack.c.h.b16 %v1142
    %v1716 = vunpack.c.l.b16 %v1143
    %v1717 = vunpack.c.h.b16 %v1143
    %v1718 = vunpack.c.l.b16 %v1144
    %v1719 = vunpack.c.h.b16 %v1144
    %v1720 = vunpack.c.l.b16 %v1145
    %v1721 = vunpack.c.h.b16 %v1145
    %v1722 = vunpack.c.l.b16 %v1146
    %v1723 = vunpack.c.h.b16 %v1146
    %v1724 = vunpack.c.l.b16 %v1147
    %v1725 = vunpack.c.h.b16 %v1147
    %v1726 = vunpack.c.l.b16 %v1148
    %v1727 = vunpack.c.h.b16 %v1148
    %v1728 = vunpack.c.l.b16 %v1149
    %v1729 = vunpack.c.h.b16 %v1149
    %v1730 = vunpack.c.l.b16 %v1150
    %v1731 = vunpack.c.h.b16 %v1150
    %v1732 = vunpack.c.l.b16 %v1151
    %v1733 = vunpack.c.h.b16 %v1151
    %v1734 = vunpack.c.l.b16 %v1152
    %v1735 = vunpack.c.h.b16 %v1152
    %v1736 = vunpack.c.l.b16 %v1153
    %v1737 = vunpack.c.h.b16 %v1153
    %v1738 = vunpack.c.l.b16 %v1154
    %v1739 = vunpack.c.h.b16 %v1154
    %v1740 = vunpack.c.l.b16 %v1155
    %v1741 = vunpack.c.h.b16 %v1155
    %v1742 = vunpack.c.l.b16 %v1156
    %v1743 = vunpack.c.h.b16 %v1156
    %v1744 = vunpack.c.l.b16 %v1157
    %v1745 = vunpack.c.h.b16 %v1157
    %v1746 = vunpack.c.l.b16 %v1158
    %v1747 = vunpack.c.h.b16 %v1158
    %v1748 = vunpack.c.l.b16 %v1159
    %v1749 = vunpack.c.h.b16 %v1159
    %v1750 = vunpack.c.l.b16 %v1160
    %v1751 = vunpack.c.h.b16 %v1160
    %v1752 = vunpack.c.l.b16 %v1161
    %v1753 = vunpack.c.h.b16 %v1161
    %v1754 = vunpack.c.l.b16 %v1162
    %v1755 = vunpack.c.h.b16 %v1162
    %v1756 = vunpack.c.l.b16 %v1163
    %v1757 = vunpack.c.h.b16 %v1163
    %v1758 = vunpack.c.l.b16 %v1164
    %v1759 = vunpack.c.h.b16 %v1164
    %v1760 = vunpack.c.l.b16 %v1165
    %v1761 = vunpack.c.h.b16 %v1165
    %v1762 = vunpack.c.l.b16 %v1166
    %v1763 = vunpack.c.h.b16 %v1166
    %v1764 = vunpack.c.l.b16 %v1167
    %v1765 = vunpack.c.h.b16 %v1167
    %v1766 = vunpack.c.l.b16 %v1168
    %v1767 = vunpack.c.h.b16 %v1168
    %v1768 = vunpack.c.l.b16 %v1169
    %v1769 = vunpack.c.h.b16 %v1169
    %v1770 = vunpack.c.l.b16 %v1170
    %v1771 = vunpack.c.h.b16 %v1170
    %v1772 = vunpack.c.l.b16 %v1171
    %v1773 = vunpack.c.h.b16 %v1171
    %v1774 = vunpack.c.l.b16 %v1172
    %v1775 = vunpack.c.h.b16 %v1172
    %v1776 = vunpack.c.l.b16 %v1173
    %v1777 = vunpack.c.h.b16 %v1173
    %v1778 = vunpack.c.l.b16 %v1174
    %v1779 = vunpack.c.h.b16 %v1174
    %v1780 = vunpack.c.l.b16 %v1175
    %v1781 = vunpack.c.h.b16 %v1175
    %v1782 = vunpack.c.l.b16 %v1176
    %v1783 = vunpack.c.h.b16 %v1176
    %v1784 = vunpack.c.l.b16 %v1177
    %v1785 = vunpack.c.h.b16 %v1177
    %v1786 = vunpack.c.l.b16 %v1178
    %v1787 = vunpack.c.h.b16 %v1178
    %v1788 = vunpack.c.l.b16 %v1179
    %v1789 = vunpack.c.h.b16 %v1179
    %v1790 = vunpack.c.l.b16 %v1180
    %v1791 = vunpack.c.h.b16 %v1180
    %v1792 = vunpack.c.l.b16 %v1181
    %v1793 = vunpack.c.h.b16 %v1181
    %v1794 = vunpack.c.l.b16 %v1182
    %v1795 = vunpack.c.h.b16 %v1182
    %v1796 = vunpack.c.l.b16 %v1183
    %v1797 = vunpack.c.h.b16 %v1183
    %v1798 = vunpack.c.l.b16 %v1184
    %v1799 = vunpack.c.h.b16 %v1184
    %v1800 = vunpack.c.l.b16 %v1185
    %v1801 = vunpack.c.h.b16 %v1185
    %v1802 = vunpack.c.l.b16 %v1186
    %v1803 = vunpack.c.h.b16 %v1186
    %v1804 = vunpack.c.l.b16 %v1187
    %v1805 = vunpack.c.h.b16 %v1187
    %v1806 = vunpack.c.l.b16 %v1188
    %v1807 = vunpack.c.h.b16 %v1188
    %v1808 = vunpack.c.l.b16 %v1189
    %v1809 = vunpack.c.h.b16 %v1189
    %v1810 = vunpack.c.l.b16 %v1190
    %v1811 = vunpack.c.h.b16 %v1190
    %v1812 = vunpack.c.l.b16 %v1191
    %v1813 = vunpack.c.h.b16 %v1191
    %v1814 = vunpack.c.l.b16 %v1192
    %v1815 = vunpack.c.h.b16 %v1192
    %v1816 = vunpack.c.l.b16 %v1193
    %v1817 = vunpack.c.h.b16 %v1193
    %v1818 = vunpack.c.l.b16 %v1194
    %v1819 = vunpack.c.h.b16 %v1194
    %v1820 = vunpack.c.l.b16 %v1195
    %v1821 = vunpack.c.h.b16 %v1195
    %v1822 = vunpack.c.l.b16 %v1196
    %v1823 = vunpack.c.h.b16 %v1196
    %v1824 = vunpack.c.l.b16 %v1197
    %v1825 = vunpack.c.h.b16 %v1197
    %v1826 = vunpack.c.l.b16 %v1198
    %v1827 = vunpack.c.h.b16 %v1198
    %v1828 = vunpack.c.l.b16 %v1199
    %v1829 = vunpack.c.h.b16 %v1199
    %v1830 = vunpack.c.l.b16 %v1200
    %v1831 = vunpack.c.h.b16 %v1200
    %v1832 = vunpack.c.l.b16 %v1201
    %v1833 = vunpack.c.h.b16 %v1201
    %v1834 = vunpack.c.l.b16 %v1202
    %v1835 = vunpack.c.h.b16 %v1202
    %v1836 = vunpack.c.l.b16 %v1203
    %v1837 = vunpack.c.h.b16 %v1203
    %v1838 = vunpack.c.l.b16 %v1204
    %v1839 = vunpack.c.h.b16 %v1204
    %v1840 = vunpack.c.l.b16 %v1205
    %v1841 = vunpack.c.h.b16 %v1205
    %v1842 = vunpack.c.l.b16 %v1206
    %v1843 = vunpack.c.h.b16 %v1206
    %v1844 = vunpack.c.l.b16 %v1207
    %v1845 = vunpack.c.h.b16 %v1207
    %v1846 = vunpack.c.l.b16 %v1208
    %v1847 = vunpack.c.h.b16 %v1208
    %v1848 = vunpack.c.l.b16 %v1209
    %v1849 = vunpack.c.h.b16 %v1209
    %v1850 = vunpack.c.l.b16 %v1210
    %v1851 = vunpack.c.h.b16 %v1210
    %v1852 = vunpack.c.l.b16 %v1211
    %v1853 = vunpack.c.h.b16 %v1211
    %v1854 = vunpack.c.l.b16 %v1212
    %v1855 = vunpack.c.h.b16 %v1212
    %v1856 = vunpack.c.l.b16 %v1213
    %v1857 = vunpack.c.h.b16 %v1213
    %v1858 = vunpack.c.l.b16 %v1214
    %v1859 = vunpack.c.h.b16 %v1214
    %v1860 = vunpack.c.l.b16 %v1215
    %v1861 = vunpack.c.h.b16 %v1215
    %v1862 = vunpack.c.l.b16 %v1216
    %v1863 = vunpack.c.h.b16 %v1216
    %v1864 = vunpack.c.l.b16 %v1217
    %v1865 = vunpack.c.h.b16 %v1217
    %v1866 = vunpack.c.l.b16 %v1218
    %v1867 = vunpack.c.h.b16 %v1218
    %v1868 = vunpack.c.l.b16 %v1219
    %v1869 = vunpack.c.h.b16 %v1219
    %v1870 = vunpack.c.l.b16 %v1220
    %v1871 = vunpack.c.h.b16 %v1220
    %v1872 = vunpack.c.l.b16 %v1221
    %v1873 = vunpack.c.h.b16 %v1221
    %v1874 = vunpack.c.l.b16 %v1222
    %v1875 = vunpack.c.h.b16 %v1222
    %v1876 = vunpack.c.l.b16 %v1223
    %v1877 = vunpack.c.h.b16 %v1223
    %v1878 = vunpack.c.l.b16 %v1224
    %v1879 = vunpack.c.h.b16 %v1224
    %v1880 = vunpack.c.l.b16 %v1225
    %v1881 = vunpack.c.h.b16 %v1225
    %v1882 = vunpack.c.l.b16 %v1226
    %v1883 = vunpack.c.h.b16 %v1226
    %v1884 = vunpack.c.l.b16 %v1227
    %v1885 = vunpack.c.h.b16 %v1227
    %v1886 = vunpack.c.l.b16 %v1228
    %v1887 = vunpack.c.h.b16 %v1228
    %v1888 = vunpack.c.l.b16 %v1229
    %v1889 = vunpack.c.h.b16 %v1229
    %v1890 = vunpack.c.l.b16 %v1230
    %v1891 = vunpack.c.h.b16 %v1230
    %v1892 = vunpack.c.l.b16 %v1231
    %v1893 = vunpack.c.h.b16 %v1231
    %v1894 = vunpack.c.l.b16 %v1232
    %v1895 = vunpack.c.h.b16 %v1232
    %v1896 = vunpack.c.l.b16 %v1233
    %v1897 = vunpack.c.h.b16 %v1233
    %v1898 = vunpack.c.l.b16 %v1234
    %v1899 = vunpack.c.h.b16 %v1234
    %v1900 = vunpack.c.l.b16 %v1235
    %v1901 = vunpack.c.h.b16 %v1235
    %v1902 = vunpack.c.l.b16 %v1236
    %v1903 = vunpack.c.h.b16 %v1236
    %v1904 = vunpack.c.l.b16 %v1237
    %v1905 = vunpack.c.h.b16 %v1237
    %v1906 = vunpack.c.l.b16 %v1238
    %v1907 = vunpack.c.h.b16 %v1238
    %v1908 = vunpack.c.l.b16 %v1239
    %v1909 = vunpack.c.h.b16 %v1239
    %v1910 = vunpack.c.l.b16 %v1240
    %v1911 = vunpack.c.h.b16 %v1240
    %v1912 = vunpack.c.l.b16 %v1241
    %v1913 = vunpack.c.h.b16 %v1241
    %v1914 = vunpack.c.l.b16 %v1242
    %v1915 = vunpack.c.h.b16 %v1242
    %v1916 = vunpack.c.l.b16 %v1243
    %v1917 = vunpack.c.h.b16 %v1243
    %v1918 = vunpack.c.l.b16 %v1244
    %v1919 = vunpack.c.h.b16 %v1244
    %v1920 = vunpack.c.l.b16 %v1245
    %v1921 = vunpack.c.h.b16 %v1245
    %v1922 = vunpack.c.l.b16 %v1246
    %v1923 = vunpack.c.h.b16 %v1246
    %v1924 = vunpack.c.l.b16 %v1247
    %v1925 = vunpack.c.h.b16 %v1247
    %v1926 = vunpack.c.l.b16 %v1248
    %v1927 = vunpack.c.h.b16 %v1248
    %v1928 = vunpack.c.l.b16 %v1249
    %v1929 = vunpack.c.h.b16 %v1249
    %v1930 = vunpack.c.l.b16 %v1250
    %v1931 = vunpack.c.h.b16 %v1250
    %v1932 = vunpack.c.l.b16 %v1251
    %v1933 = vunpack.c.h.b16 %v1251
    %v1934 = vunpack.c.l.b16 %v1252
    %v1935 = vunpack.c.h.b16 %v1252
    %v1936 = vunpack.c.l.b16 %v1253
    %v1937 = vunpack.c.h.b16 %v1253
    %v1938 = vunpack.c.l.b16 %v1254
    %v1939 = vunpack.c.h.b16 %v1254
    %v1940 = vunpack.c.l.b16 %v1255
    %v1941 = vunpack.c.h.b16 %v1255
    %v1942 = vunpack.c.l.b16 %v1256
    %v1943 = vunpack.c.h.b16 %v1256
    %v1944 = vunpack.c.l.b16 %v1257
    %v1945 = vunpack.c.h.b16 %v1257
    %v1946 = vunpack.c.l.b16 %v1258
    %v1947 = vunpack.c.h.b16 %v1258
    %v1948 = vunpack.c.l.b16 %v1259
    %v1949 = vunpack.c.h.b16 %v1259
    %v1950 = vunpack.c.l.b16 %v1260
    %v1951 = vunpack.c.h.b16 %v1260
    %v1952 = vunpack.c.l.b16 %v1261
    %v1953 = vunpack.c.h.b16 %v1261
    %v1954 = vunpack.c.l.b16 %v1262
    %v1955 = vunpack.c.h.b16 %v1262
    %v1956 = vunpack.c.l.b16 %v1263
    %v1957 = vunpack.c.h.b16 %v1263
    %v1958 = vunpack.c.l.b16 %v1264
    %v1959 = vunpack.c.h.b16 %v1264
    %v1960 = vunpack.c.l.b16 %v1265
    %v1961 = vunpack.c.h.b16 %v1265
    %v1962 = vunpack.c.l.b16 %v1266
    %v1963 = vunpack.c.h.b16 %v1266
    %v1964 = vunpack.c.l.b16 %v1267
    %v1965 = vunpack.c.h.b16 %v1267
    %v1966 = vunpack.c.l.b16 %v1268
    %v1967 = vunpack.c.h.b16 %v1268
    %v1968 = vunpack.c.l.b16 %v1269
    %v1969 = vunpack.c.h.b16 %v1269
    %v1970 = vunpack.c.l.b16 %v1270
    %v1971 = vunpack.c.h.b16 %v1270
    %v1972 = vunpack.c.l.b16 %v1271
    %v1973 = vunpack.c.h.b16 %v1271
    %v1974 = vunpack.c.l.b16 %v1272
    %v1975 = vunpack.c.h.b16 %v1272
    %v1976 = vunpack.c.l.b16 %v1273
    %v1977 = vunpack.c.h.b16 %v1273
    %v1978 = vunpack.c.l.b16 %v1274
    %v1979 = vunpack.c.h.b16 %v1274
    %v1980 = vunpack.c.l.b16 %v1275
    %v1981 = vunpack.c.h.b16 %v1275
    %v1982 = vunpack.c.l.b16 %v1276
    %v1983 = vunpack.c.h.b16 %v1276
    %v1984 = vunpack.c.l.b16 %v1277
    %v1985 = vunpack.c.h.b16 %v1277
    %v1986 = vunpack.c.l.b16 %v1278
    %v1987 = vunpack.c.h.b16 %v1278
    %v1988 = vunpack.c.l.b16 %v1279
    %v1989 = vunpack.c.h.b16 %v1279
    %v1990 = vunpack.c.l.b16 %v1280
    %v1991 = vunpack.c.h.b16 %v1280
    %v1992 = vunpack.c.l.b16 %v1281
    %v1993 = vunpack.c.h.b16 %v1281
    %v1994 = vunpack.c.l.b16 %v1282
    %v1995 = vunpack.c.h.b16 %v1282
    %v1996 = vunpack.c.l.b16 %v1283
    %v1997 = vunpack.c.h.b16 %v1283
    %v1998 = vunpack.c.l.b16 %v1284
    %v1999 = vunpack.c.h.b16 %v1284
    %v2000 = vunpack.c.l.b16 %v1285
    %v2001 = vunpack.c.h.b16 %v1285
    %v2002 = vunpack.c.l.b16 %v1286
    %v2003 = vunpack.c.h.b16 %v1286
    %v2004 = vunpack.c.l.b16 %v1287
    %v2005 = vunpack.c.h.b16 %v1287
    %v2006 = vunpack.c.l.b16 %v1288
    %v2007 = vunpack.c.h.b16 %v1288
    %v2008 = vunpack.c.l.b16 %v1289
    %v2009 = vunpack.c.h.b16 %v1289
    %v2010 = vunpack.c.l.b16 %v1290
    %v2011 = vunpack.c.h.b16 %v1290
    %v2012 = vunpack.c.l.b16 %v1291
    %v2013 = vunpack.c.h.b16 %v1291
    %v2014 = vunpack.c.l.b16 %v1292
    %v2015 = vunpack.c.h.b16 %v1292
    %v2016 = vunpack.c.l.b16 %v1293
    %v2017 = vunpack.c.h.b16 %v1293
    %v2018 = vunpack.c.l.b16 %v1294
    %v2019 = vunpack.c.h.b16 %v1294
    %v2020 = vunpack.c.l.b16 %v1295
    %v2021 = vunpack.c.h.b16 %v1295
    %v2022 = vunpack.c.l.b16 %v1296
    %v2023 = vunpack.c.h.b16 %v1296
    %v2024 = vunpack.c.l.b16 %v1297
    %v2025 = vunpack.c.h.b16 %v1297
    %v2026 = vunpack.c.l.b16 %v1298
    %v2027 = vunpack.c.h.b16 %v1298
    %v2028 = vunpack.c.l.b16 %v1299
    %v2029 = vunpack.c.h.b16 %v1299
    %v2030 = vunpack.c.l.b16 %v1300
    %v2031 = vunpack.c.h.b16 %v1300
    %v2032 = vunpack.c.l.b16 %v1301
    %v2033 = vunpack.c.h.b16 %v1301
    %v2034 = vunpack.c.l.b16 %v1302
    %v2035 = vunpack.c.h.b16 %v1302
    %v2036 = vunpack.c.l.b16 %v1303
    %v2037 = vunpack.c.h.b16 %v1303
    %v2038 = vunpack.c.l.b16 %v1304
    %v2039 = vunpack.c.h.b16 %v1304
    %v2040 = vunpack.c.l.b16 %v1305
    %v2041 = vunpack.c.h.b16 %v1305
    %v2042 = vunpack.c.l.b16 %v1306
    %v2043 = vunpack.c.h.b16 %v1306
    %v2044 = vunpack.c.l.b16 %v1307
    %v2045 = vunpack.c.h.b16 %v1307
    %v2046 = vunpack.c.l.b16 %v1308
    %v2047 = vunpack.c.h.b16 %v1308
    %v2048 = vunpack.c.l.b16 %v1309
    %v2049 = vunpack.c.h.b16 %v1309
    %v2050 = vunpack.c.l.b16 %v1310
    %v2051 = vunpack.c.h.b16 %v1310
    %v2052 = vunpack.c.l.b16 %v1311
    %v2053 = vunpack.c.h.b16 %v1311
    %v2054 = vunpack.c.l.b16 %v1312
    %v2055 = vunpack.c.h.b16 %v1312
    %v2056 = vunpack.c.l.b16 %v1313
    %v2057 = vunpack.c.h.b16 %v1313
    %v2058 = vunpack.c.l.b16 %v1314
    %v2059 = vunpack.c.h.b16 %v1314
    %v2060 = vunpack.c.l.b16 %v1315
    %v2061 = vunpack.c.h.b16 %v1315
    %v2062 = vunpack.c.l.b16 %v1316
    %v2063 = vunpack.c.h.b16 %v1316
    %v2064 = vunpack.c.l.b16 %v1317
    %v2065 = vunpack.c.h.b16 %v1317
    %v2066 = vunpack.c.l.b16 %v1318
    %v2067 = vunpack.c.h.b16 %v1318
    %v2068 = vunpack.c.l.b16 %v1319
    %v2069 = vunpack.c.h.b16 %v1319
    %v2070 = vunpack.c.l.b16 %v1320
    %v2071 = vunpack.c.h.b16 %v1320
    %v2072 = vunpack.c.l.b16 %v1321
    %v2073 = vunpack.c.h.b16 %v1321
    %v2074 = vunpack.c.l.b16 %v1322
    %v2075 = vunpack.c.h.b16 %v1322
    %v2076 = vunpack.c.l.b16 %v1323
    %v2077 = vunpack.c.h.b16 %v1323
    %v2078 = vunpack.c.l.b16 %v1324
    %v2079 = vunpack.c.h.b16 %v1324
    %v2080 = vunpack.c.l.b16 %v1325
    %v2081 = vunpack.c.h.b16 %v1325
    %v2082 = vunpack.c.l.b16 %v1326
    %v2083 = vunpack.c.h.b16 %v1326
    %v2084 = vunpack.c.l.b16 %v1327
    %v2085 = vunpack.c.h.b16 %v1327
    %v2086 = vunpack.c.l.b16 %v1328
    %v2087 = vunpack.c.h.b16 %v1328
    %v2088 = vunpack.c.l.b16 %v1329
    %v2089 = vunpack.c.h.b16 %v1329
    %v2090 = vunpack.c.l.b16 %v1330
    %v2091 = vunpack.c.h.b16 %v1330
    %v2092 = vunpack.c.l.b16 %v1331
    %v2093 = vunpack.c.h.b16 %v1331
    %v2094 = vunpack.c.l.b16 %v1332
    %v2095 = vunpack.c.h.b16 %v1332
    %v2096 = vunpack.c.l.b16 %v1333
    %v2097 = vunpack.c.h.b16 %v1333
    %v2098 = vunpack.c.l.b16 %v1334
    %v2099 = vunpack.c.h.b16 %v1334
    %v2100 = vunpack.c.l.b16 %v1335
    %v2101 = vunpack.c.h.b16 %v1335
    %v2102 = vunpack.c.l.b16 %v1336
    %v2103 = vunpack.c.h.b16 %v1336
    %v2104 = vunpack.c.l.b16 %v1337
    %v2105 = vunpack.c.h.b16 %v1337
    %v2106 = vpack.c.b16 %v1602, %v1594
    %v2107 = vpack.c.b16 %v1603, %v1595
    %v2108 = vpack.c.b16 %v1604, %v1596
    %v2109 = vpack.c.b16 %v1605, %v1597
    %v2110 = vpack.c.b16 %v1606, %v1598
    %v2111 = vpack.c.b16 %v1607, %v1599
    %v2112 = vpack.c.b16 %v1608, %v1600
    %v2113 = vpack.c.b16 %v1609, %v1601
    %v2114 = vpack.c.b16 %v1618, %v1610
    %v2115 = vpack.c.b16 %v1619, %v1611
    %v2116 = vpack.c.b16 %v1620, %v1612
    %v2117 = vpack.c.b16 %v1621, %v1613
    %v2118 = vpack.c.b16 %v1622, %v1614
    %v2119 = vpack.c.b16 %v1623, %v1615
    %v2120 = vpack.c.b16 %v1624, %v1616
    %v2121 = vpack.c.b16 %v1625, %v1617
    %v2122 = vpack.c.b16 %v1634, %v1626
    %v2123 = vpack.c.b16 %v1635, %v1627
    %v2124 = vpack.c.b16 %v1636, %v1628
    %v2125 = vpack.c.b16 %v1637, %v1629
    %v2126 = vpack.c.b16 %v1638, %v1630
    %v2127 = vpack.c.b16 %v1639, %v1631
    %v2128 = vpack.c.b16 %v1640, %v1632
    %v2129 = vpack.c.b16 %v1641, %v1633
    %v2130 = vpack.c.b16 %v1650, %v1642
    %v2131 = vpack.c.b16 %v1651, %v1643
    %v2132 = vpack.c.b16 %v1652, %v1644
    %v2133 = vpack.c.b16 %v1653, %v1645
    %v2134 = vpack.c.b16 %v1654, %v1646
    %v2135 = vpack.c.b16 %v1655, %v1647
    %v2136 = vpack.c.b16 %v1656, %v1648
    %v2137 = vpack.c.b16 %v1657, %v1649
    %v2138 = vpack.c.b16 %v1666, %v1658
    %v2139 = vpack.c.b16 %v1667, %v1659
    %v2140 = vpack.c.b16 %v1668, %v1660
    %v2141 = vpack.c.b16 %v1669, %v1661
    %v2142 = vpack.c.b16 %v1670, %v1662
    %v2143 = vpack.c.b16 %v1671, %v1663
    %v2144 = vpack.c.b16 %v1672, %v1664
    %v2145 = vpack.c.b16 %v1673, %v1665
    %v2146 = vpack.c.b16 %v1682, %v1674
    %v2147 = vpack.c.b16 %v1683, %v1675
    %v2148 = vpack.c.b16 %v1684, %v1676
    %v2149 = vpack.c.b16 %v1685, %v1677
    %v2150 = vpack.c.b16 %v1686, %v1678
    %v2151 = vpack.c.b16 %v1687, %v1679
    %v2152 = vpack.c.b16 %v1688, %v1680
    %v2153 = vpack.c.b16 %v1689, %v1681
    %v2154 = vpack.c.b16 %v1698, %v1690
    %v2155 = vpack.c.b16 %v1699, %v1691
    %v2156 = vpack.c.b16 %v1700, %v1692
    %v2157 = vpack.c.b16 %v1701, %v1693
    %v2158 = vpack.c.b16 %v1702, %v1694
    %v2159 = vpack.c.b16 %v1703, %v1695
    %v2160 = vpack.c.b16 %v1704, %v1696
    %v2161 = vpack.c.b16 %v1705, %v1697
    %v2162 = vpack.c.b16 %v1714, %v1706
    %v2163 = vpack.c.b16 %v1715, %v1707
    %v2164 = vpack.c.b16 %v1716, %v1708
    %v2165 = vpack.c.b16 %v1717, %v1709
    %v2166 = vpack.c.b16 %v1718, %v1710
    %v2167 = vpack.c.b16 %v1719, %v1711
    %v2168 = vpack.c.b16 %v1720, %v1712
    %v2169 = vpack.c.b16 %v1721, %v1713
    %v2170 = vpack.c.b16 %v1730, %v1722
    %v2171 = vpack.c.b16 %v1731, %v1723
    %v2172 = vpack.c.b16 %v1732, %v1724
    %v2173 = vpack.c.b16 %v1733, %v1725
    %v2174 = vpack.c.b16 %v1734, %v1726
    %v2175 = vpack.c.b16 %v1735, %v1727
    %v2176 = vpack.c.b16 %v1736, %v1728
    %v2177 = vpack.c.b16 %v1737, %v1729
    %v2178 = vpack.c.b16 %v1746, %v1738
    %v2179 = vpack.c.b16 %v1747, %v1739
    %v2180 = vpack.c.b16 %v1748, %v1740
    %v2181 = vpack.c.b16 %v1749, %v1741
    %v2182 = vpack.c.b16 %v1750, %v1742
    %v2183 = vpack.c.b16 %v1751, %v1743
    %v2184 = vpack.c.b16 %v1752, %v1744
    %v2185 = vpack.c.b16 %v1753, %v1745
    %v2186 = vpack.c.b16 %v1762, %v1754
    %v2187 = vpack.c.b16 %v1763, %v1755
    %v2188 = vpack.c.b16 %v1764, %v1756
    %v2189 = vpack.c.b16 %v1765, %v1757
    %v2190 = vpack.c.b16 %v1766, %v1758
    %v2191 = vpack.c.b16 %v1767, %v1759
    %v2192 = vpack.c.b16 %v1768, %v1760
    %v2193 = vpack.c.b16 %v1769, %v1761
    %v2194 = vpack.c.b16 %v1778, %v1770
    %v2195 = vpack.c.b16 %v1779, %v1771
    %v2196 = vpack.c.b16 %v1780, %v1772
    %v2197 = vpack.c.b16 %v1781, %v1773
    %v2198 = vpack.c.b16 %v1782, %v1774
    %v2199 = vpack.c.b16 %v1783, %v1775
    %v2200 = vpack.c.b16 %v1784, %v1776
    %v2201 = vpack.c.b16 %v1785, %v1777
    %v2202 = vpack.c.b16 %v1794, %v1786
    %v2203 = vpack.c.b16 %v1795, %v1787
    %v2204 = vpack.c.b16 %v1796, %v1788
    %v2205 = vpack.c.b16 %v1797, %v1789
    %v2206 = vpack.c.b16 %v1798, %v1790
    %v2207 = vpack.c.b16 %v1799, %v1791
    %v2208 = vpack.c.b16 %v1800, %v1792
    %v2209 = vpack.c.b16 %v1801, %v1793
    %v2210 = vpack.c.b16 %v1810, %v1802
    %v2211 = vpack.c.b16 %v1811, %v1803
    %v2212 = vpack.c.b16 %v1812, %v1804
    %v2213 = vpack.c.b16 %v1813, %v1805
    %v2214 = vpack.c.b16 %v1814, %v1806
    %v2215 = vpack.c.b16 %v1815, %v1807
    %v2216 = vpack.c.b16 %v1816, %v1808
    %v2217 = vpack.c.b16 %v1817, %v1809
    %v2218 = vpack.c.b16 %v1826, %v1818
    %v2219 = vpack.c.b16 %v1827, %v1819
    %v2220 = vpack.c.b16 %v1828, %v1820
    %v2221 = vpack.c.b16 %v1829, %v1821
    %v2222 = vpack.c.b16 %v1830, %v1822
    %v2223 = vpack.c.b16 %v1831, %v1823
    %v2224 = vpack.c.b16 %v1832, %v1824
    %v2225 = vpack.c.b16 %v1833, %v1825
    %v2226 = vpack.c.b16 %v1842, %v1834
    %v2227 = vpack.c.b16 %v1843, %v1835
    %v2228 = vpack.c.b16 %v1844, %v1836
    %v2229 = vpack.c.b16 %v1845, %v1837
    %v2230 = vpack.c.b16 %v1846, %v1838
    %v2231 = vpack.c.b16 %v1847, %v1839
    %v2232 = vpack.c.b16 %v1848, %v1840
    %v2233 = vpack.c.b16 %v1849, %v1841
    %v2234 = vpack.c.b16 %v1858, %v1850
    %v2235 = vpack.c.b16 %v1859, %v1851
    %v2236 = vpack.c.b16 %v1860, %v1852
    %v2237 = vpack.c.b16 %v1861, %v1853
    %v2238 = vpack.c.b16 %v1862, %v1854
    %v2239 = vpack.c.b16 %v1863, %v1855
    %v2240 = vpack.c.b16 %v1864, %v1856
    %v2241 = vpack.c.b16 %v1865, %v1857
    %v2242 = vpack.c.b16 %v1874, %v1866
    %v2243 = vpack.c.b16 %v1875, %v1867
    %v2244 = vpack.c.b16 %v1876, %v1868
    %v2245 = vpack.c.b16 %v1877, %v1869
    %v2246 = vpack.c.b16 %v1878, %v1870
    %v2247 = vpack.c.b16 %v1879, %v1871
    %v2248 = vpack.c.b16 %v1880, %v1872
    %v2249 = vpack.c.b16 %v1881, %v1873
    %v2250 = vpack.c.b16 %v1890, %v1882
    %v2251 = vpack.c.b16 %v1891, %v1883
    %v2252 = vpack.c.b16 %v1892, %v1884
    %v2253 = vpack.c.b16 %v1893, %v1885
    %v2254 = vpack.c.b16 %v1894, %v1886
    %v2255 = vpack.c.b16 %v1895, %v1887
    %v2256 = vpack.c.b16 %v1896, %v1888
    %v2257 = vpack.c.b16 %v1897, %v1889
    %v2258 = vpack.c.b16 %v1906, %v1898
    %v2259 = vpack.c.b16 %v1907, %v1899
    %v2260 = vpack.c.b16 %v1908, %v1900
    %v2261 = vpack.c.b16 %v1909, %v1901
    %v2262 = vpack.c.b16 %v1910, %v1902
    %v2263 = vpack.c.b16 %v1911, %v1903
    %v2264 = vpack.c.b16 %v1912, %v1904
    %v2265 = vpack.c.b16 %v1913, %v1905
    %v2266 = vpack.c.b16 %v1922, %v1914
    %v2267 = vpack.c.b16 %v1923, %v1915
    %v2268 = vpack.c.b16 %v1924, %v1916
    %v2269 = vpack.c.b16 %v1925, %v1917
    %v2270 = vpack.c.b16 %v1926, %v1918
    %v2271 = vpack.c.b16 %v1927, %v1919
    %v2272 = vpack.c.b16 %v1928, %v1920
    %v2273 = vpack.c.b16 %v1929, %v1921
    %v2274 = vpack.c.b16 %v1938, %v1930
    %v2275 = vpack.c.b16 %v1939, %v1931
    %v2276 = vpack.c.b16 %v1940, %v1932
    %v2277 = vpack.c.b16 %v1941, %v1933
    %v2278 = vpack.c.b16 %v1942, %v1934
    %v2279 = vpack.c.b16 %v1943, %v1935
    %v2280 = vpack.c.b16 %v1944, %v1936
    %v2281 = vpack.c.b16 %v1945, %v1937
    %v2282 = vpack.c.b16 %v1954, %v1946
    %v2283 = vpack.c.b16 %v1955, %v1947
    %v2284 = vpack.c.b16 %v1956, %v1948
    %v2285 = vpack.c.b16 %v1957, %v1949
    %v2286 = vpack.c.b16 %v1958, %v1950
    %v2287 = vpack.c.b16 %v1959, %v1951
    %v2288 = vpack.c.b16 %v1960, %v1952
    %v2289 = vpack.c.b16 %v1961, %v1953
    %v2290 = vpack.c.b16 %v1970, %v1962
    %v2291 = vpack.c.b16 %v1971, %v1963
    %v2292 = vpack.c.b16 %v1972, %v1964
    %v2293 = vpack.c.b16 %v1973, %v1965
    %v2294 = vpack.c.b16 %v1974, %v1966
    %v2295 = vpack.c.b16 %v1975, %v1967
    %v2296 = vpack.c.b16 %v1976, %v1968
    %v2297 = vpack.c.b16 %v1977, %v1969
    %v2298 = vpack.c.b16 %v1986, %v1978
    %v2299 = vpack.c.b16 %v1987, %v1979
    %v2300 = vpack.c.b16 %v1988, %v1980
    %v2301 = vpack.c.b16 %v1989, %v1981
    %v2302 = vpack.c.b16 %v1990, %v1982
    %v2303 = vpack.c.b16 %v1991, %v1983
    %v2304 = vpack.c.b16 %v1992, %v1984
    %v2305 = vpack.c.b16 %v1993, %v1985
    %v2306 = vpack.c.b16 %v2002, %v1994
    %v2307 = vpack.c.b16 %v2003, %v1995
    %v2308 = vpack.c.b16 %v2004, %v1996
    %v2309 = vpack.c.b16 %v2005, %v1997
    %v2310 = vpack.c.b16 %v2006, %v1998
    %v2311 = vpack.c.b16 %v2007, %v1999
    %v2312 = vpack.c.b16 %v2008, %v2000
    %v2313 = vpack.c.b16 %v2009, %v2001
    %v2314 = vpack.c.b16 %v2018, %v2010
    %v2315 = vpack.c.b16 %v2019, %v2011
    %v2316 = vpack.c.b16 %v2020, %v2012
    %v2317 = vpack.c.b16 %v2021, %v2013
    %v2318 = vpack.c.b16 %v2022, %v2014
    %v2319 = vpack.c.b16 %v2023, %v2015
    %v2320 = vpack.c.b16 %v2024, %v2016
    %v2321 = vpack.c.b16 %v2025, %v2017
    %v2322 = vpack.c.b16 %v2034, %v2026
    %v2323 = vpack.c.b16 %v2035, %v2027
    %v2324 = vpack.c.b16 %v2036, %v2028
    %v2325 = vpack.c.b16 %v2037, %v2029
    %v2326 = vpack.c.b16 %v2038, %v2030
    %v2327 = vpack.c.b16 %v2039, %v2031
    %v2328 = vpack.c.b16 %v2040, %v2032
    %v2329 = vpack.c.b16 %v2041, %v2033
    %v2330 = vpack.c.b16 %v2050, %v2042
    %v2331 = vpack.c.b16 %v2051, %v2043
    %v2332 = vpack.c.b16 %v2052, %v2044
    %v2333 = vpack.c.b16 %v2053, %v2045
    %v2334 = vpack.c.b16 %v2054, %v2046
    %v2335 = vpack.c.b16 %v2055, %v2047
    %v2336 = vpack.c.b16 %v2056, %v2048
    %v2337 = vpack.c.b16 %v2057, %v2049
    %v2338 = vpack.c.b16 %v2066, %v2058
    %v2339 = vpack.c.b16 %v2067, %v2059
    %v2340 = vpack.c.b16 %v2068, %v2060
    %v2341 = vpack.c.b16 %v2069, %v2061
    %v2342 = vpack.c.b16 %v2070, %v2062
    %v2343 = vpack.c.b16 %v2071, %v2063
    %v2344 = vpack.c.b16 %v2072, %v2064
    %v2345 = vpack.c.b16 %v2073, %v2065
    %v2346 = vpack.c.b16 %v2082, %v2074
    %v2347 = vpack.c.b16 %v2083, %v2075
    %v2348 = vpack.c.b16 %v2084, %v2076
    %v2349 = vpack.c.b16 %v2085, %v2077
    %v2350 = vpack.c.b16 %v2086, %v2078
    %v2351 = vpack.c.b16 %v2087, %v2079
    %v2352 = vpack.c.b16 %v2088, %v2080
    %v2353 = vpack.c.b16 %v2089, %v2081
    %v2354 = vpack.c.b16 %v2098, %v2090
    %v2355 = vpack.c.b16 %v2099, %v2091
    %v2356 = vpack.c.b16 %v2100, %v2092
    %v2357 = vpack.c.b16 %v2101, %v2093
    %v2358 = vpack.c.b16 %v2102, %v2094
    %v2359 = vpack.c.b16 %v2103, %v2095
    %v2360 = vpack.c.b16 %v2104, %v2096
    %v2361 = vpack.c.b16 %v2105, %v2097
    %2618 = vmatpush.bf16.msra.mxu0 %v2162
    %2619 = vmatpush.bf16.msra.mxu0 %v2154
    %2620 = vmatpush.bf16.msra.mxu0 %v2146
    %2621 = vmatpush.bf16.msra.mxu0 %v2138
    %2622 = vmatpush.bf16.msra.mxu0 %v2130
    %2623 = vmatpush.bf16.msra.mxu0 %v2122
    %2624 = vmatpush.bf16.msra.mxu0 %v2114
    %2625 = vmatpush.bf16.msra.mxu0 %v2106
    %2626 = vmatmul.bf16.gmra.mxu0 %v1078
    %v2627 = vpop.f32.mrf.mxu0
    %v2628 = vadd.f32 0.0, %v2627
    %v2629 = vpop.f32.mrf.mxu0
    %2630 = vdwg.mxu0
    %2631 = vmatpush.bf16.msra.mxu0 %v2226
    %2632 = vmatpush.bf16.msra.mxu0 %v2218
    %2633 = vmatpush.bf16.msra.mxu0 %v2210
    %2634 = vmatpush.bf16.msra.mxu0 %v2202
    %2635 = vmatpush.bf16.msra.mxu0 %v2194
    %2636 = vmatpush.bf16.msra.mxu0 %v2186
    %2637 = vmatpush.bf16.msra.mxu0 %v2178
    %2638 = vmatpush.bf16.msra.mxu0 %v2170
    %2639 = vmatmul.bf16.gmra.mxu0 %v1079
    %v2640 = vpop.f32.mrf.mxu0
    %v2641 = vadd.f32 %v2628, %v2640
    %v2642 = vpop.f32.mrf.mxu0
    %2643 = vdwg.mxu0
    %2644 = vmatpush.bf16.msra.mxu0 %v2290
    %2645 = vmatpush.bf16.msra.mxu0 %v2282
    %2646 = vmatpush.bf16.msra.mxu0 %v2274
    %2647 = vmatpush.bf16.msra.mxu0 %v2266
    %2648 = vmatpush.bf16.msra.mxu0 %v2258
    %2649 = vmatpush.bf16.msra.mxu0 %v2250
    %2650 = vmatpush.bf16.msra.mxu0 %v2242
    %2651 = vmatpush.bf16.msra.mxu0 %v2234
    %2652 = vmatmul.bf16.gmra.mxu0 %v1080
    %v2653 = vpop.f32.mrf.mxu0
    %v2654 = vadd.f32 %v2641, %v2653
    %v2655 = vpop.f32.mrf.mxu0
    %2656 = vdwg.mxu0
    %2657 = vmatpush.bf16.msra.mxu0 %v2354
    %2658 = vmatpush.bf16.msra.mxu0 %v2346
    %2659 = vmatpush.bf16.msra.mxu0 %v2338
    %2660 = vmatpush.bf16.msra.mxu0 %v2330
    %2661 = vmatpush.bf16.msra.mxu0 %v2322
    %2662 = vmatpush.bf16.msra.mxu0 %v2314
    %2663 = vmatpush.bf16.msra.mxu0 %v2306
    %2664 = vmatpush.bf16.msra.mxu0 %v2298
    %2665 = vmatmul.bf16.gmra.mxu0 %v1081
    %v2666 = vpop.f32.mrf.mxu0
    %v2667 = vadd.f32 %v2654, %v2666
    %v2668 = vpop.f32.mrf.mxu0
    %2669 = vdwg.mxu0
    %2670 = vmatpush.bf16.msra.mxu0 %v2163
    %2671 = vmatpush.bf16.msra.mxu0 %v2155
    %2672 = vmatpush.bf16.msra.mxu0 %v2147
    %2673 = vmatpush.bf16.msra.mxu0 %v2139
    %2674 = vmatpush.bf16.msra.mxu0 %v2131
    %2675 = vmatpush.bf16.msra.mxu0 %v2123
    %2676 = vmatpush.bf16.msra.mxu0 %v2115
    %2677 = vmatpush.bf16.msra.mxu0 %v2107
    %2678 = vmatmul.bf16.gmra.mxu0 %v1078
    %v2679 = vpop.f32.mrf.mxu0
    %v2680 = vadd.f32 0.0, %v2679
    %v2681 = vpop.f32.mrf.mxu0
    %2682 = vdwg.mxu0
    %2683 = vmatpush.bf16.msra.mxu0 %v2227
    %2684 = vmatpush.bf16.msra.mxu0 %v2219
    %2685 = vmatpush.bf16.msra.mxu0 %v2211
    %2686 = vmatpush.bf16.msra.mxu0 %v2203
    %2687 = vmatpush.bf16.msra.mxu0 %v2195
    %2688 = vmatpush.bf16.msra.mxu0 %v2187
    %2689 = vmatpush.bf16.msra.mxu0 %v2179
    %2690 = vmatpush.bf16.msra.mxu0 %v2171
    %2691 = vmatmul.bf16.gmra.mxu0 %v1079
    %v2692 = vpop.f32.mrf.mxu0
    %v2693 = vadd.f32 %v2680, %v2692
    %v2694 = vpop.f32.mrf.mxu0
    %2695 = vdwg.mxu0
    %2696 = vmatpush.bf16.msra.mxu0 %v2291
    %2697 = vmatpush.bf16.msra.mxu0 %v2283
    %2698 = vmatpush.bf16.msra.mxu0 %v2275
    %2699 = vmatpush.bf16.msra.mxu0 %v2267
    %2700 = vmatpush.bf16.msra.mxu0 %v2259
    %2701 = vmatpush.bf16.msra.mxu0 %v2251
    %2702 = vmatpush.bf16.msra.mxu0 %v2243
    %2703 = vmatpush.bf16.msra.mxu0 %v2235
    %2704 = vmatmul.bf16.gmra.mxu0 %v1080
    %v2705 = vpop.f32.mrf.mxu0
    %v2706 = vadd.f32 %v2693, %v2705
    %v2707 = vpop.f32.mrf.mxu0
    %2708 = vdwg.mxu0
    %2709 = vmatpush.bf16.msra.mxu0 %v2355
    %2710 = vmatpush.bf16.msra.mxu0 %v2347
    %2711 = vmatpush.bf16.msra.mxu0 %v2339
    %2712 = vmatpush.bf16.msra.mxu0 %v2331
    %2713 = vmatpush.bf16.msra.mxu0 %v2323
    %2714 = vmatpush.bf16.msra.mxu0 %v2315
    %2715 = vmatpush.bf16.msra.mxu0 %v2307
    %2716 = vmatpush.bf16.msra.mxu0 %v2299
    %2717 = vmatmul.bf16.gmra.mxu0 %v1081
    %v2718 = vpop.f32.mrf.mxu0
    %v2719 = vadd.f32 %v2706, %v2718
    %v2720 = vpop.f32.mrf.mxu0
    %2721 = vdwg.mxu0
    %2722 = vmatpush.bf16.msra.mxu0 %v2164
    %2723 = vmatpush.bf16.msra.mxu0 %v2156
    %2724 = vmatpush.bf16.msra.mxu0 %v2148
    %2725 = vmatpush.bf16.msra.mxu0 %v2140
    %2726 = vmatpush.bf16.msra.mxu0 %v2132
    %2727 = vmatpush.bf16.msra.mxu0 %v2124
    %2728 = vmatpush.bf16.msra.mxu0 %v2116
    %2729 = vmatpush.bf16.msra.mxu0 %v2108
    %2730 = vmatmul.bf16.gmra.mxu0 %v1078
    %v2731 = vpop.f32.mrf.mxu0
    %v2732 = vadd.f32 0.0, %v2731
    %v2733 = vpop.f32.mrf.mxu0
    %2734 = vdwg.mxu0
    %2735 = vmatpush.bf16.msra.mxu0 %v2228
    %2736 = vmatpush.bf16.msra.mxu0 %v2220
    %2737 = vmatpush.bf16.msra.mxu0 %v2212
    %2738 = vmatpush.bf16.msra.mxu0 %v2204
    %2739 = vmatpush.bf16.msra.mxu0 %v2196
    %2740 = vmatpush.bf16.msra.mxu0 %v2188
    %2741 = vmatpush.bf16.msra.mxu0 %v2180
    %2742 = vmatpush.bf16.msra.mxu0 %v2172
    %2743 = vmatmul.bf16.gmra.mxu0 %v1079
    %v2744 = vpop.f32.mrf.mxu0
    %v2745 = vadd.f32 %v2732, %v2744
    %v2746 = vpop.f32.mrf.mxu0
    %2747 = vdwg.mxu0
    %2748 = vmatpush.bf16.msra.mxu0 %v2292
    %2749 = vmatpush.bf16.msra.mxu0 %v2284
    %2750 = vmatpush.bf16.msra.mxu0 %v2276
    %2751 = vmatpush.bf16.msra.mxu0 %v2268
    %2752 = vmatpush.bf16.msra.mxu0 %v2260
    %2753 = vmatpush.bf16.msra.mxu0 %v2252
    %2754 = vmatpush.bf16.msra.mxu0 %v2244
    %2755 = vmatpush.bf16.msra.mxu0 %v2236
    %2756 = vmatmul.bf16.gmra.mxu0 %v1080
    %v2757 = vpop.f32.mrf.mxu0
    %v2758 = vadd.f32 %v2745, %v2757
    %v2759 = vpop.f32.mrf.mxu0
    %2760 = vdwg.mxu0
    %2761 = vmatpush.bf16.msra.mxu0 %v2356
    %2762 = vmatpush.bf16.msra.mxu0 %v2348
    %2763 = vmatpush.bf16.msra.mxu0 %v2340
    %2764 = vmatpush.bf16.msra.mxu0 %v2332
    %2765 = vmatpush.bf16.msra.mxu0 %v2324
    %2766 = vmatpush.bf16.msra.mxu0 %v2316
    %2767 = vmatpush.bf16.msra.mxu0 %v2308
    %2768 = vmatpush.bf16.msra.mxu0 %v2300
    %2769 = vmatmul.bf16.gmra.mxu0 %v1081
    %v2770 = vpop.f32.mrf.mxu0
    %v2771 = vadd.f32 %v2758, %v2770
    %v2772 = vpop.f32.mrf.mxu0
    %2773 = vdwg.mxu0
    %2774 = vmatpush.bf16.msra.mxu0 %v2165
    %2775 = vmatpush.bf16.msra.mxu0 %v2157
    %2776 = vmatpush.bf16.msra.mxu0 %v2149
    %2777 = vmatpush.bf16.msra.mxu0 %v2141
    %2778 = vmatpush.bf16.msra.mxu0 %v2133
    %2779 = vmatpush.bf16.msra.mxu0 %v2125
    %2780 = vmatpush.bf16.msra.mxu0 %v2117
    %2781 = vmatpush.bf16.msra.mxu0 %v2109
    %2782 = vmatmul.bf16.gmra.mxu0 %v1078
    %v2783 = vpop.f32.mrf.mxu0
    %v2784 = vadd.f32 0.0, %v2783
    %v2785 = vpop.f32.mrf.mxu0
    %2786 = vdwg.mxu0
    %2787 = vmatpush.bf16.msra.mxu0 %v2229
    %2788 = vmatpush.bf16.msra.mxu0 %v2221
    %2789 = vmatpush.bf16.msra.mxu0 %v2213
    %2790 = vmatpush.bf16.msra.mxu0 %v2205
    %2791 = vmatpush.bf16.msra.mxu0 %v2197
    %2792 = vmatpush.bf16.msra.mxu0 %v2189
    %2793 = vmatpush.bf16.msra.mxu0 %v2181
    %2794 = vmatpush.bf16.msra.mxu0 %v2173
    %2795 = vmatmul.bf16.gmra.mxu0 %v1079
    %v2796 = vpop.f32.mrf.mxu0
    %v2797 = vadd.f32 %v2784, %v2796
    %v2798 = vpop.f32.mrf.mxu0
    %2799 = vdwg.mxu0
    %2800 = vmatpush.bf16.msra.mxu0 %v2293
    %2801 = vmatpush.bf16.msra.mxu0 %v2285
    %2802 = vmatpush.bf16.msra.mxu0 %v2277
    %2803 = vmatpush.bf16.msra.mxu0 %v2269
    %2804 = vmatpush.bf16.msra.mxu0 %v2261
    %2805 = vmatpush.bf16.msra.mxu0 %v2253
    %2806 = vmatpush.bf16.msra.mxu0 %v2245
    %2807 = vmatpush.bf16.msra.mxu0 %v2237
    %2808 = vmatmul.bf16.gmra.mxu0 %v1080
    %v2809 = vpop.f32.mrf.mxu0
    %v2810 = vadd.f32 %v2797, %v2809
    %v2811 = vpop.f32.mrf.mxu0
    %2812 = vdwg.mxu0
    %2813 = vmatpush.bf16.msra.mxu0 %v2357
    %2814 = vmatpush.bf16.msra.mxu0 %v2349
    %2815 = vmatpush.bf16.msra.mxu0 %v2341
    %2816 = vmatpush.bf16.msra.mxu0 %v2333
    %2817 = vmatpush.bf16.msra.mxu0 %v2325
    %2818 = vmatpush.bf16.msra.mxu0 %v2317
    %2819 = vmatpush.bf16.msra.mxu0 %v2309
    %2820 = vmatpush.bf16.msra.mxu0 %v2301
    %2821 = vmatmul.bf16.gmra.mxu0 %v1081
    %v2822 = vpop.f32.mrf.mxu0
    %v2823 = vadd.f32 %v2810, %v2822
    %v2824 = vpop.f32.mrf.mxu0
    %2825 = vdwg.mxu0
    %2826 = vmatpush.bf16.msra.mxu0 %v2166
    %2827 = vmatpush.bf16.msra.mxu0 %v2158
    %2828 = vmatpush.bf16.msra.mxu0 %v2150
    %2829 = vmatpush.bf16.msra.mxu0 %v2142
    %2830 = vmatpush.bf16.msra.mxu0 %v2134
    %2831 = vmatpush.bf16.msra.mxu0 %v2126
    %2832 = vmatpush.bf16.msra.mxu0 %v2118
    %2833 = vmatpush.bf16.msra.mxu0 %v2110
    %2834 = vmatmul.bf16.gmra.mxu0 %v1078
    %v2835 = vpop.f32.mrf.mxu0
    %v2836 = vadd.f32 0.0, %v2835
    %v2837 = vpop.f32.mrf.mxu0
    %2838 = vdwg.mxu0
    %2839 = vmatpush.bf16.msra.mxu0 %v2230
    %2840 = vmatpush.bf16.msra.mxu0 %v2222
    %2841 = vmatpush.bf16.msra.mxu0 %v2214
    %2842 = vmatpush.bf16.msra.mxu0 %v2206
    %2843 = vmatpush.bf16.msra.mxu0 %v2198
    %2844 = vmatpush.bf16.msra.mxu0 %v2190
    %2845 = vmatpush.bf16.msra.mxu0 %v2182
    %2846 = vmatpush.bf16.msra.mxu0 %v2174
    %2847 = vmatmul.bf16.gmra.mxu0 %v1079
    %v2848 = vpop.f32.mrf.mxu0
    %v2849 = vadd.f32 %v2836, %v2848
    %v2850 = vpop.f32.mrf.mxu0
    %2851 = vdwg.mxu0
    %2852 = vmatpush.bf16.msra.mxu0 %v2294
    %2853 = vmatpush.bf16.msra.mxu0 %v2286
    %2854 = vmatpush.bf16.msra.mxu0 %v2278
    %2855 = vmatpush.bf16.msra.mxu0 %v2270
    %2856 = vmatpush.bf16.msra.mxu0 %v2262
    %2857 = vmatpush.bf16.msra.mxu0 %v2254
    %2858 = vmatpush.bf16.msra.mxu0 %v2246
    %2859 = vmatpush.bf16.msra.mxu0 %v2238
    %2860 = vmatmul.bf16.gmra.mxu0 %v1080
    %v2861 = vpop.f32.mrf.mxu0
    %v2862 = vadd.f32 %v2849, %v2861
    %v2863 = vpop.f32.mrf.mxu0
    %2864 = vdwg.mxu0
    %2865 = vmatpush.bf16.msra.mxu0 %v2358
    %2866 = vmatpush.bf16.msra.mxu0 %v2350
    %2867 = vmatpush.bf16.msra.mxu0 %v2342
    %2868 = vmatpush.bf16.msra.mxu0 %v2334
    %2869 = vmatpush.bf16.msra.mxu0 %v2326
    %2870 = vmatpush.bf16.msra.mxu0 %v2318
    %2871 = vmatpush.bf16.msra.mxu0 %v2310
    %2872 = vmatpush.bf16.msra.mxu0 %v2302
    %2873 = vmatmul.bf16.gmra.mxu0 %v1081
    %v2874 = vpop.f32.mrf.mxu0
    %v2875 = vadd.f32 %v2862, %v2874
    %v2876 = vpop.f32.mrf.mxu0
    %2877 = vdwg.mxu0
    %2878 = vmatpush.bf16.msra.mxu0 %v2167
    %2879 = vmatpush.bf16.msra.mxu0 %v2159
    %2880 = vmatpush.bf16.msra.mxu0 %v2151
    %2881 = vmatpush.bf16.msra.mxu0 %v2143
    %2882 = vmatpush.bf16.msra.mxu0 %v2135
    %2883 = vmatpush.bf16.msra.mxu0 %v2127
    %2884 = vmatpush.bf16.msra.mxu0 %v2119
    %2885 = vmatpush.bf16.msra.mxu0 %v2111
    %2886 = vmatmul.bf16.gmra.mxu0 %v1078
    %v2887 = vpop.f32.mrf.mxu0
    %v2888 = vadd.f32 0.0, %v2887
    %v2889 = vpop.f32.mrf.mxu0
    %2890 = vdwg.mxu0
    %2891 = vmatpush.bf16.msra.mxu0 %v2231
    %2892 = vmatpush.bf16.msra.mxu0 %v2223
    %2893 = vmatpush.bf16.msra.mxu0 %v2215
    %2894 = vmatpush.bf16.msra.mxu0 %v2207
    %2895 = vmatpush.bf16.msra.mxu0 %v2199
    %2896 = vmatpush.bf16.msra.mxu0 %v2191
    %2897 = vmatpush.bf16.msra.mxu0 %v2183
    %2898 = vmatpush.bf16.msra.mxu0 %v2175
    %2899 = vmatmul.bf16.gmra.mxu0 %v1079
    %v2900 = vpop.f32.mrf.mxu0
    %v2901 = vadd.f32 %v2888, %v2900
    %v2902 = vpop.f32.mrf.mxu0
    %2903 = vdwg.mxu0
    %2904 = vmatpush.bf16.msra.mxu0 %v2295
    %2905 = vmatpush.bf16.msra.mxu0 %v2287
    %2906 = vmatpush.bf16.msra.mxu0 %v2279
    %2907 = vmatpush.bf16.msra.mxu0 %v2271
    %2908 = vmatpush.bf16.msra.mxu0 %v2263
    %2909 = vmatpush.bf16.msra.mxu0 %v2255
    %2910 = vmatpush.bf16.msra.mxu0 %v2247
    %2911 = vmatpush.bf16.msra.mxu0 %v2239
    %2912 = vmatmul.bf16.gmra.mxu0 %v1080
    %v2913 = vpop.f32.mrf.mxu0
    %v2914 = vadd.f32 %v2901, %v2913
    %v2915 = vpop.f32.mrf.mxu0
    %2916 = vdwg.mxu0
    %2917 = vmatpush.bf16.msra.mxu0 %v2359
    %2918 = vmatpush.bf16.msra.mxu0 %v2351
    %2919 = vmatpush.bf16.msra.mxu0 %v2343
    %2920 = vmatpush.bf16.msra.mxu0 %v2335
    %2921 = vmatpush.bf16.msra.mxu0 %v2327
    %2922 = vmatpush.bf16.msra.mxu0 %v2319
    %2923 = vmatpush.bf16.msra.mxu0 %v2311
    %2924 = vmatpush.bf16.msra.mxu0 %v2303
    %2925 = vmatmul.bf16.gmra.mxu0 %v1081
    %v2926 = vpop.f32.mrf.mxu0
    %v2927 = vadd.f32 %v2914, %v2926
    %v2928 = vpop.f32.mrf.mxu0
    %2929 = vdwg.mxu0
    %2930 = vmatpush.bf16.msra.mxu0 %v2168
    %2931 = vmatpush.bf16.msra.mxu0 %v2160
    %2932 = vmatpush.bf16.msra.mxu0 %v2152
    %2933 = vmatpush.bf16.msra.mxu0 %v2144
    %2934 = vmatpush.bf16.msra.mxu0 %v2136
    %2935 = vmatpush.bf16.msra.mxu0 %v2128
    %2936 = vmatpush.bf16.msra.mxu0 %v2120
    %2937 = vmatpush.bf16.msra.mxu0 %v2112
    %2938 = vmatmul.bf16.gmra.mxu0 %v1078
    %v2939 = vpop.f32.mrf.mxu0
    %v2940 = vadd.f32 0.0, %v2939
    %v2941 = vpop.f32.mrf.mxu0
    %2942 = vdwg.mxu0
    %2943 = vmatpush.bf16.msra.mxu0 %v2232
    %2944 = vmatpush.bf16.msra.mxu0 %v2224
    %2945 = vmatpush.bf16.msra.mxu0 %v2216
    %2946 = vmatpush.bf16.msra.mxu0 %v2208
    %2947 = vmatpush.bf16.msra.mxu0 %v2200
    %2948 = vmatpush.bf16.msra.mxu0 %v2192
    %2949 = vmatpush.bf16.msra.mxu0 %v2184
    %2950 = vmatpush.bf16.msra.mxu0 %v2176
    %2951 = vmatmul.bf16.gmra.mxu0 %v1079
    %v2952 = vpop.f32.mrf.mxu0
    %v2953 = vadd.f32 %v2940, %v2952
    %v2954 = vpop.f32.mrf.mxu0
    %2955 = vdwg.mxu0
    %2956 = vmatpush.bf16.msra.mxu0 %v2296
    %2957 = vmatpush.bf16.msra.mxu0 %v2288
    %2958 = vmatpush.bf16.msra.mxu0 %v2280
    %2959 = vmatpush.bf16.msra.mxu0 %v2272
    %2960 = vmatpush.bf16.msra.mxu0 %v2264
    %2961 = vmatpush.bf16.msra.mxu0 %v2256
    %2962 = vmatpush.bf16.msra.mxu0 %v2248
    %2963 = vmatpush.bf16.msra.mxu0 %v2240
    %2964 = vmatmul.bf16.gmra.mxu0 %v1080
    %v2965 = vpop.f32.mrf.mxu0
    %v2966 = vadd.f32 %v2953, %v2965
    %v2967 = vpop.f32.mrf.mxu0
    %2968 = vdwg.mxu0
    %2969 = vmatpush.bf16.msra.mxu0 %v2360
    %2970 = vmatpush.bf16.msra.mxu0 %v2352
    %2971 = vmatpush.bf16.msra.mxu0 %v2344
    %2972 = vmatpush.bf16.msra.mxu0 %v2336
    %2973 = vmatpush.bf16.msra.mxu0 %v2328
    %2974 = vmatpush.bf16.msra.mxu0 %v2320
    %2975 = vmatpush.bf16.msra.mxu0 %v2312
    %2976 = vmatpush.bf16.msra.mxu0 %v2304
    %2977 = vmatmul.bf16.gmra.mxu0 %v1081
    %v2978 = vpop.f32.mrf.mxu0
    %v2979 = vadd.f32 %v2966, %v2978
    %v2980 = vpop.f32.mrf.mxu0
    %2981 = vdwg.mxu0
    %2982 = vmatpush.bf16.msra.mxu0 %v2169
    %2983 = vmatpush.bf16.msra.mxu0 %v2161
    %2984 = vmatpush.bf16.msra.mxu0 %v2153
    %2985 = vmatpush.bf16.msra.mxu0 %v2145
    %2986 = vmatpush.bf16.msra.mxu0 %v2137
    %2987 = vmatpush.bf16.msra.mxu0 %v2129
    %2988 = vmatpush.bf16.msra.mxu0 %v2121
    %2989 = vmatpush.bf16.msra.mxu0 %v2113
    %2990 = vmatmul.bf16.gmra.mxu0 %v1078
    %v2991 = vpop.f32.mrf.mxu0
    %v2992 = vadd.f32 0.0, %v2991
    %v2993 = vpop.f32.mrf.mxu0
    %2994 = vdwg.mxu0
    %2995 = vmatpush.bf16.msra.mxu0 %v2233
    %2996 = vmatpush.bf16.msra.mxu0 %v2225
    %2997 = vmatpush.bf16.msra.mxu0 %v2217
    %2998 = vmatpush.bf16.msra.mxu0 %v2209
    %2999 = vmatpush.bf16.msra.mxu0 %v2201
    %3000 = vmatpush.bf16.msra.mxu0 %v2193
    %3001 = vmatpush.bf16.msra.mxu0 %v2185
    %3002 = vmatpush.bf16.msra.mxu0 %v2177
    %3003 = vmatmul.bf16.gmra.mxu0 %v1079
    %v3004 = vpop.f32.mrf.mxu0
    %v3005 = vadd.f32 %v2992, %v3004
    %v3006 = vpop.f32.mrf.mxu0
    %3007 = vdwg.mxu0
    %3008 = vmatpush.bf16.msra.mxu0 %v2297
    %3009 = vmatpush.bf16.msra.mxu0 %v2289
    %3010 = vmatpush.bf16.msra.mxu0 %v2281
    %3011 = vmatpush.bf16.msra.mxu0 %v2273
    %3012 = vmatpush.bf16.msra.mxu0 %v2265
    %3013 = vmatpush.bf16.msra.mxu0 %v2257
    %3014 = vmatpush.bf16.msra.mxu0 %v2249
    %3015 = vmatpush.bf16.msra.mxu0 %v2241
    %3016 = vmatmul.bf16.gmra.mxu0 %v1080
    %v3017 = vpop.f32.mrf.mxu0
    %v3018 = vadd.f32 %v3005, %v3017
    %v3019 = vpop.f32.mrf.mxu0
    %3020 = vdwg.mxu0
    %3021 = vmatpush.bf16.msra.mxu0 %v2361
    %3022 = vmatpush.bf16.msra.mxu0 %v2353
    %3023 = vmatpush.bf16.msra.mxu0 %v2345
    %3024 = vmatpush.bf16.msra.mxu0 %v2337
    %3025 = vmatpush.bf16.msra.mxu0 %v2329
    %3026 = vmatpush.bf16.msra.mxu0 %v2321
    %3027 = vmatpush.bf16.msra.mxu0 %v2313
    %3028 = vmatpush.bf16.msra.mxu0 %v2305
    %3029 = vmatmul.bf16.gmra.mxu0 %v1081
    %v3030 = vpop.f32.mrf.mxu0
    %v3031 = vadd.f32 %v3018, %v3030
    %v3032 = vpop.f32.mrf.mxu0
    %3033 = vdwg.mxu0
    %v3034 = vld [vmem:[%s10] sm:$0xff]
    %v3035 = vld [vmem:[%s11] sm:$0xff]
    %v3036 = vrot.slane %v2667, 4
    %v3037 = vadd.f32 %v2667, %v3036
    %v3038 = vrot.slane %v3037, 2
    %v3039 = vadd.f32 %v3037, %v3038
    %v3040 = vrot.slane %v3039, 1
    %v3041 = vadd.f32 %v3039, %v3040
    %v3042 = vrot.slane %v2719, 4
    %v3043 = vadd.f32 %v2719, %v3042
    %v3044 = vrot.slane %v3043, 2
    %v3045 = vadd.f32 %v3043, %v3044
    %v3046 = vrot.slane %v3045, 1
    %v3047 = vadd.f32 %v3045, %v3046
    %v3048 = vrot.slane %v2771, 4
    %v3049 = vadd.f32 %v2771, %v3048
    %v3050 = vrot.slane %v3049, 2
    %v3051 = vadd.f32 %v3049, %v3050
    %v3052 = vrot.slane %v3051, 1
    %v3053 = vadd.f32 %v3051, %v3052
    %v3054 = vrot.slane %v2823, 4
    %v3055 = vadd.f32 %v2823, %v3054
    %v3056 = vrot.slane %v3055, 2
    %v3057 = vadd.f32 %v3055, %v3056
    %v3058 = vrot.slane %v3057, 1
    %v3059 = vadd.f32 %v3057, %v3058
    %v3060 = vrot.slane %v2875, 4
    %v3061 = vadd.f32 %v2875, %v3060
    %v3062 = vrot.slane %v3061, 2
    %v3063 = vadd.f32 %v3061, %v3062
    %v3064 = vrot.slane %v3063, 1
    %v3065 = vadd.f32 %v3063, %v3064
    %v3066 = vrot.slane %v2927, 4
    %v3067 = vadd.f32 %v2927, %v3066
    %v3068 = vrot.slane %v3067, 2
    %v3069 = vadd.f32 %v3067, %v3068
    %v3070 = vrot.slane %v3069, 1
    %v3071 = vadd.f32 %v3069, %v3070
    %v3072 = vrot.slane %v2979, 4
    %v3073 = vadd.f32 %v2979, %v3072
    %v3074 = vrot.slane %v3073, 2
    %v3075 = vadd.f32 %v3073, %v3074
    %v3076 = vrot.slane %v3075, 1
    %v3077 = vadd.f32 %v3075, %v3076
    %v3078 = vrot.slane %v3031, 4
    %v3079 = vadd.f32 %v3031, %v3078
    %v3080 = vrot.slane %v3079, 2
    %v3081 = vadd.f32 %v3079, %v3080
    %v3082 = vrot.slane %v3081, 1
    %v3083 = vadd.f32 %v3081, %v3082
    %v3084 = vmul.f32 %v3041, 0.125
    %v3085 = vmul.f32 %v3047, 0.125
    %v3086 = vmul.f32 %v3053, 0.125
    %v3087 = vmul.f32 %v3059, 0.125
    %v3088 = vmul.f32 %v3065, 0.125
    %v3089 = vmul.f32 %v3071, 0.125
    %v3090 = vmul.f32 %v3077, 0.125
    %v3091 = vmul.f32 %v3083, 0.125
    %v3092 = vsub.f32 %v2667, %v3084
    %v3093 = vsub.f32 %v2719, %v3085
    %v3094 = vsub.f32 %v2771, %v3086
    %v3095 = vsub.f32 %v2823, %v3087
    %v3096 = vsub.f32 %v2875, %v3088
    %v3097 = vsub.f32 %v2927, %v3089
    %v3098 = vsub.f32 %v2979, %v3090
    %v3099 = vsub.f32 %v3031, %v3091
    %v3100 = vmul.f32 %v3092, %v3092
    %v3101 = vmul.f32 %v3093, %v3093
    %v3102 = vmul.f32 %v3094, %v3094
    %v3103 = vmul.f32 %v3095, %v3095
    %v3104 = vmul.f32 %v3096, %v3096
    %v3105 = vmul.f32 %v3097, %v3097
    %v3106 = vmul.f32 %v3098, %v3098
    %v3107 = vmul.f32 %v3099, %v3099
    %v3108 = vrot.slane %v3100, 4
    %v3109 = vadd.f32 %v3100, %v3108
    %v3110 = vrot.slane %v3109, 2
    %v3111 = vadd.f32 %v3109, %v3110
    %v3112 = vrot.slane %v3111, 1
    %v3113 = vadd.f32 %v3111, %v3112
    %v3114 = vrot.slane %v3101, 4
    %v3115 = vadd.f32 %v3101, %v3114
    %v3116 = vrot.slane %v3115, 2
    %v3117 = vadd.f32 %v3115, %v3116
    %v3118 = vrot.slane %v3117, 1
    %v3119 = vadd.f32 %v3117, %v3118
    %v3120 = vrot.slane %v3102, 4
    %v3121 = vadd.f32 %v3102, %v3120
    %v3122 = vrot.slane %v3121, 2
    %v3123 = vadd.f32 %v3121, %v3122
    %v3124 = vrot.slane %v3123, 1
    %v3125 = vadd.f32 %v3123, %v3124
    %v3126 = vrot.slane %v3103, 4
    %v3127 = vadd.f32 %v3103, %v3126
    %v3128 = vrot.slane %v3127, 2
    %v3129 = vadd.f32 %v3127, %v3128
    %v3130 = vrot.slane %v3129, 1
    %v3131 = vadd.f32 %v3129, %v3130
    %v3132 = vrot.slane %v3104, 4
    %v3133 = vadd.f32 %v3104, %v3132
    %v3134 = vrot.slane %v3133, 2
    %v3135 = vadd.f32 %v3133, %v3134
    %v3136 = vrot.slane %v3135, 1
    %v3137 = vadd.f32 %v3135, %v3136
    %v3138 = vrot.slane %v3105, 4
    %v3139 = vadd.f32 %v3105, %v3138
    %v3140 = vrot.slane %v3139, 2
    %v3141 = vadd.f32 %v3139, %v3140
    %v3142 = vrot.slane %v3141, 1
    %v3143 = vadd.f32 %v3141, %v3142
    %v3144 = vrot.slane %v3106, 4
    %v3145 = vadd.f32 %v3106, %v3144
    %v3146 = vrot.slane %v3145, 2
    %v3147 = vadd.f32 %v3145, %v3146
    %v3148 = vrot.slane %v3147, 1
    %v3149 = vadd.f32 %v3147, %v3148
    %v3150 = vrot.slane %v3107, 4
    %v3151 = vadd.f32 %v3107, %v3150
    %v3152 = vrot.slane %v3151, 2
    %v3153 = vadd.f32 %v3151, %v3152
    %v3154 = vrot.slane %v3153, 1
    %v3155 = vadd.f32 %v3153, %v3154
    %v3156 = vmul.f32 %v3113, 0.125
    %v3157 = vmul.f32 %v3119, 0.125
    %v3158 = vmul.f32 %v3125, 0.125
    %v3159 = vmul.f32 %v3131, 0.125
    %v3160 = vmul.f32 %v3137, 0.125
    %v3161 = vmul.f32 %v3143, 0.125
    %v3162 = vmul.f32 %v3149, 0.125
    %v3163 = vmul.f32 %v3155, 0.125
    %v3164 = vadd.f32 %v3156, 0.8
    %v3165 = vadd.f32 %v3157, 0.8
    %v3166 = vadd.f32 %v3158, 0.8
    %v3167 = vadd.f32 %v3159, 0.8
    %v3168 = vadd.f32 %v3160, 0.8
    %v3169 = vadd.f32 %v3161, 0.8
    %v3170 = vadd.f32 %v3162, 0.8
    %v3171 = vadd.f32 %v3163, 0.8
    %v3172 = vrsqrt.pop %v3164
    %v3173 = vmul.f32 %v3172, %v3164
    %v3174 = vmul.f32 %v3173, %v3172
    %v3175 = vmul.f32 0.5, %v3174
    %v3176 = vsub.f32 1.5, %v3175
    %v3177 = vmul.f32 %v3172, %v3176
    %vm3178 = vweird.f32 %v3164
    %vm3179 = vweird.f32 %v3172
    %vm3180 = vmor %vm3178, %vm3179
    %v3181 = vsel %vm3180, %v3172, %v3177
    %v3182 = vrsqrt.pop %v3165
    %v3183 = vmul.f32 %v3182, %v3165
    %v3184 = vmul.f32 %v3183, %v3182
    %v3185 = vmul.f32 0.5, %v3184
    %v3186 = vsub.f32 1.5, %v3185
    %v3187 = vmul.f32 %v3182, %v3186
    %vm3188 = vweird.f32 %v3165
    %vm3189 = vweird.f32 %v3182
    %vm3190 = vmor %vm3188, %vm3189
    %v3191 = vsel %vm3190, %v3182, %v3187
    %v3192 = vrsqrt.pop %v3166
    %v3193 = vmul.f32 %v3192, %v3166
    %v3194 = vmul.f32 %v3193, %v3192
    %v3195 = vmul.f32 0.5, %v3194
    %v3196 = vsub.f32 1.5, %v3195
    %v3197 = vmul.f32 %v3192, %v3196
    %vm3198 = vweird.f32 %v3166
    %vm3199 = vweird.f32 %v3192
    %vm3200 = vmor %vm3198, %vm3199
    %v3201 = vsel %vm3200, %v3192, %v3197
    %v3202 = vrsqrt.pop %v3167
    %v3203 = vmul.f32 %v3202, %v3167
    %v3204 = vmul.f32 %v3203, %v3202
    %v3205 = vmul.f32 0.5, %v3204
    %v3206 = vsub.f32 1.5, %v3205
    %v3207 = vmul.f32 %v3202, %v3206
    %vm3208 = vweird.f32 %v3167
    %vm3209 = vweird.f32 %v3202
    %vm3210 = vmor %vm3208, %vm3209
    %v3211 = vsel %vm3210, %v3202, %v3207
    %v3212 = vrsqrt.pop %v3168
    %v3213 = vmul.f32 %v3212, %v3168
    %v3214 = vmul.f32 %v3213, %v3212
    %v3215 = vmul.f32 0.5, %v3214
    %v3216 = vsub.f32 1.5, %v3215
    %v3217 = vmul.f32 %v3212, %v3216
    %vm3218 = vweird.f32 %v3168
    %vm3219 = vweird.f32 %v3212
    %vm3220 = vmor %vm3218, %vm3219
    %v3221 = vsel %vm3220, %v3212, %v3217
    %v3222 = vrsqrt.pop %v3169
    %v3223 = vmul.f32 %v3222, %v3169
    %v3224 = vmul.f32 %v3223, %v3222
    %v3225 = vmul.f32 0.5, %v3224
    %v3226 = vsub.f32 1.5, %v3225
    %v3227 = vmul.f32 %v3222, %v3226
    %vm3228 = vweird.f32 %v3169
    %vm3229 = vweird.f32 %v3222
    %vm3230 = vmor %vm3228, %vm3229
    %v3231 = vsel %vm3230, %v3222, %v3227
    %v3232 = vrsqrt.pop %v3170
    %v3233 = vmul.f32 %v3232, %v3170
    %v3234 = vmul.f32 %v3233, %v3232
    %v3235 = vmul.f32 0.5, %v3234
    %v3236 = vsub.f32 1.5, %v3235
    %v3237 = vmul.f32 %v3232, %v3236
    %vm3238 = vweird.f32 %v3170
    %vm3239 = vweird.f32 %v3232
    %vm3240 = vmor %vm3238, %vm3239
    %v3241 = vsel %vm3240, %v3232, %v3237
    %v3242 = vrsqrt.pop %v3171
    %v3243 = vmul.f32 %v3242, %v3171
    %v3244 = vmul.f32 %v3243, %v3242
    %v3245 = vmul.f32 0.5, %v3244
    %v3246 = vsub.f32 1.5, %v3245
    %v3247 = vmul.f32 %v3242, %v3246
    %vm3248 = vweird.f32 %v3171
    %vm3249 = vweird.f32 %v3242
    %vm3250 = vmor %vm3248, %vm3249
    %v3251 = vsel %vm3250, %v3242, %v3247
    %v3252 = vmul.f32 %v3092, %v3181
    %v3253 = vmul.f32 %v3093, %v3191
    %v3254 = vmul.f32 %v3094, %v3201
    %v3255 = vmul.f32 %v3095, %v3211
    %v3256 = vmul.f32 %v3096, %v3221
    %v3257 = vmul.f32 %v3097, %v3231
    %v3258 = vmul.f32 %v3098, %v3241
    %v3259 = vmul.f32 %v3099, %v3251
    %v3261 = vperm.slane %v3034, 0
    %v3262 = vperm.slane %v3034, 1
    %v3263 = vperm.slane %v3034, 2
    %v3264 = vperm.slane %v3034, 3
    %v3265 = vperm.slane %v3034, 4
    %v3266 = vperm.slane %v3034, 5
    %v3267 = vperm.slane %v3034, 6
    %v3268 = vperm.slane %v3034, 7
    %v3277 = vmul.f32 %v3252, %v3261
    %v3278 = vmul.f32 %v3253, %v3262
    %v3279 = vmul.f32 %v3254, %v3263
    %v3280 = vmul.f32 %v3255, %v3264
    %v3281 = vmul.f32 %v3256, %v3265
    %v3282 = vmul.f32 %v3257, %v3266
    %v3283 = vmul.f32 %v3258, %v3267
    %v3284 = vmul.f32 %v3259, %v3268
    %v3286 = vperm.slane %v3035, 0
    %v3287 = vperm.slane %v3035, 1
    %v3288 = vperm.slane %v3035, 2
    %v3289 = vperm.slane %v3035, 3
    %v3290 = vperm.slane %v3035, 4
    %v3291 = vperm.slane %v3035, 5
    %v3292 = vperm.slane %v3035, 6
    %v3293 = vperm.slane %v3035, 7
    %v3302 = vadd.f32 %v3277, %v3286
    %v3303 = vadd.f32 %v3278, %v3287
    %v3304 = vadd.f32 %v3279, %v3288
    %v3305 = vadd.f32 %v3280, %v3289
    %v3306 = vadd.f32 %v3281, %v3290
    %v3307 = vadd.f32 %v3282, %v3291
    %v3308 = vadd.f32 %v3283, %v3292
    %v3309 = vadd.f32 %v3284, %v3293
    %vm3310 = vcmp.ge.f32.partialorder %v3302, 0.0
    %vm3311 = vcmp.ge.f32.partialorder %v3303, 0.0
    %vm3312 = vcmp.ge.f32.partialorder %v3304, 0.0
    %vm3313 = vcmp.ge.f32.partialorder %v3305, 0.0
    %vm3314 = vcmp.ge.f32.partialorder %v3306, 0.0
    %vm3315 = vcmp.ge.f32.partialorder %v3307, 0.0
    %vm3316 = vcmp.ge.f32.partialorder %v3308, 0.0
    %vm3317 = vcmp.ge.f32.partialorder %v3309, 0.0
    %v3318 = vmul.f32 %v3302, 0.2
    %v3319 = vmul.f32 %v3303, 0.2
    %v3320 = vmul.f32 %v3304, 0.2
    %v3321 = vmul.f32 %v3305, 0.2
    %v3322 = vmul.f32 %v3306, 0.2
    %v3323 = vmul.f32 %v3307, 0.2
    %v3324 = vmul.f32 %v3308, 0.2
    %v3325 = vmul.f32 %v3309, 0.2
    %v3326 = vsel %vm3310, %v3302, %v3318
    %v3327 = vsel %vm3311, %v3303, %v3319
    %v3328 = vsel %vm3312, %v3304, %v3320
    %v3329 = vsel %vm3313, %v3305, %v3321
    %v3330 = vsel %vm3314, %v3306, %v3322
    %v3331 = vsel %vm3315, %v3307, %v3323
    %v3332 = vsel %vm3316, %v3308, %v3324
    %v3333 = vsel %vm3317, %v3309, %v3325
    %v3334 = vpack.c.bf16 %v3326, %v3326
    %v3335 = vpack.c.bf16 %v3327, %v3327
    %v3336 = vpack.c.bf16 %v3328, %v3328
    %v3337 = vpack.c.bf16 %v3329, %v3329
    %v3338 = vpack.c.bf16 %v3330, %v3330
    %v3339 = vpack.c.bf16 %v3331, %v3331
    %v3340 = vpack.c.bf16 %v3332, %v3332
    %v3341 = vpack.c.bf16 %v3333, %v3333
    %v3342 = vld [vmem:[#allocation16] sm:$0xf]
    %v3343 = vld [vmem:[#allocation16 + $0x4] sm:$0xf]
    %v3344 = vld [vmem:[#allocation16 + $0x8] sm:$0xf]
    %v3345 = vld [vmem:[#allocation16 + $0xc] sm:$0xf]
    %v3346 = vld [vmem:[#allocation16 + $0x10] sm:$0xf]
    %v3347 = vld [vmem:[#allocation16 + $0x14] sm:$0xf]
    %v3348 = vld [vmem:[#allocation16 + $0x18] sm:$0xf]
    %v3349 = vld [vmem:[#allocation16 + $0x1c] sm:$0xf]
    %v3350 = vld [vmem:[#allocation16 + $0x20] sm:$0xf]
    %v3351 = vld [vmem:[#allocation16 + $0x24] sm:$0xf]
    %v3352 = vld [vmem:[#allocation16 + $0x28] sm:$0xf]
    %v3353 = vld [vmem:[#allocation16 + $0x2c] sm:$0xf]
    %v3354 = vld [vmem:[#allocation16 + $0x30] sm:$0xf]
    %v3355 = vld [vmem:[#allocation16 + $0x34] sm:$0xf]
    %v3356 = vld [vmem:[#allocation16 + $0x38] sm:$0xf]
    %v3357 = vld [vmem:[#allocation16 + $0x3c] sm:$0xf]
    %v3358 = vld [vmem:[#allocation16 + $0x40] sm:$0xf]
    %v3359 = vld [vmem:[#allocation16 + $0x44] sm:$0xf]
    %v3360 = vld [vmem:[#allocation16 + $0x48] sm:$0xf]
    %v3361 = vld [vmem:[#allocation16 + $0x4c] sm:$0xf]
    %v3362 = vld [vmem:[#allocation16 + $0x50] sm:$0xf]
    %v3363 = vld [vmem:[#allocation16 + $0x54] sm:$0xf]
    %v3364 = vld [vmem:[#allocation16 + $0x58] sm:$0xf]
    %v3365 = vld [vmem:[#allocation16 + $0x5c] sm:$0xf]
    %v3366 = vld [vmem:[#allocation16 + $0x60] sm:$0xf]
    %v3367 = vld [vmem:[#allocation16 + $0x64] sm:$0xf]
    %v3368 = vld [vmem:[#allocation16 + $0x68] sm:$0xf]
    %v3369 = vld [vmem:[#allocation16 + $0x6c] sm:$0xf]
    %v3370 = vld [vmem:[#allocation16 + $0x70] sm:$0xf]
    %v3371 = vld [vmem:[#allocation16 + $0x74] sm:$0xf]
    %v3372 = vld [vmem:[#allocation16 + $0x78] sm:$0xf]
    %v3373 = vld [vmem:[#allocation16 + $0x7c] sm:$0xf]
    %v3374 = vld [vmem:[#allocation16 + $0x80] sm:$0xf]
    %v3375 = vld [vmem:[#allocation16 + $0x84] sm:$0xf]
    %v3376 = vld [vmem:[#allocation16 + $0x88] sm:$0xf]
    %v3377 = vld [vmem:[#allocation16 + $0x8c] sm:$0xf]
    %v3378 = vld [vmem:[#allocation16 + $0x90] sm:$0xf]
    %v3379 = vld [vmem:[#allocation16 + $0x94] sm:$0xf]
    %v3380 = vld [vmem:[#allocation16 + $0x98] sm:$0xf]
    %v3381 = vld [vmem:[#allocation16 + $0x9c] sm:$0xf]
    %v3382 = vld [vmem:[#allocation16 + $0xa0] sm:$0xf]
    %v3383 = vld [vmem:[#allocation16 + $0xa4] sm:$0xf]
    %v3384 = vld [vmem:[#allocation16 + $0xa8] sm:$0xf]
    %v3385 = vld [vmem:[#allocation16 + $0xac] sm:$0xf]
    %v3386 = vld [vmem:[#allocation16 + $0xb0] sm:$0xf]
    %v3387 = vld [vmem:[#allocation16 + $0xb4] sm:$0xf]
    %v3388 = vld [vmem:[#allocation16 + $0xb8] sm:$0xf]
    %v3389 = vld [vmem:[#allocation16 + $0xbc] sm:$0xf]
    %v3390 = vld [vmem:[#allocation16 + $0xc0] sm:$0xf]
    %v3391 = vld [vmem:[#allocation16 + $0xc4] sm:$0xf]
    %v3392 = vld [vmem:[#allocation16 + $0xc8] sm:$0xf]
    %v3393 = vld [vmem:[#allocation16 + $0xcc] sm:$0xf]
    %v3394 = vld [vmem:[#allocation16 + $0xd0] sm:$0xf]
    %v3395 = vld [vmem:[#allocation16 + $0xd4] sm:$0xf]
    %v3396 = vld [vmem:[#allocation16 + $0xd8] sm:$0xf]
    %v3397 = vld [vmem:[#allocation16 + $0xdc] sm:$0xf]
    %v3398 = vld [vmem:[#allocation16 + $0xe0] sm:$0xf]
    %v3399 = vld [vmem:[#allocation16 + $0xe4] sm:$0xf]
    %v3400 = vld [vmem:[#allocation16 + $0xe8] sm:$0xf]
    %v3401 = vld [vmem:[#allocation16 + $0xec] sm:$0xf]
    %v3402 = vld [vmem:[#allocation16 + $0xf0] sm:$0xf]
    %v3403 = vld [vmem:[#allocation16 + $0xf4] sm:$0xf]
    %v3404 = vld [vmem:[#allocation16 + $0xf8] sm:$0xf]
    %v3405 = vld [vmem:[#allocation16 + $0xfc] sm:$0xf]
    %v3406 = vld [vmem:[#allocation16 + $0x100] sm:$0xf]
    %v3407 = vld [vmem:[#allocation16 + $0x104] sm:$0xf]
    %v3408 = vld [vmem:[#allocation16 + $0x108] sm:$0xf]
    %v3409 = vld [vmem:[#allocation16 + $0x10c] sm:$0xf]
    %v3410 = vld [vmem:[#allocation16 + $0x110] sm:$0xf]
    %v3411 = vld [vmem:[#allocation16 + $0x114] sm:$0xf]
    %v3412 = vld [vmem:[#allocation16 + $0x118] sm:$0xf]
    %v3413 = vld [vmem:[#allocation16 + $0x11c] sm:$0xf]
    %v3414 = vld [vmem:[#allocation16 + $0x120] sm:$0xf]
    %v3415 = vld [vmem:[#allocation16 + $0x124] sm:$0xf]
    %v3416 = vld [vmem:[#allocation16 + $0x128] sm:$0xf]
    %v3417 = vld [vmem:[#allocation16 + $0x12c] sm:$0xf]
    %v3418 = vld [vmem:[#allocation16 + $0x130] sm:$0xf]
    %v3419 = vld [vmem:[#allocation16 + $0x134] sm:$0xf]
    %v3420 = vld [vmem:[#allocation16 + $0x138] sm:$0xf]
    %v3421 = vld [vmem:[#allocation16 + $0x13c] sm:$0xf]
    %v3422 = vld [vmem:[#allocation16 + $0x140] sm:$0xf]
    %v3423 = vld [vmem:[#allocation16 + $0x144] sm:$0xf]
    %v3424 = vld [vmem:[#allocation16 + $0x148] sm:$0xf]
    %v3425 = vld [vmem:[#allocation16 + $0x14c] sm:$0xf]
    %v3426 = vld [vmem:[#allocation16 + $0x150] sm:$0xf]
    %v3427 = vld [vmem:[#allocation16 + $0x154] sm:$0xf]
    %v3428 = vld [vmem:[#allocation16 + $0x158] sm:$0xf]
    %v3429 = vld [vmem:[#allocation16 + $0x15c] sm:$0xf]
    %v3430 = vld [vmem:[#allocation16 + $0x160] sm:$0xf]
    %v3431 = vld [vmem:[#allocation16 + $0x164] sm:$0xf]
    %v3432 = vld [vmem:[#allocation16 + $0x168] sm:$0xf]
    %v3433 = vld [vmem:[#allocation16 + $0x16c] sm:$0xf]
    %v3434 = vld [vmem:[#allocation16 + $0x170] sm:$0xf]
    %v3435 = vld [vmem:[#allocation16 + $0x174] sm:$0xf]
    %v3436 = vld [vmem:[#allocation16 + $0x178] sm:$0xf]
    %v3437 = vld [vmem:[#allocation16 + $0x17c] sm:$0xf]
    %v3438 = vld [vmem:[#allocation16 + $0x180] sm:$0xf]
    %v3439 = vld [vmem:[#allocation16 + $0x184] sm:$0xf]
    %v3440 = vld [vmem:[#allocation16 + $0x188] sm:$0xf]
    %v3441 = vld [vmem:[#allocation16 + $0x18c] sm:$0xf]
    %v3442 = vld [vmem:[#allocation16 + $0x190] sm:$0xf]
    %v3443 = vld [vmem:[#allocation16 + $0x194] sm:$0xf]
    %v3444 = vld [vmem:[#allocation16 + $0x198] sm:$0xf]
    %v3445 = vld [vmem:[#allocation16 + $0x19c] sm:$0xf]
    %v3446 = vld [vmem:[#allocation16 + $0x1a0] sm:$0xf]
    %v3447 = vld [vmem:[#allocation16 + $0x1a4] sm:$0xf]
    %v3448 = vld [vmem:[#allocation16 + $0x1a8] sm:$0xf]
    %v3449 = vld [vmem:[#allocation16 + $0x1ac] sm:$0xf]
    %v3450 = vld [vmem:[#allocation16 + $0x1b0] sm:$0xf]
    %v3451 = vld [vmem:[#allocation16 + $0x1b4] sm:$0xf]
    %v3452 = vld [vmem:[#allocation16 + $0x1b8] sm:$0xf]
    %v3453 = vld [vmem:[#allocation16 + $0x1bc] sm:$0xf]
    %v3454 = vld [vmem:[#allocation16 + $0x1c0] sm:$0xf]
    %v3455 = vld [vmem:[#allocation16 + $0x1c4] sm:$0xf]
    %v3456 = vld [vmem:[#allocation16 + $0x1c8] sm:$0xf]
    %v3457 = vld [vmem:[#allocation16 + $0x1cc] sm:$0xf]
    %v3458 = vld [vmem:[#allocation16 + $0x1d0] sm:$0xf]
    %v3459 = vld [vmem:[#allocation16 + $0x1d4] sm:$0xf]
    %v3460 = vld [vmem:[#allocation16 + $0x1d8] sm:$0xf]
    %v3461 = vld [vmem:[#allocation16 + $0x1dc] sm:$0xf]
    %v3462 = vld [vmem:[#allocation16 + $0x1e0] sm:$0xf]
    %v3463 = vld [vmem:[#allocation16 + $0x1e4] sm:$0xf]
    %v3464 = vld [vmem:[#allocation16 + $0x1e8] sm:$0xf]
    %v3465 = vld [vmem:[#allocation16 + $0x1ec] sm:$0xf]
    %v3466 = vld [vmem:[#allocation16 + $0x1f0] sm:$0xf]
    %v3467 = vld [vmem:[#allocation16 + $0x1f4] sm:$0xf]
    %v3468 = vld [vmem:[#allocation16 + $0x1f8] sm:$0xf]
    %v3469 = vld [vmem:[#allocation16 + $0x1fc] sm:$0xf]
    %v3470 = vld [vmem:[%s13] sm:$0x1]
    %v3472 = vperm.slane %v3470, 0
    %v3602 = vunpack.c.l.b16 %v3342
    %v3603 = vunpack.c.l.b16 %v3343
    %v3604 = vunpack.c.l.b16 %v3344
    %v3605 = vunpack.c.l.b16 %v3345
    %v3606 = vunpack.c.l.b16 %v3346
    %v3607 = vunpack.c.l.b16 %v3347
    %v3608 = vunpack.c.l.b16 %v3348
    %v3609 = vunpack.c.l.b16 %v3349
    %v3610 = vunpack.c.l.b16 %v3350
    %v3611 = vunpack.c.l.b16 %v3351
    %v3612 = vunpack.c.l.b16 %v3352
    %v3613 = vunpack.c.l.b16 %v3353
    %v3614 = vunpack.c.l.b16 %v3354
    %v3615 = vunpack.c.l.b16 %v3355
    %v3616 = vunpack.c.l.b16 %v3356
    %v3617 = vunpack.c.l.b16 %v3357
    %v3618 = vunpack.c.l.b16 %v3358
    %v3619 = vunpack.c.l.b16 %v3359
    %v3620 = vunpack.c.l.b16 %v3360
    %v3621 = vunpack.c.l.b16 %v3361
    %v3622 = vunpack.c.l.b16 %v3362
    %v3623 = vunpack.c.l.b16 %v3363
    %v3624 = vunpack.c.l.b16 %v3364
    %v3625 = vunpack.c.l.b16 %v3365
    %v3626 = vunpack.c.l.b16 %v3366
    %v3627 = vunpack.c.l.b16 %v3367
    %v3628 = vunpack.c.l.b16 %v3368
    %v3629 = vunpack.c.l.b16 %v3369
    %v3630 = vunpack.c.l.b16 %v3370
    %v3631 = vunpack.c.l.b16 %v3371
    %v3632 = vunpack.c.l.b16 %v3372
    %v3633 = vunpack.c.l.b16 %v3373
    %v3634 = vunpack.c.l.b16 %v3374
    %v3635 = vunpack.c.l.b16 %v3375
    %v3636 = vunpack.c.l.b16 %v3376
    %v3637 = vunpack.c.l.b16 %v3377
    %v3638 = vunpack.c.l.b16 %v3378
    %v3639 = vunpack.c.l.b16 %v3379
    %v3640 = vunpack.c.l.b16 %v3380
    %v3641 = vunpack.c.l.b16 %v3381
    %v3642 = vunpack.c.l.b16 %v3382
    %v3643 = vunpack.c.l.b16 %v3383
    %v3644 = vunpack.c.l.b16 %v3384
    %v3645 = vunpack.c.l.b16 %v3385
    %v3646 = vunpack.c.l.b16 %v3386
    %v3647 = vunpack.c.l.b16 %v3387
    %v3648 = vunpack.c.l.b16 %v3388
    %v3649 = vunpack.c.l.b16 %v3389
    %v3650 = vunpack.c.l.b16 %v3390
    %v3651 = vunpack.c.l.b16 %v3391
    %v3652 = vunpack.c.l.b16 %v3392
    %v3653 = vunpack.c.l.b16 %v3393
    %v3654 = vunpack.c.l.b16 %v3394
    %v3655 = vunpack.c.l.b16 %v3395
    %v3656 = vunpack.c.l.b16 %v3396
    %v3657 = vunpack.c.l.b16 %v3397
    %v3658 = vunpack.c.l.b16 %v3398
    %v3659 = vunpack.c.l.b16 %v3399
    %v3660 = vunpack.c.l.b16 %v3400
    %v3661 = vunpack.c.l.b16 %v3401
    %v3662 = vunpack.c.l.b16 %v3402
    %v3663 = vunpack.c.l.b16 %v3403
    %v3664 = vunpack.c.l.b16 %v3404
    %v3665 = vunpack.c.l.b16 %v3405
    %v3666 = vunpack.c.l.b16 %v3406
    %v3667 = vunpack.c.l.b16 %v3407
    %v3668 = vunpack.c.l.b16 %v3408
    %v3669 = vunpack.c.l.b16 %v3409
    %v3670 = vunpack.c.l.b16 %v3410
    %v3671 = vunpack.c.l.b16 %v3411
    %v3672 = vunpack.c.l.b16 %v3412
    %v3673 = vunpack.c.l.b16 %v3413
    %v3674 = vunpack.c.l.b16 %v3414
    %v3675 = vunpack.c.l.b16 %v3415
    %v3676 = vunpack.c.l.b16 %v3416
    %v3677 = vunpack.c.l.b16 %v3417
    %v3678 = vunpack.c.l.b16 %v3418
    %v3679 = vunpack.c.l.b16 %v3419
    %v3680 = vunpack.c.l.b16 %v3420
    %v3681 = vunpack.c.l.b16 %v3421
    %v3682 = vunpack.c.l.b16 %v3422
    %v3683 = vunpack.c.l.b16 %v3423
    %v3684 = vunpack.c.l.b16 %v3424
    %v3685 = vunpack.c.l.b16 %v3425
    %v3686 = vunpack.c.l.b16 %v3426
    %v3687 = vunpack.c.l.b16 %v3427
    %v3688 = vunpack.c.l.b16 %v3428
    %v3689 = vunpack.c.l.b16 %v3429
    %v3690 = vunpack.c.l.b16 %v3430
    %v3691 = vunpack.c.l.b16 %v3431
    %v3692 = vunpack.c.l.b16 %v3432
    %v3693 = vunpack.c.l.b16 %v3433
    %v3694 = vunpack.c.l.b16 %v3434
    %v3695 = vunpack.c.l.b16 %v3435
    %v3696 = vunpack.c.l.b16 %v3436
    %v3697 = vunpack.c.l.b16 %v3437
    %v3698 = vunpack.c.l.b16 %v3438
    %v3699 = vunpack.c.l.b16 %v3439
    %v3700 = vunpack.c.l.b16 %v3440
    %v3701 = vunpack.c.l.b16 %v3441
    %v3702 = vunpack.c.l.b16 %v3442
    %v3703 = vunpack.c.l.b16 %v3443
    %v3704 = vunpack.c.l.b16 %v3444
    %v3705 = vunpack.c.l.b16 %v3445
    %v3706 = vunpack.c.l.b16 %v3446
    %v3707 = vunpack.c.l.b16 %v3447
    %v3708 = vunpack.c.l.b16 %v3448
    %v3709 = vunpack.c.l.b16 %v3449
    %v3710 = vunpack.c.l.b16 %v3450
    %v3711 = vunpack.c.l.b16 %v3451
    %v3712 = vunpack.c.l.b16 %v3452
    %v3713 = vunpack.c.l.b16 %v3453
    %v3714 = vunpack.c.l.b16 %v3454
    %v3715 = vunpack.c.l.b16 %v3455
    %v3716 = vunpack.c.l.b16 %v3456
    %v3717 = vunpack.c.l.b16 %v3457
    %v3718 = vunpack.c.l.b16 %v3458
    %v3719 = vunpack.c.l.b16 %v3459
    %v3720 = vunpack.c.l.b16 %v3460
    %v3721 = vunpack.c.l.b16 %v3461
    %v3722 = vunpack.c.l.b16 %v3462
    %v3723 = vunpack.c.l.b16 %v3463
    %v3724 = vunpack.c.l.b16 %v3464
    %v3725 = vunpack.c.l.b16 %v3465
    %v3726 = vunpack.c.l.b16 %v3466
    %v3727 = vunpack.c.l.b16 %v3467
    %v3728 = vunpack.c.l.b16 %v3468
    %v3729 = vunpack.c.l.b16 %v3469
    %v3730 = vpack.c.b16 %v3603, %v3602
    %v3731 = vpack.c.b16 %v3605, %v3604
    %v3732 = vpack.c.b16 %v3607, %v3606
    %v3733 = vpack.c.b16 %v3609, %v3608
    %v3734 = vpack.c.b16 %v3611, %v3610
    %v3735 = vpack.c.b16 %v3613, %v3612
    %v3736 = vpack.c.b16 %v3615, %v3614
    %v3737 = vpack.c.b16 %v3617, %v3616
    %v3738 = vpack.c.b16 %v3619, %v3618
    %v3739 = vpack.c.b16 %v3621, %v3620
    %v3740 = vpack.c.b16 %v3623, %v3622
    %v3741 = vpack.c.b16 %v3625, %v3624
    %v3742 = vpack.c.b16 %v3627, %v3626
    %v3743 = vpack.c.b16 %v3629, %v3628
    %v3744 = vpack.c.b16 %v3631, %v3630
    %v3745 = vpack.c.b16 %v3633, %v3632
    %v3746 = vpack.c.b16 %v3635, %v3634
    %v3747 = vpack.c.b16 %v3637, %v3636
    %v3748 = vpack.c.b16 %v3639, %v3638
    %v3749 = vpack.c.b16 %v3641, %v3640
    %v3750 = vpack.c.b16 %v3643, %v3642
    %v3751 = vpack.c.b16 %v3645, %v3644
    %v3752 = vpack.c.b16 %v3647, %v3646
    %v3753 = vpack.c.b16 %v3649, %v3648
    %v3754 = vpack.c.b16 %v3651, %v3650
    %v3755 = vpack.c.b16 %v3653, %v3652
    %v3756 = vpack.c.b16 %v3655, %v3654
    %v3757 = vpack.c.b16 %v3657, %v3656
    %v3758 = vpack.c.b16 %v3659, %v3658
    %v3759 = vpack.c.b16 %v3661, %v3660
    %v3760 = vpack.c.b16 %v3663, %v3662
    %v3761 = vpack.c.b16 %v3665, %v3664
    %v3762 = vpack.c.b16 %v3667, %v3666
    %v3763 = vpack.c.b16 %v3669, %v3668
    %v3764 = vpack.c.b16 %v3671, %v3670
    %v3765 = vpack.c.b16 %v3673, %v3672
    %v3766 = vpack.c.b16 %v3675, %v3674
    %v3767 = vpack.c.b16 %v3677, %v3676
    %v3768 = vpack.c.b16 %v3679, %v3678
    %v3769 = vpack.c.b16 %v3681, %v3680
    %v3770 = vpack.c.b16 %v3683, %v3682
    %v3771 = vpack.c.b16 %v3685, %v3684
    %v3772 = vpack.c.b16 %v3687, %v3686
    %v3773 = vpack.c.b16 %v3689, %v3688
    %v3774 = vpack.c.b16 %v3691, %v3690
    %v3775 = vpack.c.b16 %v3693, %v3692
    %v3776 = vpack.c.b16 %v3695, %v3694
    %v3777 = vpack.c.b16 %v3697, %v3696
    %v3778 = vpack.c.b16 %v3699, %v3698
    %v3779 = vpack.c.b16 %v3701, %v3700
    %v3780 = vpack.c.b16 %v3703, %v3702
    %v3781 = vpack.c.b16 %v3705, %v3704
    %v3782 = vpack.c.b16 %v3707, %v3706
    %v3783 = vpack.c.b16 %v3709, %v3708
    %v3784 = vpack.c.b16 %v3711, %v3710
    %v3785 = vpack.c.b16 %v3713, %v3712
    %v3786 = vpack.c.b16 %v3715, %v3714
    %v3787 = vpack.c.b16 %v3717, %v3716
    %v3788 = vpack.c.b16 %v3719, %v3718
    %v3789 = vpack.c.b16 %v3721, %v3720
    %v3790 = vpack.c.b16 %v3723, %v3722
    %v3791 = vpack.c.b16 %v3725, %v3724
    %v3792 = vpack.c.b16 %v3727, %v3726
    %v3793 = vpack.c.b16 %v3729, %v3728
    %3858 = vmatpush.bf16.msra.mxu0 %v3737
    %3859 = vmatpush.bf16.msra.mxu0 %v3736
    %3860 = vmatpush.bf16.msra.mxu0 %v3735
    %3861 = vmatpush.bf16.msra.mxu0 %v3734
    %3862 = vmatpush.bf16.msra.mxu0 %v3733
    %3863 = vmatpush.bf16.msra.mxu0 %v3732
    %3864 = vmatpush.bf16.msra.mxu0 %v3731
    %3865 = vmatpush.bf16.msra.mxu0 %v3730
    %3866 = vmatmul.bf16.gmra.mxu0 %v3334
    %v3867 = vpop.f32.mrf.mxu0
    %v3868 = vadd.f32 %v3472, %v3867
    %v3869 = vpop.f32.mrf.mxu0
    %3870 = vdwg.mxu0
    %3871 = vmatpush.bf16.msra.mxu0 %v3745
    %3872 = vmatpush.bf16.msra.mxu0 %v3744
    %3873 = vmatpush.bf16.msra.mxu0 %v3743
    %3874 = vmatpush.bf16.msra.mxu0 %v3742
    %3875 = vmatpush.bf16.msra.mxu0 %v3741
    %3876 = vmatpush.bf16.msra.mxu0 %v3740
    %3877 = vmatpush.bf16.msra.mxu0 %v3739
    %3878 = vmatpush.bf16.msra.mxu0 %v3738
    %3879 = vmatmul.bf16.gmra.mxu0 %v3335
    %v3880 = vpop.f32.mrf.mxu0
    %v3881 = vadd.f32 %v3868, %v3880
    %v3882 = vpop.f32.mrf.mxu0
    %3883 = vdwg.mxu0
    %3884 = vmatpush.bf16.msra.mxu0 %v3753
    %3885 = vmatpush.bf16.msra.mxu0 %v3752
    %3886 = vmatpush.bf16.msra.mxu0 %v3751
    %3887 = vmatpush.bf16.msra.mxu0 %v3750
    %3888 = vmatpush.bf16.msra.mxu0 %v3749
    %3889 = vmatpush.bf16.msra.mxu0 %v3748
    %3890 = vmatpush.bf16.msra.mxu0 %v3747
    %3891 = vmatpush.bf16.msra.mxu0 %v3746
    %3892 = vmatmul.bf16.gmra.mxu0 %v3336
    %v3893 = vpop.f32.mrf.mxu0
    %v3894 = vadd.f32 %v3881, %v3893
    %v3895 = vpop.f32.mrf.mxu0
    %3896 = vdwg.mxu0
    %3897 = vmatpush.bf16.msra.mxu0 %v3761
    %3898 = vmatpush.bf16.msra.mxu0 %v3760
    %3899 = vmatpush.bf16.msra.mxu0 %v3759
    %3900 = vmatpush.bf16.msra.mxu0 %v3758
    %3901 = vmatpush.bf16.msra.mxu0 %v3757
    %3902 = vmatpush.bf16.msra.mxu0 %v3756
    %3903 = vmatpush.bf16.msra.mxu0 %v3755
    %3904 = vmatpush.bf16.msra.mxu0 %v3754
    %3905 = vmatmul.bf16.gmra.mxu0 %v3337
    %v3906 = vpop.f32.mrf.mxu0
    %v3907 = vadd.f32 %v3894, %v3906
    %v3908 = vpop.f32.mrf.mxu0
    %3909 = vdwg.mxu0
    %3910 = vmatpush.bf16.msra.mxu0 %v3769
    %3911 = vmatpush.bf16.msra.mxu0 %v3768
    %3912 = vmatpush.bf16.msra.mxu0 %v3767
    %3913 = vmatpush.bf16.msra.mxu0 %v3766
    %3914 = vmatpush.bf16.msra.mxu0 %v3765
    %3915 = vmatpush.bf16.msra.mxu0 %v3764
    %3916 = vmatpush.bf16.msra.mxu0 %v3763
    %3917 = vmatpush.bf16.msra.mxu0 %v3762
    %3918 = vmatmul.bf16.gmra.mxu0 %v3338
    %v3919 = vpop.f32.mrf.mxu0
    %v3920 = vadd.f32 %v3907, %v3919
    %v3921 = vpop.f32.mrf.mxu0
    %3922 = vdwg.mxu0
    %3923 = vmatpush.bf16.msra.mxu0 %v3777
    %3924 = vmatpush.bf16.msra.mxu0 %v3776
    %3925 = vmatpush.bf16.msra.mxu0 %v3775
    %3926 = vmatpush.bf16.msra.mxu0 %v3774
    %3927 = vmatpush.bf16.msra.mxu0 %v3773
    %3928 = vmatpush.bf16.msra.mxu0 %v3772
    %3929 = vmatpush.bf16.msra.mxu0 %v3771
    %3930 = vmatpush.bf16.msra.mxu0 %v3770
    %3931 = vmatmul.bf16.gmra.mxu0 %v3339
    %v3932 = vpop.f32.mrf.mxu0
    %v3933 = vadd.f32 %v3920, %v3932
    %v3934 = vpop.f32.mrf.mxu0
    %3935 = vdwg.mxu0
    %3936 = vmatpush.bf16.msra.mxu0 %v3785
    %3937 = vmatpush.bf16.msra.mxu0 %v3784
    %3938 = vmatpush.bf16.msra.mxu0 %v3783
    %3939 = vmatpush.bf16.msra.mxu0 %v3782
    %3940 = vmatpush.bf16.msra.mxu0 %v3781
    %3941 = vmatpush.bf16.msra.mxu0 %v3780
    %3942 = vmatpush.bf16.msra.mxu0 %v3779
    %3943 = vmatpush.bf16.msra.mxu0 %v3778
    %3944 = vmatmul.bf16.gmra.mxu0 %v3340
    %v3945 = vpop.f32.mrf.mxu0
    %v3946 = vadd.f32 %v3933, %v3945
    %v3947 = vpop.f32.mrf.mxu0
    %3948 = vdwg.mxu0
    %3949 = vmatpush.bf16.msra.mxu0 %v3793
    %3950 = vmatpush.bf16.msra.mxu0 %v3792
    %3951 = vmatpush.bf16.msra.mxu0 %v3791
    %3952 = vmatpush.bf16.msra.mxu0 %v3790
    %3953 = vmatpush.bf16.msra.mxu0 %v3789
    %3954 = vmatpush.bf16.msra.mxu0 %v3788
    %3955 = vmatpush.bf16.msra.mxu0 %v3787
    %3956 = vmatpush.bf16.msra.mxu0 %v3786
    %3957 = vmatmul.bf16.gmra.mxu0 %v3341
    %v3958 = vpop.f32.mrf.mxu0
    %v3959 = vadd.f32 %v3946, %v3958
    %v3960 = vpop.f32.mrf.mxu0
    %3961 = vdwg.mxu0
    %v3962 = vtanh.pop %v3959
    %3963 = vst [vmem:[%s14] sm:$0xff] %v3962
    // Predicated region
    $region98: #{generator_forward.1} parent=1 // pred_check
      _
    $region99: #{generator_forward.1} parent=1 // pred_check_branch
      %3965 = sbr.rel (0) target = $region101
    $region100: #{generator_forward.1} parent=1 // pred_region
      _
    $region101: #{generator_forward.1} parent=1 // pred_fallthru
      _
    // Predicated region
    $region102: #{generator_forward.1} parent=1 // pred_check
      _
    $region103: #{generator_forward.1} parent=1 // pred_check_branch
      %3967 = sbr.rel (0) target = $region105
    $region104: #{generator_forward.1} parent=1 // pred_region
      _
    $region105: #{generator_forward.1} parent=1 // pred_fallthru
      _
    %3968 = vsyncpa [#allocation3], 1
    %3969 = vsyncpa [#allocation5], 1
    %3970 = vsyncpa [#allocation8], 1
    %3971 = vsyncpa [#allocation11], 1
    %3972 = vsyncpa [#allocation14], 1
    %3973 = vsyncpa [#allocation17], 1

</llo_original>
